<compile_context>
chip_gen: v7x
topology: tpu7x:2x2x1
jax: 0.10.0
libtpu: 0.0.40
codegen_flags: <defaults>
</compile_context>

<pallas_src>
import functools
import math

import jax
import jax.numpy as jnp
from jax.experimental import pallas as pl
from jax.experimental.pallas import tpu as pltpu

# ----------------------------- small config -------------------------------------
BATCH = 2
IN_NC = 3            # opt.input_nc
NDF = 16             # opt.ndf_dis (reduced from 64 for the SMALL config)
PATCH_LEN = 32       # opt.patch_len (module asserts 32 or 64); 32-branch instantiated
IN_EPS = 1e-5        # nn.InstanceNorm2d default eps (affine=False)
LRELU_SLOPE = 0.2

# Layer schedule: (weight name, stride, pad, apply_instance_norm, apply_leaky_relu)
if PATCH_LEN == 64:
    LAYERS = (("w0", 2, 1, False, True),
              ("w1", 2, 1, True, True),
              ("w2", 2, 1, True, True),
              ("w3", 2, 1, True, True),
              ("w4", 1, 0, False, False))
else:
    LAYERS = (("w1", 2, 1, True, True),
              ("w2", 2, 1, True, True),
              ("w3", 2, 1, True, True),
              ("w4", 1, 0, False, False))


def _round_up(x, m):
    return (x + m - 1) // m * m


# ------------------ fused Pallas kernel: matmul + InstanceNorm + LeakyReLU -------


def _conv_in_lrelu_kernel(cols_ref, w_ref, o_ref, *, apply_in, apply_act):
    # cols_ref: (rows, Kp)  -- rows = Ho*Wo of ONE batch item when apply_in=True
    # w_ref:    (Kp, Np)    -- Kp, Np are multiples of 128 (lane-dense)
    acc = jnp.dot(cols_ref[...], w_ref[...], preferred_element_type=jnp.float32)
    if apply_in:
        # InstanceNorm2d(affine=False): per (batch, channel) stats over spatial dims.
        mean = jnp.mean(acc, axis=0, keepdims=True)
        cent = acc - mean
        var = jnp.mean(cent * cent, axis=0, keepdims=True)   # biased variance
        acc = cent * jax.lax.rsqrt(var + IN_EPS)
    if apply_act:
        acc = jnp.where(acc >= 0.0, acc, LRELU_SLOPE * acc)  # LeakyReLU(0.2)
    o_ref[...] = acc


def fused_conv_matmul(cols, w_pad, *, batch, rows_per_item, apply_in, apply_act):
    """cols: (batch*rows_per_item, Kp) f32, w_pad: (Kp, Np) f32 -> (M, Np) f32."""
    M, Kp = cols.shape
    Kp2, Np = w_pad.shape
    assert Kp == Kp2 and Kp % 128 == 0 and Np % 128 == 0

    kernel = functools.partial(_conv_in_lrelu_kernel,
                               apply_in=apply_in, apply_act=apply_act)
    if apply_in:
        # One grid step per batch item -> per-instance statistics inside the kernel.
        grid = (batch,)
        rows = rows_per_item
        assert rows % 8 == 0, rows        # sublane-aligned block
    else:
        # No per-instance statistics needed: one lane-dense block for everything
        # (also avoids a sub-8 sublane block for the final 1x1-spatial layer).
        grid = (1,)
        rows = M

    return pl.pallas_call(
        kernel,
        grid=grid,
        out_shape=jax.ShapeDtypeStruct((M, Np), jnp.float32),
        in_specs=[
            pl.BlockSpec((rows, Kp), lambda b: (b, 0)),
            pl.BlockSpec((Kp, Np), lambda b: (0, 0)),
        ],
        out_specs=pl.BlockSpec((rows, Np), lambda b: (b, 0)),
        compiler_params=pltpu.CompilerParams(
            dimension_semantics=("parallel",)),
    )(cols, w_pad)


# ----------------------------- plain-JAX glue ------------------------------------


def _im2col(x, k, stride, pad):
    """x: (B, H, W, C) -> cols (B*Ho*Wo, k*k*C), K ordered (ki, kj, c)."""
    if pad > 0:
        x = jnp.pad(x, ((0, 0), (pad, pad), (pad, pad), (0, 0)))
    B, Hp, Wp, C = x.shape
    Ho = (Hp - k) // stride + 1
    Wo = (Wp - k) // stride + 1
    patches = []
    for i in range(k):
        for j in range(k):
            patches.append(x[:, i::stride, j::stride, :][:, :Ho, :Wo, :])
    cols = jnp.stack(patches, axis=3)                     # (B, Ho, Wo, k*k, C)
    return cols.reshape(B * Ho * Wo, k * k * C), (B, Ho, Wo)


def _spectral_normalize(w, key, n_iter=16):
    """torch.nn.utils.spectral_norm semantics: W / sigma_max(W.reshape(Cout, -1)).

    PyTorch keeps persistent u/v and does one power-iteration step per training
    forward; here a short fori_loop converges the same estimate deterministically.
    """
    cout = w.shape[0]
    wm = w.reshape(cout, -1)
    u0 = jax.random.normal(key, (cout,), jnp.float32)
    u0 = u0 / (jnp.linalg.norm(u0) + 1e-12)

    def body(_, u):
        v = wm.T @ u
        v = v / (jnp.linalg.norm(v) + 1e-12)
        u = wm @ v
        u = u / (jnp.linalg.norm(u) + 1e-12)
        return u

    u = jax.lax.fori_loop(0, n_iter, body, u0)
    v = wm.T @ u
    v = v / (jnp.linalg.norm(v) + 1e-12)
    sigma = jnp.dot(u, wm @ v)
    return w / sigma


def _pack_weight(w, cin_pad, cout_pad):
    """torch layout (Cout, Cin, k, k) -> zero-padded matmul matrix (k*k*cin_pad, cout_pad)."""
    cout, cin, kh, kw = w.shape
    wt = jnp.transpose(w, (2, 3, 1, 0))                   # (kh, kw, Cin, Cout)
    wt = jnp.pad(wt, ((0, 0), (0, 0), (0, cin_pad - cin), (0, cout_pad - cout)))
    return wt.reshape(kh * kw * cin_pad, cout_pad)


# ----------------------------- model forward -------------------------------------


def nlayer_discriminator_forward(x_nchw, params):
    """PatchGAN discriminator forward.  x_nchw: (B, input_nc, H, W) f32."""
    x = jnp.transpose(x_nchw, (0, 2, 3, 1)).astype(jnp.float32)   # NHWC
    sn_keys = jax.random.split(jax.random.PRNGKey(1234), len(LAYERS))

    for (name, stride, pad, apply_in, apply_act), sk in zip(LAYERS, sn_keys):
        w = _spectral_normalize(params[name].astype(jnp.float32), sk)
        cout, cin, kh, kw = w.shape
        B, H, W, C = x.shape
        assert C == cin, (C, cin)

        # Pad activation channels so K = kh*kw*cin_pad is a multiple of 128.
        # Only the image input (cin=3 -> 8) actually needs this; every other
        # layer's true cin already yields a 128-multiple K.
        cin_pad = _round_up(cin, max(1, 128 // (kh * kw)))
        if cin_pad > C:
            x = jnp.pad(x, ((0, 0), (0, 0), (0, 0), (0, cin_pad - C)))
        cout_pad = _round_up(cout, 128)                    # lane-dense output stores

        w_pad = _pack_weight(w, cin_pad, cout_pad)
        cols, (B, Ho, Wo) = _im2col(x, kh, stride, pad)

        y = fused_conv_matmul(cols, w_pad, batch=B, rows_per_item=Ho * Wo,
                              apply_in=apply_in, apply_act=apply_act)
        # Strip the lane padding before feeding the next layer so the next K stays
        # at its true 16*Cin size (512 / 1024 / 2048) instead of bloating to 2048.
        x = y[:, :cout].reshape(B, Ho, Wo, cout)

    return jnp.transpose(x, (0, 3, 1, 2))                  # NCHW, (B, 1, 1, 1)


# ----------------------------- deterministic parameters --------------------------


def init_params(key):
    ks = jax.random.split(key, 8)

    def conv_w(k, cout, cin):
        fan_in = cin * 16
        bound = 1.0 / math.sqrt(fan_in)
        return jax.random.uniform(k, (cout, cin, 4, 4), jnp.float32, -bound, bound)

    p = {}
    if PATCH_LEN == 64:
        p["w0"] = conv_w(ks[0], NDF, IN_NC)
        p["w1"] = conv_w(ks[1], 2 * NDF, NDF)
    else:
        p["w1"] = conv_w(ks[1], 2 * NDF, IN_NC)
    p["w2"] = conv_w(ks[2], 4 * NDF, 2 * NDF)
    p["w3"] = conv_w(ks[3], 8 * NDF, 4 * NDF)
    p["w4"] = conv_w(ks[4], 1, 8 * NDF)
    return p


# ----------------------------- main -----------------------------------------------

if __name__ == "__main__":
    key = jax.random.PRNGKey(0)
    kx, kp = jax.random.split(key)
    x = jax.random.normal(kx, (BATCH, IN_NC, PATCH_LEN, PATCH_LEN), jnp.float32)
    params = init_params(kp)

    fwd = jax.jit(nlayer_discriminator_forward)
    out = fwd(x, params)
    jax.block_until_ready(out)

    assert out.shape == (BATCH, 1, 1, 1), out.shape
    assert bool(jnp.all(jnp.isfinite(out)))
    print("KERNEL_OK")
</pallas_src>

<mosaic_0001>
module attributes {stable_mosaic.version = 11 : i64} {
  func.func @_conv_in_lrelu_kernel(%arg0: i32, %arg1: memref<256x128xf32, #tpu.memory_space<vmem>>, %arg2: memref<128x128xf32, #tpu.memory_space<vmem>>, %arg3: memref<256x128xf32, #tpu.memory_space<vmem>>) attributes {dimension_semantics = [#tpu.dimension_semantics<parallel>], iteration_bounds = array<i64: 2>, scalar_prefetch = 0 : i64, scratch_operands = 0 : i64, tpu.core_type = #tpu.core_type<tc>, window_params = [{transform_indices = @transform_0, window_bounds = array<i64: 256, 128>}, {pipeline_mode = #tpu.pipeline_mode<synchronous>, transform_indices = @transform_1, window_bounds = array<i64: 128, 128>}, {transform_indices = @transform_2, window_bounds = array<i64: 256, 128>}]} {
    %c0 = arith.constant 0 : index
    %c0_0 = arith.constant 0 : index
    %0 = vector.load %arg1[%c0, %c0_0] : memref<256x128xf32, #tpu.memory_space<vmem>>, vector<256x128xf32>
    %c0_1 = arith.constant 0 : index
    %c0_2 = arith.constant 0 : index
    %1 = vector.load %arg2[%c0_1, %c0_2] : memref<128x128xf32, #tpu.memory_space<vmem>>, vector<128x128xf32>
    %cst = arith.constant dense<0.000000e+00> : vector<256x128xf32>
    %2 = tpu.matmul %0, %1, %cst {dimension_numbers = #tpu.dot_dimension_numbers<[1], [0], [0], [1], [0, 0, 1, 1], [], []>} : vector<256x128xf32>, vector<128x128xf32>, vector<256x128xf32> -> vector<256x128xf32>
    %cst_3 = arith.constant dense<0.000000e+00> : vector<128xf32>
    %3 = vector.multi_reduction <add>, %2, %cst_3 [0] : vector<256x128xf32> to vector<128xf32>
    %4 = vector.shape_cast %3 : vector<128xf32> to vector<1x128xf32>
    %cst_4 = arith.constant 2.560000e+02 : f32
    %5 = vector.broadcast %cst_4 : f32 to vector<1x128xf32>
    %6 = arith.divf %4, %5 : vector<1x128xf32>
    %7 = vector.broadcast %6 : vector<1x128xf32> to vector<256x128xf32>
    %8 = arith.subf %2, %7 : vector<256x128xf32>
    %9 = arith.mulf %8, %8 : vector<256x128xf32>
    %cst_5 = arith.constant dense<0.000000e+00> : vector<128xf32>
    %10 = vector.multi_reduction <add>, %9, %cst_5 [0] : vector<256x128xf32> to vector<128xf32>
    %11 = vector.shape_cast %10 : vector<128xf32> to vector<1x128xf32>
    %cst_6 = arith.constant 2.560000e+02 : f32
    %12 = vector.broadcast %cst_6 : f32 to vector<1x128xf32>
    %13 = arith.divf %11, %12 : vector<1x128xf32>
    %cst_7 = arith.constant 9.99999974E-6 : f32
    %14 = vector.broadcast %cst_7 : f32 to vector<1x128xf32>
    %15 = arith.addf %13, %14 : vector<1x128xf32>
    %16 = math.rsqrt %15 : vector<1x128xf32>
    %17 = vector.broadcast %16 : vector<1x128xf32> to vector<256x128xf32>
    %18 = arith.mulf %8, %17 : vector<256x128xf32>
    %cst_8 = arith.constant 0.000000e+00 : f32
    %19 = vector.broadcast %cst_8 : f32 to vector<256x128xf32>
    %20 = arith.cmpf oge, %18, %19 : vector<256x128xf32>
    %cst_9 = arith.constant 2.000000e-01 : f32
    %21 = vector.broadcast %cst_9 : f32 to vector<256x128xf32>
    %22 = arith.mulf %21, %18 : vector<256x128xf32>
    %23 = arith.select %20, %18, %22 : vector<256x128xi1>, vector<256x128xf32>
    %c0_10 = arith.constant 0 : index
    %c0_11 = arith.constant 0 : index
    %24 = vector.load %arg3[%c0_10, %c0_11] : memref<256x128xf32, #tpu.memory_space<vmem>>, vector<256x128xf32>
    tpu.vector_store %arg3[%c0_10, %c0_11], %23 {strides = array<i32>} : memref<256x128xf32, #tpu.memory_space<vmem>>, vector<256x128xf32>,
    return
  }
  func.func @transform_0(%arg0: i32) -> (i32, i32) {
    %c0_i32 = arith.constant 0 : i32
    %c0_i32_0 = arith.constant 0 : i32
    return %arg0, %c0_i32 : i32, i32
  }
  func.func @transform_1(%arg0: i32) -> (i32, i32) {
    %c0_i32 = arith.constant 0 : i32
    %c0_i32_0 = arith.constant 0 : i32
    %c0_i32_1 = arith.constant 0 : i32
    return %c0_i32, %c0_i32_0 : i32, i32
  }
  func.func @transform_2(%arg0: i32) -> (i32, i32) {
    %c0_i32 = arith.constant 0 : i32
    %c0_i32_0 = arith.constant 0 : i32
    return %arg0, %c0_i32 : i32, i32
  }
}

module attributes {stable_mosaic.version = 11 : i64} {
  func.func @_conv_in_lrelu_kernel(%arg0: i32, %arg1: memref<64x512xf32, #tpu.memory_space<vmem>>, %arg2: memref<512x128xf32, #tpu.memory_space<vmem>>, %arg3: memref<64x128xf32, #tpu.memory_space<vmem>>) attributes {dimension_semantics = [#tpu.dimension_semantics<parallel>], iteration_bounds = array<i64: 2>, scalar_prefetch = 0 : i64, scratch_operands = 0 : i64, tpu.core_type = #tpu.core_type<tc>, window_params = [{transform_indices = @transform_0, window_bounds = array<i64: 64, 512>}, {pipeline_mode = #tpu.pipeline_mode<synchronous>, transform_indices = @transform_1, window_bounds = array<i64: 512, 128>}, {transform_indices = @transform_2, window_bounds = array<i64: 64, 128>}]} {
    %c0 = arith.constant 0 : index
    %c0_0 = arith.constant 0 : index
    %0 = vector.load %arg1[%c0, %c0_0] : memref<64x512xf32, #tpu.memory_space<vmem>>, vector<64x512xf32>
    %c0_1 = arith.constant 0 : index
    %c0_2 = arith.constant 0 : index
    %1 = vector.load %arg2[%c0_1, %c0_2] : memref<512x128xf32, #tpu.memory_space<vmem>>, vector<512x128xf32>
    %cst = arith.constant dense<0.000000e+00> : vector<64x128xf32>
    %2 = tpu.matmul %0, %1, %cst {dimension_numbers = #tpu.dot_dimension_numbers<[1], [0], [0], [1], [0, 0, 1, 1], [], []>} : vector<64x512xf32>, vector<512x128xf32>, vector<64x128xf32> -> vector<64x128xf32>
    %cst_3 = arith.constant dense<0.000000e+00> : vector<128xf32>
    %3 = vector.multi_reduction <add>, %2, %cst_3 [0] : vector<64x128xf32> to vector<128xf32>
    %4 = vector.shape_cast %3 : vector<128xf32> to vector<1x128xf32>
    %cst_4 = arith.constant 6.400000e+01 : f32
    %5 = vector.broadcast %cst_4 : f32 to vector<1x128xf32>
    %6 = arith.divf %4, %5 : vector<1x128xf32>
    %7 = vector.broadcast %6 : vector<1x128xf32> to vector<64x128xf32>
    %8 = arith.subf %2, %7 : vector<64x128xf32>
    %9 = arith.mulf %8, %8 : vector<64x128xf32>
    %cst_5 = arith.constant dense<0.000000e+00> : vector<128xf32>
    %10 = vector.multi_reduction <add>, %9, %cst_5 [0] : vector<64x128xf32> to vector<128xf32>
    %11 = vector.shape_cast %10 : vector<128xf32> to vector<1x128xf32>
    %cst_6 = arith.constant 6.400000e+01 : f32
    %12 = vector.broadcast %cst_6 : f32 to vector<1x128xf32>
    %13 = arith.divf %11, %12 : vector<1x128xf32>
    %cst_7 = arith.constant 9.99999974E-6 : f32
    %14 = vector.broadcast %cst_7 : f32 to vector<1x128xf32>
    %15 = arith.addf %13, %14 : vector<1x128xf32>
    %16 = math.rsqrt %15 : vector<1x128xf32>
    %17 = vector.broadcast %16 : vector<1x128xf32> to vector<64x128xf32>
    %18 = arith.mulf %8, %17 : vector<64x128xf32>
    %cst_8 = arith.constant 0.000000e+00 : f32
    %19 = vector.broadcast %cst_8 : f32 to vector<64x128xf32>
    %20 = arith.cmpf oge, %18, %19 : vector<64x128xf32>
    %cst_9 = arith.constant 2.000000e-01 : f32
    %21 = vector.broadcast %cst_9 : f32 to vector<64x128xf32>
    %22 = arith.mulf %21, %18 : vector<64x128xf32>
    %23 = arith.select %20, %18, %22 : vector<64x128xi1>, vector<64x128xf32>
    %c0_10 = arith.constant 0 : index
    %c0_11 = arith.constant 0 : index
    %24 = vector.load %arg3[%c0_10, %c0_11] : memref<64x128xf32, #tpu.memory_space<vmem>>, vector<64x128xf32>
    tpu.vector_store %arg3[%c0_10, %c0_11], %23 {strides = array<i32>} : memref<64x128xf32, #tpu.memory_space<vmem>>, vector<64x128xf32>,
    return
  }
  func.func @transform_0(%arg0: i32) -> (i32, i32) {
    %c0_i32 = arith.constant 0 : i32
    %c0_i32_0 = arith.constant 0 : i32
    return %arg0, %c0_i32 : i32, i32
  }
  func.func @transform_1(%arg0: i32) -> (i32, i32) {
    %c0_i32 = arith.constant 0 : i32
    %c0_i32_0 = arith.constant 0 : i32
    %c0_i32_1 = arith.constant 0 : i32
    return %c0_i32, %c0_i32_0 : i32, i32
  }
  func.func @transform_2(%arg0: i32) -> (i32, i32) {
    %c0_i32 = arith.constant 0 : i32
    %c0_i32_0 = arith.constant 0 : i32
    return %arg0, %c0_i32 : i32, i32
  }
}

module attributes {stable_mosaic.version = 11 : i64} {
  func.func @_conv_in_lrelu_kernel(%arg0: i32, %arg1: memref<16x1024xf32, #tpu.memory_space<vmem>>, %arg2: memref<1024x128xf32, #tpu.memory_space<vmem>>, %arg3: memref<16x128xf32, #tpu.memory_space<vmem>>) attributes {dimension_semantics = [#tpu.dimension_semantics<parallel>], iteration_bounds = array<i64: 2>, scalar_prefetch = 0 : i64, scratch_operands = 0 : i64, tpu.core_type = #tpu.core_type<tc>, window_params = [{transform_indices = @transform_0, window_bounds = array<i64: 16, 1024>}, {pipeline_mode = #tpu.pipeline_mode<synchronous>, transform_indices = @transform_1, window_bounds = array<i64: 1024, 128>}, {transform_indices = @transform_2, window_bounds = array<i64: 16, 128>}]} {
    %c0 = arith.constant 0 : index
    %c0_0 = arith.constant 0 : index
    %0 = vector.load %arg1[%c0, %c0_0] : memref<16x1024xf32, #tpu.memory_space<vmem>>, vector<16x1024xf32>
    %c0_1 = arith.constant 0 : index
    %c0_2 = arith.constant 0 : index
    %1 = vector.load %arg2[%c0_1, %c0_2] : memref<1024x128xf32, #tpu.memory_space<vmem>>, vector<1024x128xf32>
    %cst = arith.constant dense<0.000000e+00> : vector<16x128xf32>
    %2 = tpu.matmul %0, %1, %cst {dimension_numbers = #tpu.dot_dimension_numbers<[1], [0], [0], [1], [0, 0, 1, 1], [], []>} : vector<16x1024xf32>, vector<1024x128xf32>, vector<16x128xf32> -> vector<16x128xf32>
    %cst_3 = arith.constant dense<0.000000e+00> : vector<128xf32>
    %3 = vector.multi_reduction <add>, %2, %cst_3 [0] : vector<16x128xf32> to vector<128xf32>
    %4 = vector.shape_cast %3 : vector<128xf32> to vector<1x128xf32>
    %cst_4 = arith.constant 1.600000e+01 : f32
    %5 = vector.broadcast %cst_4 : f32 to vector<1x128xf32>
    %6 = arith.divf %4, %5 : vector<1x128xf32>
    %7 = vector.broadcast %6 : vector<1x128xf32> to vector<16x128xf32>
    %8 = arith.subf %2, %7 : vector<16x128xf32>
    %9 = arith.mulf %8, %8 : vector<16x128xf32>
    %cst_5 = arith.constant dense<0.000000e+00> : vector<128xf32>
    %10 = vector.multi_reduction <add>, %9, %cst_5 [0] : vector<16x128xf32> to vector<128xf32>
    %11 = vector.shape_cast %10 : vector<128xf32> to vector<1x128xf32>
    %cst_6 = arith.constant 1.600000e+01 : f32
    %12 = vector.broadcast %cst_6 : f32 to vector<1x128xf32>
    %13 = arith.divf %11, %12 : vector<1x128xf32>
    %cst_7 = arith.constant 9.99999974E-6 : f32
    %14 = vector.broadcast %cst_7 : f32 to vector<1x128xf32>
    %15 = arith.addf %13, %14 : vector<1x128xf32>
    %16 = math.rsqrt %15 : vector<1x128xf32>
    %17 = vector.broadcast %16 : vector<1x128xf32> to vector<16x128xf32>
    %18 = arith.mulf %8, %17 : vector<16x128xf32>
    %cst_8 = arith.constant 0.000000e+00 : f32
    %19 = vector.broadcast %cst_8 : f32 to vector<16x128xf32>
    %20 = arith.cmpf oge, %18, %19 : vector<16x128xf32>
    %cst_9 = arith.constant 2.000000e-01 : f32
    %21 = vector.broadcast %cst_9 : f32 to vector<16x128xf32>
    %22 = arith.mulf %21, %18 : vector<16x128xf32>
    %23 = arith.select %20, %18, %22 : vector<16x128xi1>, vector<16x128xf32>
    %c0_10 = arith.constant 0 : index
    %c0_11 = arith.constant 0 : index
    %24 = vector.load %arg3[%c0_10, %c0_11] : memref<16x128xf32, #tpu.memory_space<vmem>>, vector<16x128xf32>
    tpu.vector_store %arg3[%c0_10, %c0_11], %23 {strides = array<i32>} : memref<16x128xf32, #tpu.memory_space<vmem>>, vector<16x128xf32>,
    return
  }
  func.func @transform_0(%arg0: i32) -> (i32, i32) {
    %c0_i32 = arith.constant 0 : i32
    %c0_i32_0 = arith.constant 0 : i32
    return %arg0, %c0_i32 : i32, i32
  }
  func.func @transform_1(%arg0: i32) -> (i32, i32) {
    %c0_i32 = arith.constant 0 : i32
    %c0_i32_0 = arith.constant 0 : i32
    %c0_i32_1 = arith.constant 0 : i32
    return %c0_i32, %c0_i32_0 : i32, i32
  }
  func.func @transform_2(%arg0: i32) -> (i32, i32) {
    %c0_i32 = arith.constant 0 : i32
    %c0_i32_0 = arith.constant 0 : i32
    return %arg0, %c0_i32 : i32, i32
  }
}

module attributes {stable_mosaic.version = 11 : i64} {
  func.func @_conv_in_lrelu_kernel(%arg0: i32, %arg1: memref<2x2048xf32, #tpu.memory_space<vmem>>, %arg2: memref<2048x128xf32, #tpu.memory_space<vmem>>, %arg3: memref<2x128xf32, #tpu.memory_space<vmem>>) attributes {dimension_semantics = [#tpu.dimension_semantics<parallel>], iteration_bounds = array<i64: 1>, scalar_prefetch = 0 : i64, scratch_operands = 0 : i64, tpu.core_type = #tpu.core_type<tc>, window_params = [{transform_indices = @transform_0, window_bounds = array<i64: 2, 2048>}, {pipeline_mode = #tpu.pipeline_mode<synchronous>, transform_indices = @transform_1, window_bounds = array<i64: 2048, 128>}, {transform_indices = @transform_2, window_bounds = array<i64: 2, 128>}]} {
    %c0 = arith.constant 0 : index
    %c0_0 = arith.constant 0 : index
    %0 = vector.load %arg1[%c0, %c0_0] : memref<2x2048xf32, #tpu.memory_space<vmem>>, vector<2x2048xf32>
    %c0_1 = arith.constant 0 : index
    %c0_2 = arith.constant 0 : index
    %1 = vector.load %arg2[%c0_1, %c0_2] : memref<2048x128xf32, #tpu.memory_space<vmem>>, vector<2048x128xf32>
    %cst = arith.constant dense<0.000000e+00> : vector<2x128xf32>
    %2 = tpu.matmul %0, %1, %cst {dimension_numbers = #tpu.dot_dimension_numbers<[1], [0], [0], [1], [0, 0, 1, 1], [], []>} : vector<2x2048xf32>, vector<2048x128xf32>, vector<2x128xf32> -> vector<2x128xf32>
    %c0_3 = arith.constant 0 : index
    %c0_4 = arith.constant 0 : index
    %3 = vector.load %arg3[%c0_3, %c0_4] : memref<2x128xf32, #tpu.memory_space<vmem>>, vector<2x128xf32>
    tpu.vector_store %arg3[%c0_3, %c0_4], %2 {strides = array<i32>} : memref<2x128xf32, #tpu.memory_space<vmem>>, vector<2x128xf32>,
    return
  }
  func.func @transform_0(%arg0: i32) -> (i32, i32) {
    %c0_i32 = arith.constant 0 : i32
    %c0_i32_0 = arith.constant 0 : i32
    return %arg0, %c0_i32 : i32, i32
  }
  func.func @transform_1(%arg0: i32) -> (i32, i32) {
    %c0_i32 = arith.constant 0 : i32
    %c0_i32_0 = arith.constant 0 : i32
    %c0_i32_1 = arith.constant 0 : i32
    return %c0_i32, %c0_i32_0 : i32, i32
  }
  func.func @transform_2(%arg0: i32) -> (i32, i32) {
    %c0_i32 = arith.constant 0 : i32
    %c0_i32_0 = arith.constant 0 : i32
    return %arg0, %c0_i32 : i32, i32
  }
}

</mosaic_0001>

<llo_original>
// kernel: nlayer_discriminator_forward.6
$region0: #{nlayer_discriminator_forward.6}
  #allocation0 [shape = 'u32[]', space=smem, size = 0x4, offset = 0x4, fixed_abs, tag = 'smem constant byte address 0x4 - core index']
  #allocation1 [shape = 'u32[144,128]{1,0:T(1,128)}', space=vmem, size = 0x12000, scoped, tag = 'internal scratch']
  %s0 = inlined_call_operand.vmem [shape: f32[512,128], index: 0, kind: input, shape index: {}]
  %s1 = inlined_call_operand.vmem [shape: f32[128,128], index: 1, kind: input, shape index: {}]
  %s2 = inlined_call_operand.vmem [shape: f32[512,128], index: 2, kind: output, shape index: {}]
  %s3 = sld [smem:[#allocation0]]
  $region41: #{nlayer_discriminator_forward.6} parent=0
    _
  %s5 = ssub.s32 1, %s3
  %s6 = scalar_select 0, %s5, %s3
  loop: start=0, step=1, limit=4
  $region2: #{nlayer_discriminator_forward.6} parent=0 // loop_pre_header
    _
  $region3: #{nlayer_discriminator_forward.6} parent=0 // loop_header
    %s8 = sphi 0, %s12
    %p9 = scmp.ge.s32.totalorder %s8, 4
    %s18 = sphi 0, %s20
    %s21 = sphi 0, %s18
    %s22 = sphi 0, %s21
    %s38 = sphi 0, %s22
    %s42 = sphi 0, %s42
    %s44 = sphi 0, %s42
    %s45 = sphi 0, %s44
    %s59 = sphi 0, %s45
    %s65 = sphi 0, %s67
    %s68 = sphi 0, %s65
    %s69 = sphi 0, %s68
    %s85 = sphi 0, %s69
  $region4: #{nlayer_discriminator_forward.6} parent=0 // loop_header_branch
    %11 = sbr.rel (%p9) target = $region8
  $region5: #{nlayer_discriminator_forward.6} parent=0 // loop_body
    %s13 = ssub.s32 %s8, 1
    %s14 = ssub.s32 %s8, 2
    %s15 = sadd.s32 %s8, 1
    %s16 = ssub.s32 %s8, %s15
    %p17 = scmp.eq.s32.totalorder %s16, 0
    %s19 = sadd.s32 %s18, 1
    %s20 = scalar_select %p17, %s18, %s19
    %p23 = pneg %p17
    %p24 = scmp.eq.s32.totalorder %s8, 1
    %p25 = por %p23, %p24
    %p26 = scmp.ne.s32.totalorder %s18, %s21
    %p27 = scmp.eq.s32.totalorder %s8, 0
    %p28 = por %p26, %p27
    %p29 = scmp.ne.s32.totalorder %s18, %s21
    %p30 = scmp.eq.s32.totalorder %s13, 1
    %p31 = por %p29, %p30
    %p32 = scmp.ne.s32.totalorder %s21, %s22
    %p33 = scmp.eq.s32.totalorder %s13, 0
    %p34 = por %p32, %p33
    %p35 = scmp.ne.s32.totalorder %s21, %s22
    %p36 = scmp.eq.s32.totalorder %s14, 1
    %p37 = por %p35, %p36
    %p39 = scmp.ne.s32.totalorder %s22, %s38
    %p40 = scmp.eq.s32.totalorder %s14, 0
    %p41 = por %p39, %p40
    %s43 = sadd.s32 %s42, 1
    %p46 = scmp.eq.s32.totalorder %s8, 1
    %p47 = scmp.ne.s32.totalorder %s42, %s44
    %p48 = scmp.eq.s32.totalorder %s8, 0
    %p49 = por %p47, %p48
    %p50 = scmp.ne.s32.totalorder %s42, %s44
    %p51 = scmp.eq.s32.totalorder %s13, 1
    %p52 = por %p50, %p51
    %p53 = scmp.ne.s32.totalorder %s44, %s45
    %p54 = scmp.eq.s32.totalorder %s13, 0
    %p55 = por %p53, %p54
    %p56 = scmp.ne.s32.totalorder %s44, %s45
    %p57 = scmp.eq.s32.totalorder %s14, 1
    %p58 = por %p56, %p57
    %p60 = scmp.ne.s32.totalorder %s45, %s59
    %p61 = scmp.eq.s32.totalorder %s14, 0
    %p62 = por %p60, %p61
    %s63 = ssub.s32 %s8, %s15
    %p64 = scmp.eq.s32.totalorder %s63, 0
    %s66 = sadd.s32 %s65, 1
    %s67 = scalar_select %p64, %s65, %s66
    %p70 = pneg %p64
    %p71 = scmp.eq.s32.totalorder %s8, 1
    %p72 = por %p70, %p71
    %p73 = scmp.ne.s32.totalorder %s65, %s68
    %p74 = scmp.eq.s32.totalorder %s8, 0
    %p75 = por %p73, %p74
    %p76 = scmp.ne.s32.totalorder %s65, %s68
    %p77 = scmp.eq.s32.totalorder %s13, 1
    %p78 = por %p76, %p77
    %p79 = scmp.ne.s32.totalorder %s68, %s69
    %p80 = scmp.eq.s32.totalorder %s13, 0
    %p81 = por %p79, %p80
    %p82 = scmp.ne.s32.totalorder %s68, %s69
    %p83 = scmp.eq.s32.totalorder %s14, 1
    %p84 = por %p82, %p83
    %p86 = scmp.ne.s32.totalorder %s69, %s85
    %p87 = scmp.eq.s32.totalorder %s14, 0
    %p88 = por %p86, %p87
    %p89 = scmp.le.s32.totalorder 1, %s8
    %p90 = scmp.lt.s32.totalorder %s8, 3
    %p91 = pnand %p89, %p90
    %p92 = pneg %p91
    // Predicated region
    $region9: #{nlayer_discriminator_forward.6} parent=5 // pred_check
      _
    $region10: #{nlayer_discriminator_forward.6} parent=5 // pred_check_branch
      %94 = sbr.rel (%p91) target = $region12
    $region11: #{nlayer_discriminator_forward.6} parent=5 // pred_region
      %s95 = ssub.s32 %s8, 1
      // Predicated region
      $region13: #{nlayer_discriminator_forward.6} parent=11 // pred_check
        %p96 = pneg %p55
      $region14: #{nlayer_discriminator_forward.6} parent=11 // pred_check_branch
        %98 = sbr.rel (%p96) target = $region16
      $region15: #{nlayer_discriminator_forward.6} parent=11 // pred_region
        _
      $region16: #{nlayer_discriminator_forward.6} parent=11 // pred_fallthru
        _
    $region12: #{nlayer_discriminator_forward.6} parent=5 // pred_fallthru
      _
    %p99 = scmp.lt.s32.totalorder %s8, 2
    // Predicated region
    $region17: #{nlayer_discriminator_forward.6} parent=5 // pred_check
      %p100 = pneg %p99
    $region18: #{nlayer_discriminator_forward.6} parent=5 // pred_check_branch
      %102 = sbr.rel (%p100) target = $region20
    $region19: #{nlayer_discriminator_forward.6} parent=5 // pred_region
      // Predicated region
      $region21: #{nlayer_discriminator_forward.6} parent=19 // pred_check
        %p103 = pneg %p28
      $region22: #{nlayer_discriminator_forward.6} parent=19 // pred_check_branch
        %105 = sbr.rel (%p103) target = $region24
      $region23: #{nlayer_discriminator_forward.6} parent=19 // pred_region
        %s106 = smul.u32 32, %s8
        %p107 = scmp.lt.s32.totalorder %s106, 63
        %s108 = scalar_select %p107, %s106, 63
        %s109 = smul.addr %s108, 8
        %s110 = scalar_lea.vmem %s0, %s109
        %s111 = smul.u32 32, %s8
      $region24: #{nlayer_discriminator_forward.6} parent=19 // pred_fallthru
        _
    $region20: #{nlayer_discriminator_forward.6} parent=5 // pred_fallthru
      _
    %p112 = scmp.le.s32.totalorder 1, %s8
    %p113 = scmp.lt.s32.totalorder %s8, 3
    %p114 = pnand %p112, %p113
    %p115 = pneg %p114
    // Predicated region
    $region25: #{nlayer_discriminator_forward.6} parent=5 // pred_check
      _
    $region26: #{nlayer_discriminator_forward.6} parent=5 // pred_check_branch
      %117 = sbr.rel (%p114) target = $region28
    $region27: #{nlayer_discriminator_forward.6} parent=5 // pred_region
      %s118 = ssub.s32 %s8, 1
      %s119 = smul.u32 32, %s13
      %p120 = scmp.lt.s32.totalorder %s119, 63
      %s121 = scalar_select %p120, %s119, 63
      %s122 = smul.addr %s121, 8
      %s123 = scalar_lea.vmem %s0, %s122
      %p124 = pneg %p34
      %p125 = pneg %p31
      %p126 = pneg %p55
      %p127 = pneg %p52
      %p128 = pneg %p81
      %p129 = pneg %p78
      %s130 = smul.u32 32, %s13
      %p131 = scmp.lt.s32.totalorder %s130, 63
      %s132 = scalar_select %p131, %s130, 63
      %s133 = smul.addr %s132, 8
      %s134 = scalar_lea.vmem %s2, %s133
      %s135 = smul.u32 32, %s13
      %p136 = scmp.lt.s32.totalorder %s135, 63
      %s137 = scalar_select %p136, %s135, 63
      %s138 = smul.addr %s137, 8
      %s139 = scalar_lea.vmem %s0, %s138
      %s140 = smul.u32 32, %s13
      %s141 = smul.u32 32, %s13
      %p142 = scmp.lt.s32.totalorder %s141, 63
      %s143 = scalar_select %p142, %s141, 63
      %s144 = smul.addr %s143, 8
      %s145 = scalar_lea.vmem %s2, %s144
      %s146 = smul.u32 32, %s13
      %v147 = vld [vmem:[%s139] sm:$0xff]
      %v148 = vld [vmem:[%s139 + $0x8] sm:$0xff]
      %v149 = vld [vmem:[%s139 + $0x10] sm:$0xff]
      %v150 = vld [vmem:[%s139 + $0x18] sm:$0xff]
      %v151 = vld [vmem:[%s139 + $0x20] sm:$0xff]
      %v152 = vld [vmem:[%s139 + $0x28] sm:$0xff]
      %v153 = vld [vmem:[%s139 + $0x30] sm:$0xff]
      %v154 = vld [vmem:[%s139 + $0x38] sm:$0xff]
      %v155 = vld [vmem:[%s139 + $0x40] sm:$0xff]
      %v156 = vld [vmem:[%s139 + $0x48] sm:$0xff]
      %v157 = vld [vmem:[%s139 + $0x50] sm:$0xff]
      %v158 = vld [vmem:[%s139 + $0x58] sm:$0xff]
      %v159 = vld [vmem:[%s139 + $0x60] sm:$0xff]
      %v160 = vld [vmem:[%s139 + $0x68] sm:$0xff]
      %v161 = vld [vmem:[%s139 + $0x70] sm:$0xff]
      %v162 = vld [vmem:[%s139 + $0x78] sm:$0xff]
      %v163 = vld [vmem:[%s139 + $0x80] sm:$0xff]
      %v164 = vld [vmem:[%s139 + $0x88] sm:$0xff]
      %v165 = vld [vmem:[%s139 + $0x90] sm:$0xff]
      %v166 = vld [vmem:[%s139 + $0x98] sm:$0xff]
      %v167 = vld [vmem:[%s139 + $0xa0] sm:$0xff]
      %v168 = vld [vmem:[%s139 + $0xa8] sm:$0xff]
      %v169 = vld [vmem:[%s139 + $0xb0] sm:$0xff]
      %v170 = vld [vmem:[%s139 + $0xb8] sm:$0xff]
      %v171 = vld [vmem:[%s139 + $0xc0] sm:$0xff]
      %v172 = vld [vmem:[%s139 + $0xc8] sm:$0xff]
      %v173 = vld [vmem:[%s139 + $0xd0] sm:$0xff]
      %v174 = vld [vmem:[%s139 + $0xd8] sm:$0xff]
      %v175 = vld [vmem:[%s139 + $0xe0] sm:$0xff]
      %v176 = vld [vmem:[%s139 + $0xe8] sm:$0xff]
      %v177 = vld [vmem:[%s139 + $0xf0] sm:$0xff]
      %v178 = vld [vmem:[%s139 + $0xf8] sm:$0xff]
      %v179 = vld [vmem:[%s1] sm:$0xff]
      %v180 = vld [vmem:[%s1 + $0x8] sm:$0xff]
      %v181 = vld [vmem:[%s1 + $0x10] sm:$0xff]
      %v182 = vld [vmem:[%s1 + $0x18] sm:$0xff]
      %v183 = vld [vmem:[%s1 + $0x20] sm:$0xff]
      %v184 = vld [vmem:[%s1 + $0x28] sm:$0xff]
      %v185 = vld [vmem:[%s1 + $0x30] sm:$0xff]
      %v186 = vld [vmem:[%s1 + $0x38] sm:$0xff]
      %v187 = vld [vmem:[%s1 + $0x40] sm:$0xff]
      %v188 = vld [vmem:[%s1 + $0x48] sm:$0xff]
      %v189 = vld [vmem:[%s1 + $0x50] sm:$0xff]
      %v190 = vld [vmem:[%s1 + $0x58] sm:$0xff]
      %v191 = vld [vmem:[%s1 + $0x60] sm:$0xff]
      %v192 = vld [vmem:[%s1 + $0x68] sm:$0xff]
      %v193 = vld [vmem:[%s1 + $0x70] sm:$0xff]
      %v194 = vld [vmem:[%s1 + $0x78] sm:$0xff]
      %195 = vmatprep.subr.mxu0 0.0
      %196 = vmatpush1.msra.mxu0 %v179
      %197 = vmatprep.subr.mxu0 0.0
      %198 = vmatpush1.msra.mxu0 %v180
      %199 = vmatprep.subr.mxu0 0.0
      %200 = vmatpush1.msra.mxu0 %v181
      %201 = vmatprep.subr.mxu0 0.0
      %202 = vmatpush1.msra.mxu0 %v182
      %203 = vmatprep.subr.mxu0 0.0
      %204 = vmatpush1.msra.mxu0 %v183
      %205 = vmatprep.subr.mxu0 0.0
      %206 = vmatpush1.msra.mxu0 %v184
      %207 = vmatprep.subr.mxu0 0.0
      %208 = vmatpush1.msra.mxu0 %v185
      %209 = vmatprep.subr.mxu0 0.0
      %210 = vmatpush1.msra.mxu0 %v186
      %211 = vmatprep.subr.mxu0 0.0
      %212 = vmatpush1.msra.mxu0 %v187
      %213 = vmatprep.subr.mxu0 0.0
      %214 = vmatpush1.msra.mxu0 %v188
      %215 = vmatprep.subr.mxu0 0.0
      %216 = vmatpush1.msra.mxu0 %v189
      %217 = vmatprep.subr.mxu0 0.0
      %218 = vmatpush1.msra.mxu0 %v190
      %219 = vmatprep.subr.mxu0 0.0
      %220 = vmatpush1.msra.mxu0 %v191
      %221 = vmatprep.subr.mxu0 0.0
      %222 = vmatpush1.msra.mxu0 %v192
      %223 = vmatprep.subr.mxu0 0.0
      %224 = vmatpush1.msra.mxu0 %v193
      %225 = vmatprep.subr.mxu0 0.0
      %226 = vmatpush1.msra.mxu0 %v194
      %227 = vmatprep.subr.mxu0 0.0
      %228 = vmatpush1.msra.mxu0 0.0
      %229 = vmatprep.subr.mxu0 0.0
      %230 = vmatpush1.msra.mxu0 0.0
      %231 = vmatprep.subr.mxu0 0.0
      %232 = vmatpush1.msra.mxu0 0.0
      %233 = vmatprep.subr.mxu0 0.0
      %234 = vmatpush1.msra.mxu0 0.0
      %235 = vmatprep.subr.mxu0 0.0
      %236 = vmatpush1.msra.mxu0 0.0
      %237 = vmatprep.subr.mxu0 0.0
      %238 = vmatpush1.msra.mxu0 0.0
      %239 = vmatprep.subr.mxu0 0.0
      %240 = vmatpush1.msra.mxu0 0.0
      %241 = vmatprep.subr.mxu0 0.0
      %242 = vmatpush1.msra.mxu0 0.0
      %243 = vmatprep.subr.mxu0 0.0
      %244 = vmatpush1.msra.mxu0 0.0
      %245 = vmatprep.subr.mxu0 0.0
      %246 = vmatpush1.msra.mxu0 0.0
      %247 = vmatprep.subr.mxu0 0.0
      %248 = vmatpush1.msra.mxu0 0.0
      %249 = vmatprep.subr.mxu0 0.0
      %250 = vmatpush1.msra.mxu0 0.0
      %251 = vmatprep.subr.mxu0 0.0
      %252 = vmatpush1.msra.mxu0 0.0
      %253 = vmatprep.subr.mxu0 0.0
      %254 = vmatpush1.msra.mxu0 0.0
      %255 = vmatprep.subr.mxu0 0.0
      %256 = vmatpush1.msra.mxu0 0.0
      %257 = vmatprep.subr.mxu0 0.0
      %258 = vmatpush1.msra.mxu0 0.0
      %259 = vmatprep.mubr.f32.mxu0 0.0
      %260 = vmatmul.mubr.f32.gmra.mrb[0].mxu0 %v147
      %v261 = vpop.f32.mrb[0].mxu0
      %v262 = vadd.f32 0.0, %v261
      %v263 = vpop.f32.mrb[0].mxu0
      %264 = vmatprep.mubr.f32.mxu0 0.0
      %265 = vmatmul.mubr.f32.gmra.mrb[0].mxu0 %v148
      %v266 = vpop.f32.mrb[0].mxu0
      %v267 = vadd.f32 0.0, %v266
      %v268 = vpop.f32.mrb[0].mxu0
      %269 = vmatprep.mubr.f32.mxu0 0.0
      %270 = vmatmul.mubr.f32.gmra.mrb[0].mxu0 %v149
      %v271 = vpop.f32.mrb[0].mxu0
      %v272 = vadd.f32 0.0, %v271
      %v273 = vpop.f32.mrb[0].mxu0
      %274 = vmatprep.mubr.f32.mxu0 0.0
      %275 = vmatmul.mubr.f32.gmra.mrb[0].mxu0 %v150
      %v276 = vpop.f32.mrb[0].mxu0
      %v277 = vadd.f32 0.0, %v276
      %v278 = vpop.f32.mrb[0].mxu0
      %279 = vmatprep.mubr.f32.mxu0 0.0
      %280 = vmatmul.mubr.f32.gmra.mrb[0].mxu0 %v151
      %v281 = vpop.f32.mrb[0].mxu0
      %v282 = vadd.f32 0.0, %v281
      %v283 = vpop.f32.mrb[0].mxu0
      %284 = vmatprep.mubr.f32.mxu0 0.0
      %285 = vmatmul.mubr.f32.gmra.mrb[0].mxu0 %v152
      %v286 = vpop.f32.mrb[0].mxu0
      %v287 = vadd.f32 0.0, %v286
      %v288 = vpop.f32.mrb[0].mxu0
      %289 = vmatprep.mubr.f32.mxu0 0.0
      %290 = vmatmul.mubr.f32.gmra.mrb[0].mxu0 %v153
      %v291 = vpop.f32.mrb[0].mxu0
      %v292 = vadd.f32 0.0, %v291
      %v293 = vpop.f32.mrb[0].mxu0
      %294 = vmatprep.mubr.f32.mxu0 0.0
      %295 = vmatmul.mubr.f32.gmra.mrb[0].mxu0 %v154
      %v296 = vpop.f32.mrb[0].mxu0
      %v297 = vadd.f32 0.0, %v296
      %v298 = vpop.f32.mrb[0].mxu0
      %299 = vmatprep.mubr.f32.mxu0 0.0
      %300 = vmatmul.mubr.f32.gmra.mrb[0].mxu0 %v155
      %v301 = vpop.f32.mrb[0].mxu0
      %v302 = vadd.f32 0.0, %v301
      %v303 = vpop.f32.mrb[0].mxu0
      %304 = vmatprep.mubr.f32.mxu0 0.0
      %305 = vmatmul.mubr.f32.gmra.mrb[0].mxu0 %v156
      %v306 = vpop.f32.mrb[0].mxu0
      %v307 = vadd.f32 0.0, %v306
      %v308 = vpop.f32.mrb[0].mxu0
      %309 = vmatprep.mubr.f32.mxu0 0.0
      %310 = vmatmul.mubr.f32.gmra.mrb[0].mxu0 %v157
      %v311 = vpop.f32.mrb[0].mxu0
      %v312 = vadd.f32 0.0, %v311
      %v313 = vpop.f32.mrb[0].mxu0
      %314 = vmatprep.mubr.f32.mxu0 0.0
      %315 = vmatmul.mubr.f32.gmra.mrb[0].mxu0 %v158
      %v316 = vpop.f32.mrb[0].mxu0
      %v317 = vadd.f32 0.0, %v316
      %v318 = vpop.f32.mrb[0].mxu0
      %319 = vmatprep.mubr.f32.mxu0 0.0
      %320 = vmatmul.mubr.f32.gmra.mrb[0].mxu0 %v159
      %v321 = vpop.f32.mrb[0].mxu0
      %v322 = vadd.f32 0.0, %v321
      %v323 = vpop.f32.mrb[0].mxu0
      %324 = vmatprep.mubr.f32.mxu0 0.0
      %325 = vmatmul.mubr.f32.gmra.mrb[0].mxu0 %v160
      %v326 = vpop.f32.mrb[0].mxu0
      %v327 = vadd.f32 0.0, %v326
      %v328 = vpop.f32.mrb[0].mxu0
      %329 = vmatprep.mubr.f32.mxu0 0.0
      %330 = vmatmul.mubr.f32.gmra.mrb[0].mxu0 %v161
      %v331 = vpop.f32.mrb[0].mxu0
      %v332 = vadd.f32 0.0, %v331
      %v333 = vpop.f32.mrb[0].mxu0
      %334 = vmatprep.mubr.f32.mxu0 0.0
      %335 = vmatmul.mubr.f32.gmra.mrb[0].mxu0 %v162
      %v336 = vpop.f32.mrb[0].mxu0
      %v337 = vadd.f32 0.0, %v336
      %v338 = vpop.f32.mrb[0].mxu0
      %339 = vmatprep.mubr.f32.mxu0 0.0
      %340 = vmatmul.mubr.f32.gmra.mrb[0].mxu0 %v163
      %v341 = vpop.f32.mrb[0].mxu0
      %v342 = vadd.f32 0.0, %v341
      %v343 = vpop.f32.mrb[0].mxu0
      %344 = vmatprep.mubr.f32.mxu0 0.0
      %345 = vmatmul.mubr.f32.gmra.mrb[0].mxu0 %v164
      %v346 = vpop.f32.mrb[0].mxu0
      %v347 = vadd.f32 0.0, %v346
      %v348 = vpop.f32.mrb[0].mxu0
      %349 = vmatprep.mubr.f32.mxu0 0.0
      %350 = vmatmul.mubr.f32.gmra.mrb[0].mxu0 %v165
      %v351 = vpop.f32.mrb[0].mxu0
      %v352 = vadd.f32 0.0, %v351
      %v353 = vpop.f32.mrb[0].mxu0
      %354 = vmatprep.mubr.f32.mxu0 0.0
      %355 = vmatmul.mubr.f32.gmra.mrb[0].mxu0 %v166
      %v356 = vpop.f32.mrb[0].mxu0
      %v357 = vadd.f32 0.0, %v356
      %v358 = vpop.f32.mrb[0].mxu0
      %359 = vmatprep.mubr.f32.mxu0 0.0
      %360 = vmatmul.mubr.f32.gmra.mrb[0].mxu0 %v167
      %v361 = vpop.f32.mrb[0].mxu0
      %v362 = vadd.f32 0.0, %v361
      %v363 = vpop.f32.mrb[0].mxu0
      %364 = vmatprep.mubr.f32.mxu0 0.0
      %365 = vmatmul.mubr.f32.gmra.mrb[0].mxu0 %v168
      %v366 = vpop.f32.mrb[0].mxu0
      %v367 = vadd.f32 0.0, %v366
      %v368 = vpop.f32.mrb[0].mxu0
      %369 = vmatprep.mubr.f32.mxu0 0.0
      %370 = vmatmul.mubr.f32.gmra.mrb[0].mxu0 %v169
      %v371 = vpop.f32.mrb[0].mxu0
      %v372 = vadd.f32 0.0, %v371
      %v373 = vpop.f32.mrb[0].mxu0
      %374 = vmatprep.mubr.f32.mxu0 0.0
      %375 = vmatmul.mubr.f32.gmra.mrb[0].mxu0 %v170
      %v376 = vpop.f32.mrb[0].mxu0
      %v377 = vadd.f32 0.0, %v376
      %v378 = vpop.f32.mrb[0].mxu0
      %379 = vmatprep.mubr.f32.mxu0 0.0
      %380 = vmatmul.mubr.f32.gmra.mrb[0].mxu0 %v171
      %v381 = vpop.f32.mrb[0].mxu0
      %v382 = vadd.f32 0.0, %v381
      %v383 = vpop.f32.mrb[0].mxu0
      %384 = vmatprep.mubr.f32.mxu0 0.0
      %385 = vmatmul.mubr.f32.gmra.mrb[0].mxu0 %v172
      %v386 = vpop.f32.mrb[0].mxu0
      %v387 = vadd.f32 0.0, %v386
      %v388 = vpop.f32.mrb[0].mxu0
      %389 = vmatprep.mubr.f32.mxu0 0.0
      %390 = vmatmul.mubr.f32.gmra.mrb[0].mxu0 %v173
      %v391 = vpop.f32.mrb[0].mxu0
      %v392 = vadd.f32 0.0, %v391
      %v393 = vpop.f32.mrb[0].mxu0
      %394 = vmatprep.mubr.f32.mxu0 0.0
      %395 = vmatmul.mubr.f32.gmra.mrb[0].mxu0 %v174
      %v396 = vpop.f32.mrb[0].mxu0
      %v397 = vadd.f32 0.0, %v396
      %v398 = vpop.f32.mrb[0].mxu0
      %399 = vmatprep.mubr.f32.mxu0 0.0
      %400 = vmatmul.mubr.f32.gmra.mrb[0].mxu0 %v175
      %v401 = vpop.f32.mrb[0].mxu0
      %v402 = vadd.f32 0.0, %v401
      %v403 = vpop.f32.mrb[0].mxu0
      %404 = vmatprep.mubr.f32.mxu0 0.0
      %405 = vmatmul.mubr.f32.gmra.mrb[0].mxu0 %v176
      %v406 = vpop.f32.mrb[0].mxu0
      %v407 = vadd.f32 0.0, %v406
      %v408 = vpop.f32.mrb[0].mxu0
      %409 = vmatprep.mubr.f32.mxu0 0.0
      %410 = vmatmul.mubr.f32.gmra.mrb[0].mxu0 %v177
      %v411 = vpop.f32.mrb[0].mxu0
      %v412 = vadd.f32 0.0, %v411
      %v413 = vpop.f32.mrb[0].mxu0
      %414 = vmatprep.mubr.f32.mxu0 0.0
      %415 = vmatmul.mubr.f32.gmra.mrb[0].mxu0 %v178
      %v416 = vpop.f32.mrb[0].mxu0
      %v417 = vadd.f32 0.0, %v416
      %v418 = vpop.f32.mrb[0].mxu0
      %419 = vdwg.mxu0
      %v420 = vadd.f32 %v262, %v267
      %v421 = vadd.f32 %v420, %v272
      %v422 = vadd.f32 %v421, %v277
      %v423 = vadd.f32 %v422, %v282
      %v424 = vadd.f32 %v423, %v287
      %v425 = vadd.f32 %v424, %v292
      %v426 = vadd.f32 %v425, %v297
      %v427 = vadd.f32 %v426, %v302
      %v428 = vadd.f32 %v427, %v307
      %v429 = vadd.f32 %v428, %v312
      %v430 = vadd.f32 %v429, %v317
      %v431 = vadd.f32 %v430, %v322
      %v432 = vadd.f32 %v431, %v327
      %v433 = vadd.f32 %v432, %v332
      %v434 = vadd.f32 %v433, %v337
      %v435 = vadd.f32 %v434, %v342
      %v436 = vadd.f32 %v435, %v347
      %v437 = vadd.f32 %v436, %v352
      %v438 = vadd.f32 %v437, %v357
      %v439 = vadd.f32 %v438, %v362
      %v440 = vadd.f32 %v439, %v367
      %v441 = vadd.f32 %v440, %v372
      %v442 = vadd.f32 %v441, %v377
      %v443 = vadd.f32 %v442, %v382
      %v444 = vadd.f32 %v443, %v387
      %v445 = vadd.f32 %v444, %v392
      %v446 = vadd.f32 %v445, %v397
      %v447 = vadd.f32 %v446, %v402
      %v448 = vadd.f32 %v447, %v407
      %v449 = vadd.f32 %v448, %v412
      %v450 = vadd.f32 %v449, %v417
      %v451 = vrot.slane %v450, 4
      %v452 = vadd.f32 %v450, %v451
      %v453 = vrot.slane %v452, 2
      %v454 = vadd.f32 %v452, %v453
      %v455 = vrot.slane %v454, 1
      %v456 = vadd.f32 %v454, %v455
      %v457 = vrcp.pop 256.0
      %v458 = vmul.f32 %v456, %v457
      %v459 = vsub.f32 %v262, %v458
      %v460 = vsub.f32 %v267, %v458
      %v461 = vsub.f32 %v272, %v458
      %v462 = vsub.f32 %v277, %v458
      %v463 = vsub.f32 %v282, %v458
      %v464 = vsub.f32 %v287, %v458
      %v465 = vsub.f32 %v292, %v458
      %v466 = vsub.f32 %v297, %v458
      %v467 = vsub.f32 %v302, %v458
      %v468 = vsub.f32 %v307, %v458
      %v469 = vsub.f32 %v312, %v458
      %v470 = vsub.f32 %v317, %v458
      %v471 = vsub.f32 %v322, %v458
      %v472 = vsub.f32 %v327, %v458
      %v473 = vsub.f32 %v332, %v458
      %v474 = vsub.f32 %v337, %v458
      %v475 = vsub.f32 %v342, %v458
      %v476 = vsub.f32 %v347, %v458
      %v477 = vsub.f32 %v352, %v458
      %v478 = vsub.f32 %v357, %v458
      %v479 = vsub.f32 %v362, %v458
      %v480 = vsub.f32 %v367, %v458
      %v481 = vsub.f32 %v372, %v458
      %v482 = vsub.f32 %v377, %v458
      %v483 = vsub.f32 %v382, %v458
      %v484 = vsub.f32 %v387, %v458
      %v485 = vsub.f32 %v392, %v458
      %v486 = vsub.f32 %v397, %v458
      %v487 = vsub.f32 %v402, %v458
      %v488 = vsub.f32 %v407, %v458
      %v489 = vsub.f32 %v412, %v458
      %v490 = vsub.f32 %v417, %v458
      %v491 = vmul.f32 %v459, %v459
      %v492 = vmul.f32 %v460, %v460
      %v493 = vmul.f32 %v461, %v461
      %v494 = vmul.f32 %v462, %v462
      %v495 = vmul.f32 %v463, %v463
      %v496 = vmul.f32 %v464, %v464
      %v497 = vmul.f32 %v465, %v465
      %v498 = vmul.f32 %v466, %v466
      %v499 = vmul.f32 %v467, %v467
      %v500 = vmul.f32 %v468, %v468
      %v501 = vmul.f32 %v469, %v469
      %v502 = vmul.f32 %v470, %v470
      %v503 = vmul.f32 %v471, %v471
      %v504 = vmul.f32 %v472, %v472
      %v505 = vmul.f32 %v473, %v473
      %v506 = vmul.f32 %v474, %v474
      %v507 = vmul.f32 %v475, %v475
      %v508 = vmul.f32 %v476, %v476
      %v509 = vmul.f32 %v477, %v477
      %v510 = vmul.f32 %v478, %v478
      %v511 = vmul.f32 %v479, %v479
      %v512 = vmul.f32 %v480, %v480
      %v513 = vmul.f32 %v481, %v481
      %v514 = vmul.f32 %v482, %v482
      %v515 = vmul.f32 %v483, %v483
      %v516 = vmul.f32 %v484, %v484
      %v517 = vmul.f32 %v485, %v485
      %v518 = vmul.f32 %v486, %v486
      %v519 = vmul.f32 %v487, %v487
      %v520 = vmul.f32 %v488, %v488
      %v521 = vmul.f32 %v489, %v489
      %v522 = vmul.f32 %v490, %v490
      %v523 = vadd.f32 %v491, %v492
      %v524 = vadd.f32 %v523, %v493
      %v525 = vadd.f32 %v524, %v494
      %v526 = vadd.f32 %v525, %v495
      %v527 = vadd.f32 %v526, %v496
      %v528 = vadd.f32 %v527, %v497
      %v529 = vadd.f32 %v528, %v498
      %v530 = vadd.f32 %v529, %v499
      %v531 = vadd.f32 %v530, %v500
      %v532 = vadd.f32 %v531, %v501
      %v533 = vadd.f32 %v532, %v502
      %v534 = vadd.f32 %v533, %v503
      %v535 = vadd.f32 %v534, %v504
      %v536 = vadd.f32 %v535, %v505
      %v537 = vadd.f32 %v536, %v506
      %v538 = vadd.f32 %v537, %v507
      %v539 = vadd.f32 %v538, %v508
      %v540 = vadd.f32 %v539, %v509
      %v541 = vadd.f32 %v540, %v510
      %v542 = vadd.f32 %v541, %v511
      %v543 = vadd.f32 %v542, %v512
      %v544 = vadd.f32 %v543, %v513
      %v545 = vadd.f32 %v544, %v514
      %v546 = vadd.f32 %v545, %v515
      %v547 = vadd.f32 %v546, %v516
      %v548 = vadd.f32 %v547, %v517
      %v549 = vadd.f32 %v548, %v518
      %v550 = vadd.f32 %v549, %v519
      %v551 = vadd.f32 %v550, %v520
      %v552 = vadd.f32 %v551, %v521
      %v553 = vadd.f32 %v552, %v522
      %v554 = vrot.slane %v553, 4
      %v555 = vadd.f32 %v553, %v554
      %v556 = vrot.slane %v555, 2
      %v557 = vadd.f32 %v555, %v556
      %v558 = vrot.slane %v557, 1
      %v559 = vadd.f32 %v557, %v558
      %v560 = vmul.f32 %v559, %v457
      %v561 = vadd.f32 %v560, 1e-05
      %v562 = vrsqrt.pop %v561
      %v563 = vmul.f32 %v459, %v562
      %v564 = vmul.f32 %v460, %v562
      %v565 = vmul.f32 %v461, %v562
      %v566 = vmul.f32 %v462, %v562
      %v567 = vmul.f32 %v463, %v562
      %v568 = vmul.f32 %v464, %v562
      %v569 = vmul.f32 %v465, %v562
      %v570 = vmul.f32 %v466, %v562
      %v571 = vmul.f32 %v467, %v562
      %v572 = vmul.f32 %v468, %v562
      %v573 = vmul.f32 %v469, %v562
      %v574 = vmul.f32 %v470, %v562
      %v575 = vmul.f32 %v471, %v562
      %v576 = vmul.f32 %v472, %v562
      %v577 = vmul.f32 %v473, %v562
      %v578 = vmul.f32 %v474, %v562
      %v579 = vmul.f32 %v475, %v562
      %v580 = vmul.f32 %v476, %v562
      %v581 = vmul.f32 %v477, %v562
      %v582 = vmul.f32 %v478, %v562
      %v583 = vmul.f32 %v479, %v562
      %v584 = vmul.f32 %v480, %v562
      %v585 = vmul.f32 %v481, %v562
      %v586 = vmul.f32 %v482, %v562
      %v587 = vmul.f32 %v483, %v562
      %v588 = vmul.f32 %v484, %v562
      %v589 = vmul.f32 %v485, %v562
      %v590 = vmul.f32 %v486, %v562
      %v591 = vmul.f32 %v487, %v562
      %v592 = vmul.f32 %v488, %v562
      %v593 = vmul.f32 %v489, %v562
      %v594 = vmul.f32 %v490, %v562
      %vm595 = vcmp.ge.f32.partialorder %v563, 0.0
      %vm596 = vcmp.ge.f32.partialorder %v564, 0.0
      %vm597 = vcmp.ge.f32.partialorder %v565, 0.0
      %vm598 = vcmp.ge.f32.partialorder %v566, 0.0
      %vm599 = vcmp.ge.f32.partialorder %v567, 0.0
      %vm600 = vcmp.ge.f32.partialorder %v568, 0.0
      %vm601 = vcmp.ge.f32.partialorder %v569, 0.0
      %vm602 = vcmp.ge.f32.partialorder %v570, 0.0
      %vm603 = vcmp.ge.f32.partialorder %v571, 0.0
      %vm604 = vcmp.ge.f32.partialorder %v572, 0.0
      %vm605 = vcmp.ge.f32.partialorder %v573, 0.0
      %vm606 = vcmp.ge.f32.partialorder %v574, 0.0
      %vm607 = vcmp.ge.f32.partialorder %v575, 0.0
      %vm608 = vcmp.ge.f32.partialorder %v576, 0.0
      %vm609 = vcmp.ge.f32.partialorder %v577, 0.0
      %vm610 = vcmp.ge.f32.partialorder %v578, 0.0
      %vm611 = vcmp.ge.f32.partialorder %v579, 0.0
      %vm612 = vcmp.ge.f32.partialorder %v580, 0.0
      %vm613 = vcmp.ge.f32.partialorder %v581, 0.0
      %vm614 = vcmp.ge.f32.partialorder %v582, 0.0
      %vm615 = vcmp.ge.f32.partialorder %v583, 0.0
      %vm616 = vcmp.ge.f32.partialorder %v584, 0.0
      %vm617 = vcmp.ge.f32.partialorder %v585, 0.0
      %vm618 = vcmp.ge.f32.partialorder %v586, 0.0
      %vm619 = vcmp.ge.f32.partialorder %v587, 0.0
      %vm620 = vcmp.ge.f32.partialorder %v588, 0.0
      %vm621 = vcmp.ge.f32.partialorder %v589, 0.0
      %vm622 = vcmp.ge.f32.partialorder %v590, 0.0
      %vm623 = vcmp.ge.f32.partialorder %v591, 0.0
      %vm624 = vcmp.ge.f32.partialorder %v592, 0.0
      %vm625 = vcmp.ge.f32.partialorder %v593, 0.0
      %vm626 = vcmp.ge.f32.partialorder %v594, 0.0
      %v627 = vmul.f32 %v563, 0.2
      %v628 = vmul.f32 %v564, 0.2
      %v629 = vmul.f32 %v565, 0.2
      %v630 = vmul.f32 %v566, 0.2
      %v631 = vmul.f32 %v567, 0.2
      %v632 = vmul.f32 %v568, 0.2
      %v633 = vmul.f32 %v569, 0.2
      %v634 = vmul.f32 %v570, 0.2
      %v635 = vmul.f32 %v571, 0.2
      %v636 = vmul.f32 %v572, 0.2
      %v637 = vmul.f32 %v573, 0.2
      %v638 = vmul.f32 %v574, 0.2
      %v639 = vmul.f32 %v575, 0.2
      %v640 = vmul.f32 %v576, 0.2
      %v641 = vmul.f32 %v577, 0.2
      %v642 = vmul.f32 %v578, 0.2
      %v643 = vmul.f32 %v579, 0.2
      %v644 = vmul.f32 %v580, 0.2
      %v645 = vmul.f32 %v581, 0.2
      %v646 = vmul.f32 %v582, 0.2
      %v647 = vmul.f32 %v583, 0.2
      %v648 = vmul.f32 %v584, 0.2
      %v649 = vmul.f32 %v585, 0.2
      %v650 = vmul.f32 %v586, 0.2
      %v651 = vmul.f32 %v587, 0.2
      %v652 = vmul.f32 %v588, 0.2
      %v653 = vmul.f32 %v589, 0.2
      %v654 = vmul.f32 %v590, 0.2
      %v655 = vmul.f32 %v591, 0.2
      %v656 = vmul.f32 %v592, 0.2
      %v657 = vmul.f32 %v593, 0.2
      %v658 = vmul.f32 %v594, 0.2
      %v659 = vsel %vm595, %v563, %v627
      %v660 = vsel %vm596, %v564, %v628
      %v661 = vsel %vm597, %v565, %v629
      %v662 = vsel %vm598, %v566, %v630
      %v663 = vsel %vm599, %v567, %v631
      %v664 = vsel %vm600, %v568, %v632
      %v665 = vsel %vm601, %v569, %v633
      %v666 = vsel %vm602, %v570, %v634
      %v667 = vsel %vm603, %v571, %v635
      %v668 = vsel %vm604, %v572, %v636
      %v669 = vsel %vm605, %v573, %v637
      %v670 = vsel %vm606, %v574, %v638
      %v671 = vsel %vm607, %v575, %v639
      %v672 = vsel %vm608, %v576, %v640
      %v673 = vsel %vm609, %v577, %v641
      %v674 = vsel %vm610, %v578, %v642
      %v675 = vsel %vm611, %v579, %v643
      %v676 = vsel %vm612, %v580, %v644
      %v677 = vsel %vm613, %v581, %v645
      %v678 = vsel %vm614, %v582, %v646
      %v679 = vsel %vm615, %v583, %v647
      %v680 = vsel %vm616, %v584, %v648
      %v681 = vsel %vm617, %v585, %v649
      %v682 = vsel %vm618, %v586, %v650
      %v683 = vsel %vm619, %v587, %v651
      %v684 = vsel %vm620, %v588, %v652
      %v685 = vsel %vm621, %v589, %v653
      %v686 = vsel %vm622, %v590, %v654
      %v687 = vsel %vm623, %v591, %v655
      %v688 = vsel %vm624, %v592, %v656
      %v689 = vsel %vm625, %v593, %v657
      %v690 = vsel %vm626, %v594, %v658
      %691 = vst [vmem:[%s145] sm:$0xff] %v659
      %692 = vst [vmem:[%s145 + $0x8] sm:$0xff] %v660
      %693 = vst [vmem:[%s145 + $0x10] sm:$0xff] %v661
      %694 = vst [vmem:[%s145 + $0x18] sm:$0xff] %v662
      %695 = vst [vmem:[%s145 + $0x20] sm:$0xff] %v663
      %696 = vst [vmem:[%s145 + $0x28] sm:$0xff] %v664
      %697 = vst [vmem:[%s145 + $0x30] sm:$0xff] %v665
      %698 = vst [vmem:[%s145 + $0x38] sm:$0xff] %v666
      %699 = vst [vmem:[%s145 + $0x40] sm:$0xff] %v667
      %700 = vst [vmem:[%s145 + $0x48] sm:$0xff] %v668
      %701 = vst [vmem:[%s145 + $0x50] sm:$0xff] %v669
      %702 = vst [vmem:[%s145 + $0x58] sm:$0xff] %v670
      %703 = vst [vmem:[%s145 + $0x60] sm:$0xff] %v671
      %704 = vst [vmem:[%s145 + $0x68] sm:$0xff] %v672
      %705 = vst [vmem:[%s145 + $0x70] sm:$0xff] %v673
      %706 = vst [vmem:[%s145 + $0x78] sm:$0xff] %v674
      %707 = vst [vmem:[%s145 + $0x80] sm:$0xff] %v675
      %708 = vst [vmem:[%s145 + $0x88] sm:$0xff] %v676
      %709 = vst [vmem:[%s145 + $0x90] sm:$0xff] %v677
      %710 = vst [vmem:[%s145 + $0x98] sm:$0xff] %v678
      %711 = vst [vmem:[%s145 + $0xa0] sm:$0xff] %v679
      %712 = vst [vmem:[%s145 + $0xa8] sm:$0xff] %v680
      %713 = vst [vmem:[%s145 + $0xb0] sm:$0xff] %v681
      %714 = vst [vmem:[%s145 + $0xb8] sm:$0xff] %v682
      %715 = vst [vmem:[%s145 + $0xc0] sm:$0xff] %v683
      %716 = vst [vmem:[%s145 + $0xc8] sm:$0xff] %v684
      %717 = vst [vmem:[%s145 + $0xd0] sm:$0xff] %v685
      %718 = vst [vmem:[%s145 + $0xd8] sm:$0xff] %v686
      %719 = vst [vmem:[%s145 + $0xe0] sm:$0xff] %v687
      %720 = vst [vmem:[%s145 + $0xe8] sm:$0xff] %v688
      %721 = vst [vmem:[%s145 + $0xf0] sm:$0xff] %v689
      %722 = vst [vmem:[%s145 + $0xf8] sm:$0xff] %v690
      %s723 = smul.u32 32, %s13
      %p724 = scmp.lt.s32.totalorder %s723, 63
      %s725 = scalar_select %p724, %s723, 63
      %s726 = smul.addr %s725, 8
      %s727 = scalar_lea.vmem %s2, %s726
      // Predicated region
      $region29: #{nlayer_discriminator_forward.6} parent=27 // pred_check
        %p728 = pneg %p78
      $region30: #{nlayer_discriminator_forward.6} parent=27 // pred_check_branch
        %730 = sbr.rel (%p728) target = $region32
      $region31: #{nlayer_discriminator_forward.6} parent=27 // pred_region
        %s731 = smul.u32 32, %s13
      $region32: #{nlayer_discriminator_forward.6} parent=27 // pred_fallthru
        _
    $region28: #{nlayer_discriminator_forward.6} parent=5 // pred_fallthru
      _
    %p732 = scmp.le.s32.totalorder 2, %s8
    // Predicated region
    $region33: #{nlayer_discriminator_forward.6} parent=5 // pred_check
      %p733 = pneg %p732
    $region34: #{nlayer_discriminator_forward.6} parent=5 // pred_check_branch
      %735 = sbr.rel (%p733) target = $region36
    $region35: #{nlayer_discriminator_forward.6} parent=5 // pred_region
      %s736 = ssub.s32 %s8, 2
      // Predicated region
      $region37: #{nlayer_discriminator_forward.6} parent=35 // pred_check
        %p737 = pneg %p84
      $region38: #{nlayer_discriminator_forward.6} parent=35 // pred_check_branch
        %739 = sbr.rel (%p737) target = $region40
      $region39: #{nlayer_discriminator_forward.6} parent=35 // pred_region
        %s740 = smul.u32 32, %s14
        %p741 = scmp.lt.s32.totalorder %s740, 63
        %s742 = scalar_select %p741, %s740, 63
        %s743 = smul.addr %s742, 8
        %s744 = scalar_lea.vmem %s2, %s743
      $region40: #{nlayer_discriminator_forward.6} parent=35 // pred_fallthru
        _
    $region36: #{nlayer_discriminator_forward.6} parent=5 // pred_fallthru
      _
  $region6: #{nlayer_discriminator_forward.6} parent=0 // loop_footer
    %s12 = sadd.s32 1, %s8
  $region7: #{nlayer_discriminator_forward.6} parent=0 // loop_footer_branch
    %7 = sbr.rel target = $region3
  $region8: #{nlayer_discriminator_forward.6} parent=0 // loop_exit
    _

// kernel: nlayer_discriminator_forward.7
$region0: #{nlayer_discriminator_forward.7}
  #allocation0 [shape = 'u32[]', space=smem, size = 0x4, offset = 0x4, fixed_abs, tag = 'smem constant byte address 0x4 - core index']
  #allocation1 [shape = 'u32[144,128]{1,0:T(1,128)}', space=vmem, size = 0x12000, scoped, tag = 'internal scratch']
  %s0 = inlined_call_operand.vmem [shape: f32[128,512], index: 0, kind: input, shape index: {}]
  %s1 = inlined_call_operand.vmem [shape: f32[512,128], index: 1, kind: input, shape index: {}]
  %s2 = inlined_call_operand.vmem [shape: f32[128,128], index: 2, kind: output, shape index: {}]
  %s3 = sld [smem:[#allocation0]]
  $region41: #{nlayer_discriminator_forward.7} parent=0
    _
  %s5 = ssub.s32 1, %s3
  %s6 = scalar_select 0, %s5, %s3
  loop: start=0, step=1, limit=4
  $region2: #{nlayer_discriminator_forward.7} parent=0 // loop_pre_header
    _
  $region3: #{nlayer_discriminator_forward.7} parent=0 // loop_header
    %s8 = sphi 0, %s12
    %p9 = scmp.ge.s32.totalorder %s8, 4
    %s18 = sphi 0, %s20
    %s21 = sphi 0, %s18
    %s22 = sphi 0, %s21
    %s38 = sphi 0, %s22
    %s42 = sphi 0, %s42
    %s44 = sphi 0, %s42
    %s45 = sphi 0, %s44
    %s59 = sphi 0, %s45
    %s65 = sphi 0, %s67
    %s68 = sphi 0, %s65
    %s69 = sphi 0, %s68
    %s85 = sphi 0, %s69
  $region4: #{nlayer_discriminator_forward.7} parent=0 // loop_header_branch
    %11 = sbr.rel (%p9) target = $region8
  $region5: #{nlayer_discriminator_forward.7} parent=0 // loop_body
    %s13 = ssub.s32 %s8, 1
    %s14 = ssub.s32 %s8, 2
    %s15 = sadd.s32 %s8, 1
    %s16 = ssub.s32 %s8, %s15
    %p17 = scmp.eq.s32.totalorder %s16, 0
    %s19 = sadd.s32 %s18, 1
    %s20 = scalar_select %p17, %s18, %s19
    %p23 = pneg %p17
    %p24 = scmp.eq.s32.totalorder %s8, 1
    %p25 = por %p23, %p24
    %p26 = scmp.ne.s32.totalorder %s18, %s21
    %p27 = scmp.eq.s32.totalorder %s8, 0
    %p28 = por %p26, %p27
    %p29 = scmp.ne.s32.totalorder %s18, %s21
    %p30 = scmp.eq.s32.totalorder %s13, 1
    %p31 = por %p29, %p30
    %p32 = scmp.ne.s32.totalorder %s21, %s22
    %p33 = scmp.eq.s32.totalorder %s13, 0
    %p34 = por %p32, %p33
    %p35 = scmp.ne.s32.totalorder %s21, %s22
    %p36 = scmp.eq.s32.totalorder %s14, 1
    %p37 = por %p35, %p36
    %p39 = scmp.ne.s32.totalorder %s22, %s38
    %p40 = scmp.eq.s32.totalorder %s14, 0
    %p41 = por %p39, %p40
    %s43 = sadd.s32 %s42, 1
    %p46 = scmp.eq.s32.totalorder %s8, 1
    %p47 = scmp.ne.s32.totalorder %s42, %s44
    %p48 = scmp.eq.s32.totalorder %s8, 0
    %p49 = por %p47, %p48
    %p50 = scmp.ne.s32.totalorder %s42, %s44
    %p51 = scmp.eq.s32.totalorder %s13, 1
    %p52 = por %p50, %p51
    %p53 = scmp.ne.s32.totalorder %s44, %s45
    %p54 = scmp.eq.s32.totalorder %s13, 0
    %p55 = por %p53, %p54
    %p56 = scmp.ne.s32.totalorder %s44, %s45
    %p57 = scmp.eq.s32.totalorder %s14, 1
    %p58 = por %p56, %p57
    %p60 = scmp.ne.s32.totalorder %s45, %s59
    %p61 = scmp.eq.s32.totalorder %s14, 0
    %p62 = por %p60, %p61
    %s63 = ssub.s32 %s8, %s15
    %p64 = scmp.eq.s32.totalorder %s63, 0
    %s66 = sadd.s32 %s65, 1
    %s67 = scalar_select %p64, %s65, %s66
    %p70 = pneg %p64
    %p71 = scmp.eq.s32.totalorder %s8, 1
    %p72 = por %p70, %p71
    %p73 = scmp.ne.s32.totalorder %s65, %s68
    %p74 = scmp.eq.s32.totalorder %s8, 0
    %p75 = por %p73, %p74
    %p76 = scmp.ne.s32.totalorder %s65, %s68
    %p77 = scmp.eq.s32.totalorder %s13, 1
    %p78 = por %p76, %p77
    %p79 = scmp.ne.s32.totalorder %s68, %s69
    %p80 = scmp.eq.s32.totalorder %s13, 0
    %p81 = por %p79, %p80
    %p82 = scmp.ne.s32.totalorder %s68, %s69
    %p83 = scmp.eq.s32.totalorder %s14, 1
    %p84 = por %p82, %p83
    %p86 = scmp.ne.s32.totalorder %s69, %s85
    %p87 = scmp.eq.s32.totalorder %s14, 0
    %p88 = por %p86, %p87
    %p89 = scmp.le.s32.totalorder 1, %s8
    %p90 = scmp.lt.s32.totalorder %s8, 3
    %p91 = pnand %p89, %p90
    %p92 = pneg %p91
    // Predicated region
    $region9: #{nlayer_discriminator_forward.7} parent=5 // pred_check
      _
    $region10: #{nlayer_discriminator_forward.7} parent=5 // pred_check_branch
      %94 = sbr.rel (%p91) target = $region12
    $region11: #{nlayer_discriminator_forward.7} parent=5 // pred_region
      %s95 = ssub.s32 %s8, 1
      // Predicated region
      $region13: #{nlayer_discriminator_forward.7} parent=11 // pred_check
        %p96 = pneg %p55
      $region14: #{nlayer_discriminator_forward.7} parent=11 // pred_check_branch
        %98 = sbr.rel (%p96) target = $region16
      $region15: #{nlayer_discriminator_forward.7} parent=11 // pred_region
        _
      $region16: #{nlayer_discriminator_forward.7} parent=11 // pred_fallthru
        _
    $region12: #{nlayer_discriminator_forward.7} parent=5 // pred_fallthru
      _
    %p99 = scmp.lt.s32.totalorder %s8, 2
    // Predicated region
    $region17: #{nlayer_discriminator_forward.7} parent=5 // pred_check
      %p100 = pneg %p99
    $region18: #{nlayer_discriminator_forward.7} parent=5 // pred_check_branch
      %102 = sbr.rel (%p100) target = $region20
    $region19: #{nlayer_discriminator_forward.7} parent=5 // pred_region
      // Predicated region
      $region21: #{nlayer_discriminator_forward.7} parent=19 // pred_check
        %p103 = pneg %p28
      $region22: #{nlayer_discriminator_forward.7} parent=19 // pred_check_branch
        %105 = sbr.rel (%p103) target = $region24
      $region23: #{nlayer_discriminator_forward.7} parent=19 // pred_region
        %s106 = smul.u32 8, %s8
        %p107 = scmp.lt.s32.totalorder %s106, 15
        %s108 = scalar_select %p107, %s106, 15
        %s109 = smul.addr %s108, 4
        %s110 = smul.addr %s109, 8
        %s111 = scalar_lea.vmem %s0, %s110
        %s112 = smul.u32 8, %s8
      $region24: #{nlayer_discriminator_forward.7} parent=19 // pred_fallthru
        _
    $region20: #{nlayer_discriminator_forward.7} parent=5 // pred_fallthru
      _
    %p113 = scmp.le.s32.totalorder 1, %s8
    %p114 = scmp.lt.s32.totalorder %s8, 3
    %p115 = pnand %p113, %p114
    %p116 = pneg %p115
    // Predicated region
    $region25: #{nlayer_discriminator_forward.7} parent=5 // pred_check
      _
    $region26: #{nlayer_discriminator_forward.7} parent=5 // pred_check_branch
      %118 = sbr.rel (%p115) target = $region28
    $region27: #{nlayer_discriminator_forward.7} parent=5 // pred_region
      %s119 = ssub.s32 %s8, 1
      %s120 = smul.u32 8, %s13
      %p121 = scmp.lt.s32.totalorder %s120, 15
      %s122 = scalar_select %p121, %s120, 15
      %s123 = smul.addr %s122, 4
      %s124 = smul.addr %s123, 8
      %s125 = scalar_lea.vmem %s0, %s124
      %p126 = pneg %p34
      %p127 = pneg %p31
      %p128 = pneg %p55
      %p129 = pneg %p52
      %p130 = pneg %p81
      %p131 = pneg %p78
      %s132 = smul.u32 8, %s13
      %p133 = scmp.lt.s32.totalorder %s132, 15
      %s134 = scalar_select %p133, %s132, 15
      %s135 = smul.addr %s134, 8
      %s136 = scalar_lea.vmem %s2, %s135
      %s137 = smul.u32 8, %s13
      %p138 = scmp.lt.s32.totalorder %s137, 15
      %s139 = scalar_select %p138, %s137, 15
      %s140 = smul.addr %s139, 4
      %s141 = smul.addr %s140, 8
      %s142 = scalar_lea.vmem %s0, %s141
      %s143 = smul.u32 8, %s13
      %s144 = smul.u32 8, %s13
      %p145 = scmp.lt.s32.totalorder %s144, 15
      %s146 = scalar_select %p145, %s144, 15
      %s147 = smul.addr %s146, 8
      %s148 = scalar_lea.vmem %s2, %s147
      %s149 = smul.u32 8, %s13
      %v150 = vld [vmem:[%s142] sm:$0xff]
      %v151 = vld [vmem:[%s142 + $0x8] sm:$0xff]
      %v152 = vld [vmem:[%s142 + $0x10] sm:$0xff]
      %v153 = vld [vmem:[%s142 + $0x18] sm:$0xff]
      %v154 = vld [vmem:[%s142 + $0x20] sm:$0xff]
      %v155 = vld [vmem:[%s142 + $0x28] sm:$0xff]
      %v156 = vld [vmem:[%s142 + $0x30] sm:$0xff]
      %v157 = vld [vmem:[%s142 + $0x38] sm:$0xff]
      %v158 = vld [vmem:[%s142 + $0x40] sm:$0xff]
      %v159 = vld [vmem:[%s142 + $0x48] sm:$0xff]
      %v160 = vld [vmem:[%s142 + $0x50] sm:$0xff]
      %v161 = vld [vmem:[%s142 + $0x58] sm:$0xff]
      %v162 = vld [vmem:[%s142 + $0x60] sm:$0xff]
      %v163 = vld [vmem:[%s142 + $0x68] sm:$0xff]
      %v164 = vld [vmem:[%s142 + $0x70] sm:$0xff]
      %v165 = vld [vmem:[%s142 + $0x78] sm:$0xff]
      %v166 = vld [vmem:[%s142 + $0x80] sm:$0xff]
      %v167 = vld [vmem:[%s142 + $0x88] sm:$0xff]
      %v168 = vld [vmem:[%s142 + $0x90] sm:$0xff]
      %v169 = vld [vmem:[%s142 + $0x98] sm:$0xff]
      %v170 = vld [vmem:[%s142 + $0xa0] sm:$0xff]
      %v171 = vld [vmem:[%s142 + $0xa8] sm:$0xff]
      %v172 = vld [vmem:[%s142 + $0xb0] sm:$0xff]
      %v173 = vld [vmem:[%s142 + $0xb8] sm:$0xff]
      %v174 = vld [vmem:[%s142 + $0xc0] sm:$0xff]
      %v175 = vld [vmem:[%s142 + $0xc8] sm:$0xff]
      %v176 = vld [vmem:[%s142 + $0xd0] sm:$0xff]
      %v177 = vld [vmem:[%s142 + $0xd8] sm:$0xff]
      %v178 = vld [vmem:[%s142 + $0xe0] sm:$0xff]
      %v179 = vld [vmem:[%s142 + $0xe8] sm:$0xff]
      %v180 = vld [vmem:[%s142 + $0xf0] sm:$0xff]
      %v181 = vld [vmem:[%s142 + $0xf8] sm:$0xff]
      %v182 = vld [vmem:[%s1] sm:$0xff]
      %v183 = vld [vmem:[%s1 + $0x8] sm:$0xff]
      %v184 = vld [vmem:[%s1 + $0x10] sm:$0xff]
      %v185 = vld [vmem:[%s1 + $0x18] sm:$0xff]
      %v186 = vld [vmem:[%s1 + $0x20] sm:$0xff]
      %v187 = vld [vmem:[%s1 + $0x28] sm:$0xff]
      %v188 = vld [vmem:[%s1 + $0x30] sm:$0xff]
      %v189 = vld [vmem:[%s1 + $0x38] sm:$0xff]
      %v190 = vld [vmem:[%s1 + $0x40] sm:$0xff]
      %v191 = vld [vmem:[%s1 + $0x48] sm:$0xff]
      %v192 = vld [vmem:[%s1 + $0x50] sm:$0xff]
      %v193 = vld [vmem:[%s1 + $0x58] sm:$0xff]
      %v194 = vld [vmem:[%s1 + $0x60] sm:$0xff]
      %v195 = vld [vmem:[%s1 + $0x68] sm:$0xff]
      %v196 = vld [vmem:[%s1 + $0x70] sm:$0xff]
      %v197 = vld [vmem:[%s1 + $0x78] sm:$0xff]
      %v198 = vld [vmem:[%s1 + $0x80] sm:$0xff]
      %v199 = vld [vmem:[%s1 + $0x88] sm:$0xff]
      %v200 = vld [vmem:[%s1 + $0x90] sm:$0xff]
      %v201 = vld [vmem:[%s1 + $0x98] sm:$0xff]
      %v202 = vld [vmem:[%s1 + $0xa0] sm:$0xff]
      %v203 = vld [vmem:[%s1 + $0xa8] sm:$0xff]
      %v204 = vld [vmem:[%s1 + $0xb0] sm:$0xff]
      %v205 = vld [vmem:[%s1 + $0xb8] sm:$0xff]
      %v206 = vld [vmem:[%s1 + $0xc0] sm:$0xff]
      %v207 = vld [vmem:[%s1 + $0xc8] sm:$0xff]
      %v208 = vld [vmem:[%s1 + $0xd0] sm:$0xff]
      %v209 = vld [vmem:[%s1 + $0xd8] sm:$0xff]
      %v210 = vld [vmem:[%s1 + $0xe0] sm:$0xff]
      %v211 = vld [vmem:[%s1 + $0xe8] sm:$0xff]
      %v212 = vld [vmem:[%s1 + $0xf0] sm:$0xff]
      %v213 = vld [vmem:[%s1 + $0xf8] sm:$0xff]
      %v214 = vld [vmem:[%s1 + $0x100] sm:$0xff]
      %v215 = vld [vmem:[%s1 + $0x108] sm:$0xff]
      %v216 = vld [vmem:[%s1 + $0x110] sm:$0xff]
      %v217 = vld [vmem:[%s1 + $0x118] sm:$0xff]
      %v218 = vld [vmem:[%s1 + $0x120] sm:$0xff]
      %v219 = vld [vmem:[%s1 + $0x128] sm:$0xff]
      %v220 = vld [vmem:[%s1 + $0x130] sm:$0xff]
      %v221 = vld [vmem:[%s1 + $0x138] sm:$0xff]
      %v222 = vld [vmem:[%s1 + $0x140] sm:$0xff]
      %v223 = vld [vmem:[%s1 + $0x148] sm:$0xff]
      %v224 = vld [vmem:[%s1 + $0x150] sm:$0xff]
      %v225 = vld [vmem:[%s1 + $0x158] sm:$0xff]
      %v226 = vld [vmem:[%s1 + $0x160] sm:$0xff]
      %v227 = vld [vmem:[%s1 + $0x168] sm:$0xff]
      %v228 = vld [vmem:[%s1 + $0x170] sm:$0xff]
      %v229 = vld [vmem:[%s1 + $0x178] sm:$0xff]
      %v230 = vld [vmem:[%s1 + $0x180] sm:$0xff]
      %v231 = vld [vmem:[%s1 + $0x188] sm:$0xff]
      %v232 = vld [vmem:[%s1 + $0x190] sm:$0xff]
      %v233 = vld [vmem:[%s1 + $0x198] sm:$0xff]
      %v234 = vld [vmem:[%s1 + $0x1a0] sm:$0xff]
      %v235 = vld [vmem:[%s1 + $0x1a8] sm:$0xff]
      %v236 = vld [vmem:[%s1 + $0x1b0] sm:$0xff]
      %v237 = vld [vmem:[%s1 + $0x1b8] sm:$0xff]
      %v238 = vld [vmem:[%s1 + $0x1c0] sm:$0xff]
      %v239 = vld [vmem:[%s1 + $0x1c8] sm:$0xff]
      %v240 = vld [vmem:[%s1 + $0x1d0] sm:$0xff]
      %v241 = vld [vmem:[%s1 + $0x1d8] sm:$0xff]
      %v242 = vld [vmem:[%s1 + $0x1e0] sm:$0xff]
      %v243 = vld [vmem:[%s1 + $0x1e8] sm:$0xff]
      %v244 = vld [vmem:[%s1 + $0x1f0] sm:$0xff]
      %v245 = vld [vmem:[%s1 + $0x1f8] sm:$0xff]
      %246 = vmatprep.subr.mxu0 0.0
      %247 = vmatpush1.msra.mxu0 %v182
      %248 = vmatprep.subr.mxu0 0.0
      %249 = vmatpush1.msra.mxu0 %v183
      %250 = vmatprep.subr.mxu0 0.0
      %251 = vmatpush1.msra.mxu0 %v184
      %252 = vmatprep.subr.mxu0 0.0
      %253 = vmatpush1.msra.mxu0 %v185
      %254 = vmatprep.subr.mxu0 0.0
      %255 = vmatpush1.msra.mxu0 %v186
      %256 = vmatprep.subr.mxu0 0.0
      %257 = vmatpush1.msra.mxu0 %v187
      %258 = vmatprep.subr.mxu0 0.0
      %259 = vmatpush1.msra.mxu0 %v188
      %260 = vmatprep.subr.mxu0 0.0
      %261 = vmatpush1.msra.mxu0 %v189
      %262 = vmatprep.subr.mxu0 0.0
      %263 = vmatpush1.msra.mxu0 %v190
      %264 = vmatprep.subr.mxu0 0.0
      %265 = vmatpush1.msra.mxu0 %v191
      %266 = vmatprep.subr.mxu0 0.0
      %267 = vmatpush1.msra.mxu0 %v192
      %268 = vmatprep.subr.mxu0 0.0
      %269 = vmatpush1.msra.mxu0 %v193
      %270 = vmatprep.subr.mxu0 0.0
      %271 = vmatpush1.msra.mxu0 %v194
      %272 = vmatprep.subr.mxu0 0.0
      %273 = vmatpush1.msra.mxu0 %v195
      %274 = vmatprep.subr.mxu0 0.0
      %275 = vmatpush1.msra.mxu0 %v196
      %276 = vmatprep.subr.mxu0 0.0
      %277 = vmatpush1.msra.mxu0 %v197
      %278 = vmatprep.subr.mxu0 0.0
      %279 = vmatpush1.msra.mxu0 %v198
      %280 = vmatprep.subr.mxu0 0.0
      %281 = vmatpush1.msra.mxu0 %v199
      %282 = vmatprep.subr.mxu0 0.0
      %283 = vmatpush1.msra.mxu0 %v200
      %284 = vmatprep.subr.mxu0 0.0
      %285 = vmatpush1.msra.mxu0 %v201
      %286 = vmatprep.subr.mxu0 0.0
      %287 = vmatpush1.msra.mxu0 %v202
      %288 = vmatprep.subr.mxu0 0.0
      %289 = vmatpush1.msra.mxu0 %v203
      %290 = vmatprep.subr.mxu0 0.0
      %291 = vmatpush1.msra.mxu0 %v204
      %292 = vmatprep.subr.mxu0 0.0
      %293 = vmatpush1.msra.mxu0 %v205
      %294 = vmatprep.subr.mxu0 0.0
      %295 = vmatpush1.msra.mxu0 %v206
      %296 = vmatprep.subr.mxu0 0.0
      %297 = vmatpush1.msra.mxu0 %v207
      %298 = vmatprep.subr.mxu0 0.0
      %299 = vmatpush1.msra.mxu0 %v208
      %300 = vmatprep.subr.mxu0 0.0
      %301 = vmatpush1.msra.mxu0 %v209
      %302 = vmatprep.subr.mxu0 0.0
      %303 = vmatpush1.msra.mxu0 %v210
      %304 = vmatprep.subr.mxu0 0.0
      %305 = vmatpush1.msra.mxu0 %v211
      %306 = vmatprep.subr.mxu0 0.0
      %307 = vmatpush1.msra.mxu0 %v212
      %308 = vmatprep.subr.mxu0 0.0
      %309 = vmatpush1.msra.mxu0 %v213
      %310 = vmatprep.mubr.f32.mxu0 %v151
      %311 = vmatmul.mubr.f32.gmra.mrb[0].mxu0 %v150
      %v312 = vpop.f32.mrb[0].mxu0
      %v313 = vadd.f32 0.0, %v312
      %v314 = vpop.f32.mrb[0].mxu0
      %315 = vmatprep.mubr.f32.mxu0 %v155
      %316 = vmatmul.mubr.f32.gmra.mrb[0].mxu0 %v154
      %v317 = vpop.f32.mrb[0].mxu0
      %v318 = vadd.f32 0.0, %v317
      %v319 = vpop.f32.mrb[0].mxu0
      %320 = vmatprep.mubr.f32.mxu0 %v159
      %321 = vmatmul.mubr.f32.gmra.mrb[0].mxu0 %v158
      %v322 = vpop.f32.mrb[0].mxu0
      %v323 = vadd.f32 0.0, %v322
      %v324 = vpop.f32.mrb[0].mxu0
      %325 = vmatprep.mubr.f32.mxu0 %v163
      %326 = vmatmul.mubr.f32.gmra.mrb[0].mxu0 %v162
      %v327 = vpop.f32.mrb[0].mxu0
      %v328 = vadd.f32 0.0, %v327
      %v329 = vpop.f32.mrb[0].mxu0
      %330 = vmatprep.mubr.f32.mxu0 %v167
      %331 = vmatmul.mubr.f32.gmra.mrb[0].mxu0 %v166
      %v332 = vpop.f32.mrb[0].mxu0
      %v333 = vadd.f32 0.0, %v332
      %v334 = vpop.f32.mrb[0].mxu0
      %335 = vmatprep.mubr.f32.mxu0 %v171
      %336 = vmatmul.mubr.f32.gmra.mrb[0].mxu0 %v170
      %v337 = vpop.f32.mrb[0].mxu0
      %v338 = vadd.f32 0.0, %v337
      %v339 = vpop.f32.mrb[0].mxu0
      %340 = vmatprep.mubr.f32.mxu0 %v175
      %341 = vmatmul.mubr.f32.gmra.mrb[0].mxu0 %v174
      %v342 = vpop.f32.mrb[0].mxu0
      %v343 = vadd.f32 0.0, %v342
      %v344 = vpop.f32.mrb[0].mxu0
      %345 = vmatprep.mubr.f32.mxu0 %v179
      %346 = vmatmul.mubr.f32.gmra.mrb[0].mxu0 %v178
      %v347 = vpop.f32.mrb[0].mxu0
      %v348 = vadd.f32 0.0, %v347
      %v349 = vpop.f32.mrb[0].mxu0
      %350 = vdwg.mxu0
      %351 = vmatprep.subr.mxu0 0.0
      %352 = vmatpush1.msra.mxu0 %v214
      %353 = vmatprep.subr.mxu0 0.0
      %354 = vmatpush1.msra.mxu0 %v215
      %355 = vmatprep.subr.mxu0 0.0
      %356 = vmatpush1.msra.mxu0 %v216
      %357 = vmatprep.subr.mxu0 0.0
      %358 = vmatpush1.msra.mxu0 %v217
      %359 = vmatprep.subr.mxu0 0.0
      %360 = vmatpush1.msra.mxu0 %v218
      %361 = vmatprep.subr.mxu0 0.0
      %362 = vmatpush1.msra.mxu0 %v219
      %363 = vmatprep.subr.mxu0 0.0
      %364 = vmatpush1.msra.mxu0 %v220
      %365 = vmatprep.subr.mxu0 0.0
      %366 = vmatpush1.msra.mxu0 %v221
      %367 = vmatprep.subr.mxu0 0.0
      %368 = vmatpush1.msra.mxu0 %v222
      %369 = vmatprep.subr.mxu0 0.0
      %370 = vmatpush1.msra.mxu0 %v223
      %371 = vmatprep.subr.mxu0 0.0
      %372 = vmatpush1.msra.mxu0 %v224
      %373 = vmatprep.subr.mxu0 0.0
      %374 = vmatpush1.msra.mxu0 %v225
      %375 = vmatprep.subr.mxu0 0.0
      %376 = vmatpush1.msra.mxu0 %v226
      %377 = vmatprep.subr.mxu0 0.0
      %378 = vmatpush1.msra.mxu0 %v227
      %379 = vmatprep.subr.mxu0 0.0
      %380 = vmatpush1.msra.mxu0 %v228
      %381 = vmatprep.subr.mxu0 0.0
      %382 = vmatpush1.msra.mxu0 %v229
      %383 = vmatprep.subr.mxu0 0.0
      %384 = vmatpush1.msra.mxu0 %v230
      %385 = vmatprep.subr.mxu0 0.0
      %386 = vmatpush1.msra.mxu0 %v231
      %387 = vmatprep.subr.mxu0 0.0
      %388 = vmatpush1.msra.mxu0 %v232
      %389 = vmatprep.subr.mxu0 0.0
      %390 = vmatpush1.msra.mxu0 %v233
      %391 = vmatprep.subr.mxu0 0.0
      %392 = vmatpush1.msra.mxu0 %v234
      %393 = vmatprep.subr.mxu0 0.0
      %394 = vmatpush1.msra.mxu0 %v235
      %395 = vmatprep.subr.mxu0 0.0
      %396 = vmatpush1.msra.mxu0 %v236
      %397 = vmatprep.subr.mxu0 0.0
      %398 = vmatpush1.msra.mxu0 %v237
      %399 = vmatprep.subr.mxu0 0.0
      %400 = vmatpush1.msra.mxu0 %v238
      %401 = vmatprep.subr.mxu0 0.0
      %402 = vmatpush1.msra.mxu0 %v239
      %403 = vmatprep.subr.mxu0 0.0
      %404 = vmatpush1.msra.mxu0 %v240
      %405 = vmatprep.subr.mxu0 0.0
      %406 = vmatpush1.msra.mxu0 %v241
      %407 = vmatprep.subr.mxu0 0.0
      %408 = vmatpush1.msra.mxu0 %v242
      %409 = vmatprep.subr.mxu0 0.0
      %410 = vmatpush1.msra.mxu0 %v243
      %411 = vmatprep.subr.mxu0 0.0
      %412 = vmatpush1.msra.mxu0 %v244
      %413 = vmatprep.subr.mxu0 0.0
      %414 = vmatpush1.msra.mxu0 %v245
      %415 = vmatprep.mubr.f32.mxu0 %v153
      %416 = vmatmul.mubr.f32.gmra.mrb[0].mxu0 %v152
      %v417 = vpop.f32.mrb[0].mxu0
      %v418 = vadd.f32 %v313, %v417
      %v419 = vpop.f32.mrb[0].mxu0
      %420 = vmatprep.mubr.f32.mxu0 %v157
      %421 = vmatmul.mubr.f32.gmra.mrb[0].mxu0 %v156
      %v422 = vpop.f32.mrb[0].mxu0
      %v423 = vadd.f32 %v318, %v422
      %v424 = vpop.f32.mrb[0].mxu0
      %425 = vmatprep.mubr.f32.mxu0 %v161
      %426 = vmatmul.mubr.f32.gmra.mrb[0].mxu0 %v160
      %v427 = vpop.f32.mrb[0].mxu0
      %v428 = vadd.f32 %v323, %v427
      %v429 = vpop.f32.mrb[0].mxu0
      %430 = vmatprep.mubr.f32.mxu0 %v165
      %431 = vmatmul.mubr.f32.gmra.mrb[0].mxu0 %v164
      %v432 = vpop.f32.mrb[0].mxu0
      %v433 = vadd.f32 %v328, %v432
      %v434 = vpop.f32.mrb[0].mxu0
      %435 = vmatprep.mubr.f32.mxu0 %v169
      %436 = vmatmul.mubr.f32.gmra.mrb[0].mxu0 %v168
      %v437 = vpop.f32.mrb[0].mxu0
      %v438 = vadd.f32 %v333, %v437
      %v439 = vpop.f32.mrb[0].mxu0
      %440 = vmatprep.mubr.f32.mxu0 %v173
      %441 = vmatmul.mubr.f32.gmra.mrb[0].mxu0 %v172
      %v442 = vpop.f32.mrb[0].mxu0
      %v443 = vadd.f32 %v338, %v442
      %v444 = vpop.f32.mrb[0].mxu0
      %445 = vmatprep.mubr.f32.mxu0 %v177
      %446 = vmatmul.mubr.f32.gmra.mrb[0].mxu0 %v176
      %v447 = vpop.f32.mrb[0].mxu0
      %v448 = vadd.f32 %v343, %v447
      %v449 = vpop.f32.mrb[0].mxu0
      %450 = vmatprep.mubr.f32.mxu0 %v181
      %451 = vmatmul.mubr.f32.gmra.mrb[0].mxu0 %v180
      %v452 = vpop.f32.mrb[0].mxu0
      %v453 = vadd.f32 %v348, %v452
      %v454 = vpop.f32.mrb[0].mxu0
      %455 = vdwg.mxu0
      %v456 = vadd.f32 %v418, %v423
      %v457 = vadd.f32 %v456, %v428
      %v458 = vadd.f32 %v457, %v433
      %v459 = vadd.f32 %v458, %v438
      %v460 = vadd.f32 %v459, %v443
      %v461 = vadd.f32 %v460, %v448
      %v462 = vadd.f32 %v461, %v453
      %v463 = vrot.slane %v462, 4
      %v464 = vadd.f32 %v462, %v463
      %v465 = vrot.slane %v464, 2
      %v466 = vadd.f32 %v464, %v465
      %v467 = vrot.slane %v466, 1
      %v468 = vadd.f32 %v466, %v467
      %v469 = vrcp.pop 64.0
      %v470 = vmul.f32 %v468, %v469
      %v471 = vsub.f32 %v418, %v470
      %v472 = vsub.f32 %v423, %v470
      %v473 = vsub.f32 %v428, %v470
      %v474 = vsub.f32 %v433, %v470
      %v475 = vsub.f32 %v438, %v470
      %v476 = vsub.f32 %v443, %v470
      %v477 = vsub.f32 %v448, %v470
      %v478 = vsub.f32 %v453, %v470
      %v479 = vmul.f32 %v471, %v471
      %v480 = vmul.f32 %v472, %v472
      %v481 = vmul.f32 %v473, %v473
      %v482 = vmul.f32 %v474, %v474
      %v483 = vmul.f32 %v475, %v475
      %v484 = vmul.f32 %v476, %v476
      %v485 = vmul.f32 %v477, %v477
      %v486 = vmul.f32 %v478, %v478
      %v487 = vadd.f32 %v479, %v480
      %v488 = vadd.f32 %v487, %v481
      %v489 = vadd.f32 %v488, %v482
      %v490 = vadd.f32 %v489, %v483
      %v491 = vadd.f32 %v490, %v484
      %v492 = vadd.f32 %v491, %v485
      %v493 = vadd.f32 %v492, %v486
      %v494 = vrot.slane %v493, 4
      %v495 = vadd.f32 %v493, %v494
      %v496 = vrot.slane %v495, 2
      %v497 = vadd.f32 %v495, %v496
      %v498 = vrot.slane %v497, 1
      %v499 = vadd.f32 %v497, %v498
      %v500 = vmul.f32 %v499, %v469
      %v501 = vadd.f32 %v500, 1e-05
      %v502 = vrsqrt.pop %v501
      %v503 = vmul.f32 %v471, %v502
      %v504 = vmul.f32 %v472, %v502
      %v505 = vmul.f32 %v473, %v502
      %v506 = vmul.f32 %v474, %v502
      %v507 = vmul.f32 %v475, %v502
      %v508 = vmul.f32 %v476, %v502
      %v509 = vmul.f32 %v477, %v502
      %v510 = vmul.f32 %v478, %v502
      %vm511 = vcmp.ge.f32.partialorder %v503, 0.0
      %vm512 = vcmp.ge.f32.partialorder %v504, 0.0
      %vm513 = vcmp.ge.f32.partialorder %v505, 0.0
      %vm514 = vcmp.ge.f32.partialorder %v506, 0.0
      %vm515 = vcmp.ge.f32.partialorder %v507, 0.0
      %vm516 = vcmp.ge.f32.partialorder %v508, 0.0
      %vm517 = vcmp.ge.f32.partialorder %v509, 0.0
      %vm518 = vcmp.ge.f32.partialorder %v510, 0.0
      %v519 = vmul.f32 %v503, 0.2
      %v520 = vmul.f32 %v504, 0.2
      %v521 = vmul.f32 %v505, 0.2
      %v522 = vmul.f32 %v506, 0.2
      %v523 = vmul.f32 %v507, 0.2
      %v524 = vmul.f32 %v508, 0.2
      %v525 = vmul.f32 %v509, 0.2
      %v526 = vmul.f32 %v510, 0.2
      %v527 = vsel %vm511, %v503, %v519
      %v528 = vsel %vm512, %v504, %v520
      %v529 = vsel %vm513, %v505, %v521
      %v530 = vsel %vm514, %v506, %v522
      %v531 = vsel %vm515, %v507, %v523
      %v532 = vsel %vm516, %v508, %v524
      %v533 = vsel %vm517, %v509, %v525
      %v534 = vsel %vm518, %v510, %v526
      %535 = vst [vmem:[%s148] sm:$0xff] %v527
      %536 = vst [vmem:[%s148 + $0x8] sm:$0xff] %v528
      %537 = vst [vmem:[%s148 + $0x10] sm:$0xff] %v529
      %538 = vst [vmem:[%s148 + $0x18] sm:$0xff] %v530
      %539 = vst [vmem:[%s148 + $0x20] sm:$0xff] %v531
      %540 = vst [vmem:[%s148 + $0x28] sm:$0xff] %v532
      %541 = vst [vmem:[%s148 + $0x30] sm:$0xff] %v533
      %542 = vst [vmem:[%s148 + $0x38] sm:$0xff] %v534
      %s543 = smul.u32 8, %s13
      %p544 = scmp.lt.s32.totalorder %s543, 15
      %s545 = scalar_select %p544, %s543, 15
      %s546 = smul.addr %s545, 8
      %s547 = scalar_lea.vmem %s2, %s546
      // Predicated region
      $region29: #{nlayer_discriminator_forward.7} parent=27 // pred_check
        %p548 = pneg %p78
      $region30: #{nlayer_discriminator_forward.7} parent=27 // pred_check_branch
        %550 = sbr.rel (%p548) target = $region32
      $region31: #{nlayer_discriminator_forward.7} parent=27 // pred_region
        %s551 = smul.u32 8, %s13
      $region32: #{nlayer_discriminator_forward.7} parent=27 // pred_fallthru
        _
    $region28: #{nlayer_discriminator_forward.7} parent=5 // pred_fallthru
      _
    %p552 = scmp.le.s32.totalorder 2, %s8
    // Predicated region
    $region33: #{nlayer_discriminator_forward.7} parent=5 // pred_check
      %p553 = pneg %p552
    $region34: #{nlayer_discriminator_forward.7} parent=5 // pred_check_branch
      %555 = sbr.rel (%p553) target = $region36
    $region35: #{nlayer_discriminator_forward.7} parent=5 // pred_region
      %s556 = ssub.s32 %s8, 2
      // Predicated region
      $region37: #{nlayer_discriminator_forward.7} parent=35 // pred_check
        %p557 = pneg %p84
      $region38: #{nlayer_discriminator_forward.7} parent=35 // pred_check_branch
        %559 = sbr.rel (%p557) target = $region40
      $region39: #{nlayer_discriminator_forward.7} parent=35 // pred_region
        %s560 = smul.u32 8, %s14
        %p561 = scmp.lt.s32.totalorder %s560, 15
        %s562 = scalar_select %p561, %s560, 15
        %s563 = smul.addr %s562, 8
        %s564 = scalar_lea.vmem %s2, %s563
      $region40: #{nlayer_discriminator_forward.7} parent=35 // pred_fallthru
        _
    $region36: #{nlayer_discriminator_forward.7} parent=5 // pred_fallthru
      _
  $region6: #{nlayer_discriminator_forward.7} parent=0 // loop_footer
    %s12 = sadd.s32 1, %s8
  $region7: #{nlayer_discriminator_forward.7} parent=0 // loop_footer_branch
    %7 = sbr.rel target = $region3
  $region8: #{nlayer_discriminator_forward.7} parent=0 // loop_exit
    _

// kernel: nlayer_discriminator_forward.8
$region0: #{nlayer_discriminator_forward.8}
  #allocation0 [shape = 'u32[]', space=smem, size = 0x4, offset = 0x4, fixed_abs, tag = 'smem constant byte address 0x4 - core index']
  #allocation1 [shape = 'u32[144,128]{1,0:T(1,128)}', space=vmem, size = 0x12000, scoped, tag = 'internal scratch']
  %s0 = inlined_call_operand.vmem [shape: f32[32,1024], index: 0, kind: input, shape index: {}]
  %s1 = inlined_call_operand.vmem [shape: f32[1024,128], index: 1, kind: input, shape index: {}]
  %s2 = inlined_call_operand.vmem [shape: f32[32,128], index: 2, kind: output, shape index: {}]
  %s3 = sld [smem:[#allocation0]]
  $region41: #{nlayer_discriminator_forward.8} parent=0
    _
  %s5 = ssub.s32 1, %s3
  %s6 = scalar_select 0, %s5, %s3
  loop: start=0, step=1, limit=4
  $region2: #{nlayer_discriminator_forward.8} parent=0 // loop_pre_header
    _
  $region3: #{nlayer_discriminator_forward.8} parent=0 // loop_header
    %s8 = sphi 0, %s12
    %p9 = scmp.ge.s32.totalorder %s8, 4
    %s18 = sphi 0, %s20
    %s21 = sphi 0, %s18
    %s22 = sphi 0, %s21
    %s38 = sphi 0, %s22
    %s42 = sphi 0, %s42
    %s44 = sphi 0, %s42
    %s45 = sphi 0, %s44
    %s59 = sphi 0, %s45
    %s65 = sphi 0, %s67
    %s68 = sphi 0, %s65
    %s69 = sphi 0, %s68
    %s85 = sphi 0, %s69
  $region4: #{nlayer_discriminator_forward.8} parent=0 // loop_header_branch
    %11 = sbr.rel (%p9) target = $region8
  $region5: #{nlayer_discriminator_forward.8} parent=0 // loop_body
    %s13 = ssub.s32 %s8, 1
    %s14 = ssub.s32 %s8, 2
    %s15 = sadd.s32 %s8, 1
    %s16 = ssub.s32 %s8, %s15
    %p17 = scmp.eq.s32.totalorder %s16, 0
    %s19 = sadd.s32 %s18, 1
    %s20 = scalar_select %p17, %s18, %s19
    %p23 = pneg %p17
    %p24 = scmp.eq.s32.totalorder %s8, 1
    %p25 = por %p23, %p24
    %p26 = scmp.ne.s32.totalorder %s18, %s21
    %p27 = scmp.eq.s32.totalorder %s8, 0
    %p28 = por %p26, %p27
    %p29 = scmp.ne.s32.totalorder %s18, %s21
    %p30 = scmp.eq.s32.totalorder %s13, 1
    %p31 = por %p29, %p30
    %p32 = scmp.ne.s32.totalorder %s21, %s22
    %p33 = scmp.eq.s32.totalorder %s13, 0
    %p34 = por %p32, %p33
    %p35 = scmp.ne.s32.totalorder %s21, %s22
    %p36 = scmp.eq.s32.totalorder %s14, 1
    %p37 = por %p35, %p36
    %p39 = scmp.ne.s32.totalorder %s22, %s38
    %p40 = scmp.eq.s32.totalorder %s14, 0
    %p41 = por %p39, %p40
    %s43 = sadd.s32 %s42, 1
    %p46 = scmp.eq.s32.totalorder %s8, 1
    %p47 = scmp.ne.s32.totalorder %s42, %s44
    %p48 = scmp.eq.s32.totalorder %s8, 0
    %p49 = por %p47, %p48
    %p50 = scmp.ne.s32.totalorder %s42, %s44
    %p51 = scmp.eq.s32.totalorder %s13, 1
    %p52 = por %p50, %p51
    %p53 = scmp.ne.s32.totalorder %s44, %s45
    %p54 = scmp.eq.s32.totalorder %s13, 0
    %p55 = por %p53, %p54
    %p56 = scmp.ne.s32.totalorder %s44, %s45
    %p57 = scmp.eq.s32.totalorder %s14, 1
    %p58 = por %p56, %p57
    %p60 = scmp.ne.s32.totalorder %s45, %s59
    %p61 = scmp.eq.s32.totalorder %s14, 0
    %p62 = por %p60, %p61
    %s63 = ssub.s32 %s8, %s15
    %p64 = scmp.eq.s32.totalorder %s63, 0
    %s66 = sadd.s32 %s65, 1
    %s67 = scalar_select %p64, %s65, %s66
    %p70 = pneg %p64
    %p71 = scmp.eq.s32.totalorder %s8, 1
    %p72 = por %p70, %p71
    %p73 = scmp.ne.s32.totalorder %s65, %s68
    %p74 = scmp.eq.s32.totalorder %s8, 0
    %p75 = por %p73, %p74
    %p76 = scmp.ne.s32.totalorder %s65, %s68
    %p77 = scmp.eq.s32.totalorder %s13, 1
    %p78 = por %p76, %p77
    %p79 = scmp.ne.s32.totalorder %s68, %s69
    %p80 = scmp.eq.s32.totalorder %s13, 0
    %p81 = por %p79, %p80
    %p82 = scmp.ne.s32.totalorder %s68, %s69
    %p83 = scmp.eq.s32.totalorder %s14, 1
    %p84 = por %p82, %p83
    %p86 = scmp.ne.s32.totalorder %s69, %s85
    %p87 = scmp.eq.s32.totalorder %s14, 0
    %p88 = por %p86, %p87
    %p89 = scmp.le.s32.totalorder 1, %s8
    %p90 = scmp.lt.s32.totalorder %s8, 3
    %p91 = pnand %p89, %p90
    %p92 = pneg %p91
    // Predicated region
    $region9: #{nlayer_discriminator_forward.8} parent=5 // pred_check
      _
    $region10: #{nlayer_discriminator_forward.8} parent=5 // pred_check_branch
      %94 = sbr.rel (%p91) target = $region12
    $region11: #{nlayer_discriminator_forward.8} parent=5 // pred_region
      %s95 = ssub.s32 %s8, 1
      // Predicated region
      $region13: #{nlayer_discriminator_forward.8} parent=11 // pred_check
        %p96 = pneg %p55
      $region14: #{nlayer_discriminator_forward.8} parent=11 // pred_check_branch
        %98 = sbr.rel (%p96) target = $region16
      $region15: #{nlayer_discriminator_forward.8} parent=11 // pred_region
        _
      $region16: #{nlayer_discriminator_forward.8} parent=11 // pred_fallthru
        _
    $region12: #{nlayer_discriminator_forward.8} parent=5 // pred_fallthru
      _
    %p99 = scmp.lt.s32.totalorder %s8, 2
    // Predicated region
    $region17: #{nlayer_discriminator_forward.8} parent=5 // pred_check
      %p100 = pneg %p99
    $region18: #{nlayer_discriminator_forward.8} parent=5 // pred_check_branch
      %102 = sbr.rel (%p100) target = $region20
    $region19: #{nlayer_discriminator_forward.8} parent=5 // pred_region
      // Predicated region
      $region21: #{nlayer_discriminator_forward.8} parent=19 // pred_check
        %p103 = pneg %p28
      $region22: #{nlayer_discriminator_forward.8} parent=19 // pred_check_branch
        %105 = sbr.rel (%p103) target = $region24
      $region23: #{nlayer_discriminator_forward.8} parent=19 // pred_region
        %s106 = smul.u32 2, %s8
        %p107 = scmp.lt.s32.totalorder %s106, 3
        %s108 = scalar_select %p107, %s106, 3
        %s109 = smul.addr %s108, 8
        %s110 = smul.addr %s109, 8
        %s111 = scalar_lea.vmem %s0, %s110
        %s112 = smul.u32 2, %s8
      $region24: #{nlayer_discriminator_forward.8} parent=19 // pred_fallthru
        _
    $region20: #{nlayer_discriminator_forward.8} parent=5 // pred_fallthru
      _
    %p113 = scmp.le.s32.totalorder 1, %s8
    %p114 = scmp.lt.s32.totalorder %s8, 3
    %p115 = pnand %p113, %p114
    %p116 = pneg %p115
    // Predicated region
    $region25: #{nlayer_discriminator_forward.8} parent=5 // pred_check
      _
    $region26: #{nlayer_discriminator_forward.8} parent=5 // pred_check_branch
      %118 = sbr.rel (%p115) target = $region28
    $region27: #{nlayer_discriminator_forward.8} parent=5 // pred_region
      %s119 = ssub.s32 %s8, 1
      %s120 = smul.u32 2, %s13
      %p121 = scmp.lt.s32.totalorder %s120, 3
      %s122 = scalar_select %p121, %s120, 3
      %s123 = smul.addr %s122, 8
      %s124 = smul.addr %s123, 8
      %s125 = scalar_lea.vmem %s0, %s124
      %p126 = pneg %p34
      %p127 = pneg %p31
      %p128 = pneg %p55
      %p129 = pneg %p52
      %p130 = pneg %p81
      %p131 = pneg %p78
      %s132 = smul.u32 2, %s13
      %p133 = scmp.lt.s32.totalorder %s132, 3
      %s134 = scalar_select %p133, %s132, 3
      %s135 = smul.addr %s134, 8
      %s136 = scalar_lea.vmem %s2, %s135
      %s137 = smul.u32 2, %s13
      %p138 = scmp.lt.s32.totalorder %s137, 3
      %s139 = scalar_select %p138, %s137, 3
      %s140 = smul.addr %s139, 8
      %s141 = smul.addr %s140, 8
      %s142 = scalar_lea.vmem %s0, %s141
      %s143 = smul.u32 2, %s13
      %s144 = smul.u32 2, %s13
      %p145 = scmp.lt.s32.totalorder %s144, 3
      %s146 = scalar_select %p145, %s144, 3
      %s147 = smul.addr %s146, 8
      %s148 = scalar_lea.vmem %s2, %s147
      %s149 = smul.u32 2, %s13
      %v150 = vld [vmem:[%s142] sm:$0xff]
      %v151 = vld [vmem:[%s142 + $0x8] sm:$0xff]
      %v152 = vld [vmem:[%s142 + $0x10] sm:$0xff]
      %v153 = vld [vmem:[%s142 + $0x18] sm:$0xff]
      %v154 = vld [vmem:[%s142 + $0x20] sm:$0xff]
      %v155 = vld [vmem:[%s142 + $0x28] sm:$0xff]
      %v156 = vld [vmem:[%s142 + $0x30] sm:$0xff]
      %v157 = vld [vmem:[%s142 + $0x38] sm:$0xff]
      %v158 = vld [vmem:[%s142 + $0x40] sm:$0xff]
      %v159 = vld [vmem:[%s142 + $0x48] sm:$0xff]
      %v160 = vld [vmem:[%s142 + $0x50] sm:$0xff]
      %v161 = vld [vmem:[%s142 + $0x58] sm:$0xff]
      %v162 = vld [vmem:[%s142 + $0x60] sm:$0xff]
      %v163 = vld [vmem:[%s142 + $0x68] sm:$0xff]
      %v164 = vld [vmem:[%s142 + $0x70] sm:$0xff]
      %v165 = vld [vmem:[%s142 + $0x78] sm:$0xff]
      %v166 = vld [vmem:[%s1] sm:$0xff]
      %v167 = vld [vmem:[%s1 + $0x8] sm:$0xff]
      %v168 = vld [vmem:[%s1 + $0x10] sm:$0xff]
      %v169 = vld [vmem:[%s1 + $0x18] sm:$0xff]
      %v170 = vld [vmem:[%s1 + $0x20] sm:$0xff]
      %v171 = vld [vmem:[%s1 + $0x28] sm:$0xff]
      %v172 = vld [vmem:[%s1 + $0x30] sm:$0xff]
      %v173 = vld [vmem:[%s1 + $0x38] sm:$0xff]
      %v174 = vld [vmem:[%s1 + $0x40] sm:$0xff]
      %v175 = vld [vmem:[%s1 + $0x48] sm:$0xff]
      %v176 = vld [vmem:[%s1 + $0x50] sm:$0xff]
      %v177 = vld [vmem:[%s1 + $0x58] sm:$0xff]
      %v178 = vld [vmem:[%s1 + $0x60] sm:$0xff]
      %v179 = vld [vmem:[%s1 + $0x68] sm:$0xff]
      %v180 = vld [vmem:[%s1 + $0x70] sm:$0xff]
      %v181 = vld [vmem:[%s1 + $0x78] sm:$0xff]
      %v182 = vld [vmem:[%s1 + $0x80] sm:$0xff]
      %v183 = vld [vmem:[%s1 + $0x88] sm:$0xff]
      %v184 = vld [vmem:[%s1 + $0x90] sm:$0xff]
      %v185 = vld [vmem:[%s1 + $0x98] sm:$0xff]
      %v186 = vld [vmem:[%s1 + $0xa0] sm:$0xff]
      %v187 = vld [vmem:[%s1 + $0xa8] sm:$0xff]
      %v188 = vld [vmem:[%s1 + $0xb0] sm:$0xff]
      %v189 = vld [vmem:[%s1 + $0xb8] sm:$0xff]
      %v190 = vld [vmem:[%s1 + $0xc0] sm:$0xff]
      %v191 = vld [vmem:[%s1 + $0xc8] sm:$0xff]
      %v192 = vld [vmem:[%s1 + $0xd0] sm:$0xff]
      %v193 = vld [vmem:[%s1 + $0xd8] sm:$0xff]
      %v194 = vld [vmem:[%s1 + $0xe0] sm:$0xff]
      %v195 = vld [vmem:[%s1 + $0xe8] sm:$0xff]
      %v196 = vld [vmem:[%s1 + $0xf0] sm:$0xff]
      %v197 = vld [vmem:[%s1 + $0xf8] sm:$0xff]
      %v198 = vld [vmem:[%s1 + $0x100] sm:$0xff]
      %v199 = vld [vmem:[%s1 + $0x108] sm:$0xff]
      %v200 = vld [vmem:[%s1 + $0x110] sm:$0xff]
      %v201 = vld [vmem:[%s1 + $0x118] sm:$0xff]
      %v202 = vld [vmem:[%s1 + $0x120] sm:$0xff]
      %v203 = vld [vmem:[%s1 + $0x128] sm:$0xff]
      %v204 = vld [vmem:[%s1 + $0x130] sm:$0xff]
      %v205 = vld [vmem:[%s1 + $0x138] sm:$0xff]
      %v206 = vld [vmem:[%s1 + $0x140] sm:$0xff]
      %v207 = vld [vmem:[%s1 + $0x148] sm:$0xff]
      %v208 = vld [vmem:[%s1 + $0x150] sm:$0xff]
      %v209 = vld [vmem:[%s1 + $0x158] sm:$0xff]
      %v210 = vld [vmem:[%s1 + $0x160] sm:$0xff]
      %v211 = vld [vmem:[%s1 + $0x168] sm:$0xff]
      %v212 = vld [vmem:[%s1 + $0x170] sm:$0xff]
      %v213 = vld [vmem:[%s1 + $0x178] sm:$0xff]
      %v214 = vld [vmem:[%s1 + $0x180] sm:$0xff]
      %v215 = vld [vmem:[%s1 + $0x188] sm:$0xff]
      %v216 = vld [vmem:[%s1 + $0x190] sm:$0xff]
      %v217 = vld [vmem:[%s1 + $0x198] sm:$0xff]
      %v218 = vld [vmem:[%s1 + $0x1a0] sm:$0xff]
      %v219 = vld [vmem:[%s1 + $0x1a8] sm:$0xff]
      %v220 = vld [vmem:[%s1 + $0x1b0] sm:$0xff]
      %v221 = vld [vmem:[%s1 + $0x1b8] sm:$0xff]
      %v222 = vld [vmem:[%s1 + $0x1c0] sm:$0xff]
      %v223 = vld [vmem:[%s1 + $0x1c8] sm:$0xff]
      %v224 = vld [vmem:[%s1 + $0x1d0] sm:$0xff]
      %v225 = vld [vmem:[%s1 + $0x1d8] sm:$0xff]
      %v226 = vld [vmem:[%s1 + $0x1e0] sm:$0xff]
      %v227 = vld [vmem:[%s1 + $0x1e8] sm:$0xff]
      %v228 = vld [vmem:[%s1 + $0x1f0] sm:$0xff]
      %v229 = vld [vmem:[%s1 + $0x1f8] sm:$0xff]
      %v230 = vld [vmem:[%s1 + $0x200] sm:$0xff]
      %v231 = vld [vmem:[%s1 + $0x208] sm:$0xff]
      %v232 = vld [vmem:[%s1 + $0x210] sm:$0xff]
      %v233 = vld [vmem:[%s1 + $0x218] sm:$0xff]
      %v234 = vld [vmem:[%s1 + $0x220] sm:$0xff]
      %v235 = vld [vmem:[%s1 + $0x228] sm:$0xff]
      %v236 = vld [vmem:[%s1 + $0x230] sm:$0xff]
      %v237 = vld [vmem:[%s1 + $0x238] sm:$0xff]
      %v238 = vld [vmem:[%s1 + $0x240] sm:$0xff]
      %v239 = vld [vmem:[%s1 + $0x248] sm:$0xff]
      %v240 = vld [vmem:[%s1 + $0x250] sm:$0xff]
      %v241 = vld [vmem:[%s1 + $0x258] sm:$0xff]
      %v242 = vld [vmem:[%s1 + $0x260] sm:$0xff]
      %v243 = vld [vmem:[%s1 + $0x268] sm:$0xff]
      %v244 = vld [vmem:[%s1 + $0x270] sm:$0xff]
      %v245 = vld [vmem:[%s1 + $0x278] sm:$0xff]
      %v246 = vld [vmem:[%s1 + $0x280] sm:$0xff]
      %v247 = vld [vmem:[%s1 + $0x288] sm:$0xff]
      %v248 = vld [vmem:[%s1 + $0x290] sm:$0xff]
      %v249 = vld [vmem:[%s1 + $0x298] sm:$0xff]
      %v250 = vld [vmem:[%s1 + $0x2a0] sm:$0xff]
      %v251 = vld [vmem:[%s1 + $0x2a8] sm:$0xff]
      %v252 = vld [vmem:[%s1 + $0x2b0] sm:$0xff]
      %v253 = vld [vmem:[%s1 + $0x2b8] sm:$0xff]
      %v254 = vld [vmem:[%s1 + $0x2c0] sm:$0xff]
      %v255 = vld [vmem:[%s1 + $0x2c8] sm:$0xff]
      %v256 = vld [vmem:[%s1 + $0x2d0] sm:$0xff]
      %v257 = vld [vmem:[%s1 + $0x2d8] sm:$0xff]
      %v258 = vld [vmem:[%s1 + $0x2e0] sm:$0xff]
      %v259 = vld [vmem:[%s1 + $0x2e8] sm:$0xff]
      %v260 = vld [vmem:[%s1 + $0x2f0] sm:$0xff]
      %v261 = vld [vmem:[%s1 + $0x2f8] sm:$0xff]
      %v262 = vld [vmem:[%s1 + $0x300] sm:$0xff]
      %v263 = vld [vmem:[%s1 + $0x308] sm:$0xff]
      %v264 = vld [vmem:[%s1 + $0x310] sm:$0xff]
      %v265 = vld [vmem:[%s1 + $0x318] sm:$0xff]
      %v266 = vld [vmem:[%s1 + $0x320] sm:$0xff]
      %v267 = vld [vmem:[%s1 + $0x328] sm:$0xff]
      %v268 = vld [vmem:[%s1 + $0x330] sm:$0xff]
      %v269 = vld [vmem:[%s1 + $0x338] sm:$0xff]
      %v270 = vld [vmem:[%s1 + $0x340] sm:$0xff]
      %v271 = vld [vmem:[%s1 + $0x348] sm:$0xff]
      %v272 = vld [vmem:[%s1 + $0x350] sm:$0xff]
      %v273 = vld [vmem:[%s1 + $0x358] sm:$0xff]
      %v274 = vld [vmem:[%s1 + $0x360] sm:$0xff]
      %v275 = vld [vmem:[%s1 + $0x368] sm:$0xff]
      %v276 = vld [vmem:[%s1 + $0x370] sm:$0xff]
      %v277 = vld [vmem:[%s1 + $0x378] sm:$0xff]
      %v278 = vld [vmem:[%s1 + $0x380] sm:$0xff]
      %v279 = vld [vmem:[%s1 + $0x388] sm:$0xff]
      %v280 = vld [vmem:[%s1 + $0x390] sm:$0xff]
      %v281 = vld [vmem:[%s1 + $0x398] sm:$0xff]
      %v282 = vld [vmem:[%s1 + $0x3a0] sm:$0xff]
      %v283 = vld [vmem:[%s1 + $0x3a8] sm:$0xff]
      %v284 = vld [vmem:[%s1 + $0x3b0] sm:$0xff]
      %v285 = vld [vmem:[%s1 + $0x3b8] sm:$0xff]
      %v286 = vld [vmem:[%s1 + $0x3c0] sm:$0xff]
      %v287 = vld [vmem:[%s1 + $0x3c8] sm:$0xff]
      %v288 = vld [vmem:[%s1 + $0x3d0] sm:$0xff]
      %v289 = vld [vmem:[%s1 + $0x3d8] sm:$0xff]
      %v290 = vld [vmem:[%s1 + $0x3e0] sm:$0xff]
      %v291 = vld [vmem:[%s1 + $0x3e8] sm:$0xff]
      %v292 = vld [vmem:[%s1 + $0x3f0] sm:$0xff]
      %v293 = vld [vmem:[%s1 + $0x3f8] sm:$0xff]
      %294 = vmatprep.subr.mxu0 0.0
      %295 = vmatpush1.msra.mxu0 %v166
      %296 = vmatprep.subr.mxu0 0.0
      %297 = vmatpush1.msra.mxu0 %v167
      %298 = vmatprep.subr.mxu0 0.0
      %299 = vmatpush1.msra.mxu0 %v168
      %300 = vmatprep.subr.mxu0 0.0
      %301 = vmatpush1.msra.mxu0 %v169
      %302 = vmatprep.subr.mxu0 0.0
      %303 = vmatpush1.msra.mxu0 %v170
      %304 = vmatprep.subr.mxu0 0.0
      %305 = vmatpush1.msra.mxu0 %v171
      %306 = vmatprep.subr.mxu0 0.0
      %307 = vmatpush1.msra.mxu0 %v172
      %308 = vmatprep.subr.mxu0 0.0
      %309 = vmatpush1.msra.mxu0 %v173
      %310 = vmatprep.subr.mxu0 0.0
      %311 = vmatpush1.msra.mxu0 %v174
      %312 = vmatprep.subr.mxu0 0.0
      %313 = vmatpush1.msra.mxu0 %v175
      %314 = vmatprep.subr.mxu0 0.0
      %315 = vmatpush1.msra.mxu0 %v176
      %316 = vmatprep.subr.mxu0 0.0
      %317 = vmatpush1.msra.mxu0 %v177
      %318 = vmatprep.subr.mxu0 0.0
      %319 = vmatpush1.msra.mxu0 %v178
      %320 = vmatprep.subr.mxu0 0.0
      %321 = vmatpush1.msra.mxu0 %v179
      %322 = vmatprep.subr.mxu0 0.0
      %323 = vmatpush1.msra.mxu0 %v180
      %324 = vmatprep.subr.mxu0 0.0
      %325 = vmatpush1.msra.mxu0 %v181
      %326 = vmatprep.subr.mxu0 0.0
      %327 = vmatpush1.msra.mxu0 %v182
      %328 = vmatprep.subr.mxu0 0.0
      %329 = vmatpush1.msra.mxu0 %v183
      %330 = vmatprep.subr.mxu0 0.0
      %331 = vmatpush1.msra.mxu0 %v184
      %332 = vmatprep.subr.mxu0 0.0
      %333 = vmatpush1.msra.mxu0 %v185
      %334 = vmatprep.subr.mxu0 0.0
      %335 = vmatpush1.msra.mxu0 %v186
      %336 = vmatprep.subr.mxu0 0.0
      %337 = vmatpush1.msra.mxu0 %v187
      %338 = vmatprep.subr.mxu0 0.0
      %339 = vmatpush1.msra.mxu0 %v188
      %340 = vmatprep.subr.mxu0 0.0
      %341 = vmatpush1.msra.mxu0 %v189
      %342 = vmatprep.subr.mxu0 0.0
      %343 = vmatpush1.msra.mxu0 %v190
      %344 = vmatprep.subr.mxu0 0.0
      %345 = vmatpush1.msra.mxu0 %v191
      %346 = vmatprep.subr.mxu0 0.0
      %347 = vmatpush1.msra.mxu0 %v192
      %348 = vmatprep.subr.mxu0 0.0
      %349 = vmatpush1.msra.mxu0 %v193
      %350 = vmatprep.subr.mxu0 0.0
      %351 = vmatpush1.msra.mxu0 %v194
      %352 = vmatprep.subr.mxu0 0.0
      %353 = vmatpush1.msra.mxu0 %v195
      %354 = vmatprep.subr.mxu0 0.0
      %355 = vmatpush1.msra.mxu0 %v196
      %356 = vmatprep.subr.mxu0 0.0
      %357 = vmatpush1.msra.mxu0 %v197
      %358 = vmatprep.mubr.f32.mxu0 %v151
      %359 = vmatmul.mubr.f32.gmra.mrb[0].mxu0 %v150
      %v360 = vpop.f32.mrb[0].mxu0
      %v361 = vadd.f32 0.0, %v360
      %v362 = vpop.f32.mrb[0].mxu0
      %363 = vmatprep.mubr.f32.mxu0 %v159
      %364 = vmatmul.mubr.f32.gmra.mrb[0].mxu0 %v158
      %v365 = vpop.f32.mrb[0].mxu0
      %v366 = vadd.f32 0.0, %v365
      %v367 = vpop.f32.mrb[0].mxu0
      %368 = vdwg.mxu0
      %369 = vmatprep.subr.mxu0 0.0
      %370 = vmatpush1.msra.mxu0 %v198
      %371 = vmatprep.subr.mxu0 0.0
      %372 = vmatpush1.msra.mxu0 %v199
      %373 = vmatprep.subr.mxu0 0.0
      %374 = vmatpush1.msra.mxu0 %v200
      %375 = vmatprep.subr.mxu0 0.0
      %376 = vmatpush1.msra.mxu0 %v201
      %377 = vmatprep.subr.mxu0 0.0
      %378 = vmatpush1.msra.mxu0 %v202
      %379 = vmatprep.subr.mxu0 0.0
      %380 = vmatpush1.msra.mxu0 %v203
      %381 = vmatprep.subr.mxu0 0.0
      %382 = vmatpush1.msra.mxu0 %v204
      %383 = vmatprep.subr.mxu0 0.0
      %384 = vmatpush1.msra.mxu0 %v205
      %385 = vmatprep.subr.mxu0 0.0
      %386 = vmatpush1.msra.mxu0 %v206
      %387 = vmatprep.subr.mxu0 0.0
      %388 = vmatpush1.msra.mxu0 %v207
      %389 = vmatprep.subr.mxu0 0.0
      %390 = vmatpush1.msra.mxu0 %v208
      %391 = vmatprep.subr.mxu0 0.0
      %392 = vmatpush1.msra.mxu0 %v209
      %393 = vmatprep.subr.mxu0 0.0
      %394 = vmatpush1.msra.mxu0 %v210
      %395 = vmatprep.subr.mxu0 0.0
      %396 = vmatpush1.msra.mxu0 %v211
      %397 = vmatprep.subr.mxu0 0.0
      %398 = vmatpush1.msra.mxu0 %v212
      %399 = vmatprep.subr.mxu0 0.0
      %400 = vmatpush1.msra.mxu0 %v213
      %401 = vmatprep.subr.mxu0 0.0
      %402 = vmatpush1.msra.mxu0 %v214
      %403 = vmatprep.subr.mxu0 0.0
      %404 = vmatpush1.msra.mxu0 %v215
      %405 = vmatprep.subr.mxu0 0.0
      %406 = vmatpush1.msra.mxu0 %v216
      %407 = vmatprep.subr.mxu0 0.0
      %408 = vmatpush1.msra.mxu0 %v217
      %409 = vmatprep.subr.mxu0 0.0
      %410 = vmatpush1.msra.mxu0 %v218
      %411 = vmatprep.subr.mxu0 0.0
      %412 = vmatpush1.msra.mxu0 %v219
      %413 = vmatprep.subr.mxu0 0.0
      %414 = vmatpush1.msra.mxu0 %v220
      %415 = vmatprep.subr.mxu0 0.0
      %416 = vmatpush1.msra.mxu0 %v221
      %417 = vmatprep.subr.mxu0 0.0
      %418 = vmatpush1.msra.mxu0 %v222
      %419 = vmatprep.subr.mxu0 0.0
      %420 = vmatpush1.msra.mxu0 %v223
      %421 = vmatprep.subr.mxu0 0.0
      %422 = vmatpush1.msra.mxu0 %v224
      %423 = vmatprep.subr.mxu0 0.0
      %424 = vmatpush1.msra.mxu0 %v225
      %425 = vmatprep.subr.mxu0 0.0
      %426 = vmatpush1.msra.mxu0 %v226
      %427 = vmatprep.subr.mxu0 0.0
      %428 = vmatpush1.msra.mxu0 %v227
      %429 = vmatprep.subr.mxu0 0.0
      %430 = vmatpush1.msra.mxu0 %v228
      %431 = vmatprep.subr.mxu0 0.0
      %432 = vmatpush1.msra.mxu0 %v229
      %433 = vmatprep.mubr.f32.mxu0 %v153
      %434 = vmatmul.mubr.f32.gmra.mrb[0].mxu0 %v152
      %v435 = vpop.f32.mrb[0].mxu0
      %v436 = vadd.f32 %v361, %v435
      %v437 = vpop.f32.mrb[0].mxu0
      %438 = vmatprep.mubr.f32.mxu0 %v161
      %439 = vmatmul.mubr.f32.gmra.mrb[0].mxu0 %v160
      %v440 = vpop.f32.mrb[0].mxu0
      %v441 = vadd.f32 %v366, %v440
      %v442 = vpop.f32.mrb[0].mxu0
      %443 = vdwg.mxu0
      %444 = vmatprep.subr.mxu0 0.0
      %445 = vmatpush1.msra.mxu0 %v230
      %446 = vmatprep.subr.mxu0 0.0
      %447 = vmatpush1.msra.mxu0 %v231
      %448 = vmatprep.subr.mxu0 0.0
      %449 = vmatpush1.msra.mxu0 %v232
      %450 = vmatprep.subr.mxu0 0.0
      %451 = vmatpush1.msra.mxu0 %v233
      %452 = vmatprep.subr.mxu0 0.0
      %453 = vmatpush1.msra.mxu0 %v234
      %454 = vmatprep.subr.mxu0 0.0
      %455 = vmatpush1.msra.mxu0 %v235
      %456 = vmatprep.subr.mxu0 0.0
      %457 = vmatpush1.msra.mxu0 %v236
      %458 = vmatprep.subr.mxu0 0.0
      %459 = vmatpush1.msra.mxu0 %v237
      %460 = vmatprep.subr.mxu0 0.0
      %461 = vmatpush1.msra.mxu0 %v238
      %462 = vmatprep.subr.mxu0 0.0
      %463 = vmatpush1.msra.mxu0 %v239
      %464 = vmatprep.subr.mxu0 0.0
      %465 = vmatpush1.msra.mxu0 %v240
      %466 = vmatprep.subr.mxu0 0.0
      %467 = vmatpush1.msra.mxu0 %v241
      %468 = vmatprep.subr.mxu0 0.0
      %469 = vmatpush1.msra.mxu0 %v242
      %470 = vmatprep.subr.mxu0 0.0
      %471 = vmatpush1.msra.mxu0 %v243
      %472 = vmatprep.subr.mxu0 0.0
      %473 = vmatpush1.msra.mxu0 %v244
      %474 = vmatprep.subr.mxu0 0.0
      %475 = vmatpush1.msra.mxu0 %v245
      %476 = vmatprep.subr.mxu0 0.0
      %477 = vmatpush1.msra.mxu0 %v246
      %478 = vmatprep.subr.mxu0 0.0
      %479 = vmatpush1.msra.mxu0 %v247
      %480 = vmatprep.subr.mxu0 0.0
      %481 = vmatpush1.msra.mxu0 %v248
      %482 = vmatprep.subr.mxu0 0.0
      %483 = vmatpush1.msra.mxu0 %v249
      %484 = vmatprep.subr.mxu0 0.0
      %485 = vmatpush1.msra.mxu0 %v250
      %486 = vmatprep.subr.mxu0 0.0
      %487 = vmatpush1.msra.mxu0 %v251
      %488 = vmatprep.subr.mxu0 0.0
      %489 = vmatpush1.msra.mxu0 %v252
      %490 = vmatprep.subr.mxu0 0.0
      %491 = vmatpush1.msra.mxu0 %v253
      %492 = vmatprep.subr.mxu0 0.0
      %493 = vmatpush1.msra.mxu0 %v254
      %494 = vmatprep.subr.mxu0 0.0
      %495 = vmatpush1.msra.mxu0 %v255
      %496 = vmatprep.subr.mxu0 0.0
      %497 = vmatpush1.msra.mxu0 %v256
      %498 = vmatprep.subr.mxu0 0.0
      %499 = vmatpush1.msra.mxu0 %v257
      %500 = vmatprep.subr.mxu0 0.0
      %501 = vmatpush1.msra.mxu0 %v258
      %502 = vmatprep.subr.mxu0 0.0
      %503 = vmatpush1.msra.mxu0 %v259
      %504 = vmatprep.subr.mxu0 0.0
      %505 = vmatpush1.msra.mxu0 %v260
      %506 = vmatprep.subr.mxu0 0.0
      %507 = vmatpush1.msra.mxu0 %v261
      %508 = vmatprep.mubr.f32.mxu0 %v155
      %509 = vmatmul.mubr.f32.gmra.mrb[0].mxu0 %v154
      %v510 = vpop.f32.mrb[0].mxu0
      %v511 = vadd.f32 %v436, %v510
      %v512 = vpop.f32.mrb[0].mxu0
      %513 = vmatprep.mubr.f32.mxu0 %v163
      %514 = vmatmul.mubr.f32.gmra.mrb[0].mxu0 %v162
      %v515 = vpop.f32.mrb[0].mxu0
      %v516 = vadd.f32 %v441, %v515
      %v517 = vpop.f32.mrb[0].mxu0
      %518 = vdwg.mxu0
      %519 = vmatprep.subr.mxu0 0.0
      %520 = vmatpush1.msra.mxu0 %v262
      %521 = vmatprep.subr.mxu0 0.0
      %522 = vmatpush1.msra.mxu0 %v263
      %523 = vmatprep.subr.mxu0 0.0
      %524 = vmatpush1.msra.mxu0 %v264
      %525 = vmatprep.subr.mxu0 0.0
      %526 = vmatpush1.msra.mxu0 %v265
      %527 = vmatprep.subr.mxu0 0.0
      %528 = vmatpush1.msra.mxu0 %v266
      %529 = vmatprep.subr.mxu0 0.0
      %530 = vmatpush1.msra.mxu0 %v267
      %531 = vmatprep.subr.mxu0 0.0
      %532 = vmatpush1.msra.mxu0 %v268
      %533 = vmatprep.subr.mxu0 0.0
      %534 = vmatpush1.msra.mxu0 %v269
      %535 = vmatprep.subr.mxu0 0.0
      %536 = vmatpush1.msra.mxu0 %v270
      %537 = vmatprep.subr.mxu0 0.0
      %538 = vmatpush1.msra.mxu0 %v271
      %539 = vmatprep.subr.mxu0 0.0
      %540 = vmatpush1.msra.mxu0 %v272
      %541 = vmatprep.subr.mxu0 0.0
      %542 = vmatpush1.msra.mxu0 %v273
      %543 = vmatprep.subr.mxu0 0.0
      %544 = vmatpush1.msra.mxu0 %v274
      %545 = vmatprep.subr.mxu0 0.0
      %546 = vmatpush1.msra.mxu0 %v275
      %547 = vmatprep.subr.mxu0 0.0
      %548 = vmatpush1.msra.mxu0 %v276
      %549 = vmatprep.subr.mxu0 0.0
      %550 = vmatpush1.msra.mxu0 %v277
      %551 = vmatprep.subr.mxu0 0.0
      %552 = vmatpush1.msra.mxu0 %v278
      %553 = vmatprep.subr.mxu0 0.0
      %554 = vmatpush1.msra.mxu0 %v279
      %555 = vmatprep.subr.mxu0 0.0
      %556 = vmatpush1.msra.mxu0 %v280
      %557 = vmatprep.subr.mxu0 0.0
      %558 = vmatpush1.msra.mxu0 %v281
      %559 = vmatprep.subr.mxu0 0.0
      %560 = vmatpush1.msra.mxu0 %v282
      %561 = vmatprep.subr.mxu0 0.0
      %562 = vmatpush1.msra.mxu0 %v283
      %563 = vmatprep.subr.mxu0 0.0
      %564 = vmatpush1.msra.mxu0 %v284
      %565 = vmatprep.subr.mxu0 0.0
      %566 = vmatpush1.msra.mxu0 %v285
      %567 = vmatprep.subr.mxu0 0.0
      %568 = vmatpush1.msra.mxu0 %v286
      %569 = vmatprep.subr.mxu0 0.0
      %570 = vmatpush1.msra.mxu0 %v287
      %571 = vmatprep.subr.mxu0 0.0
      %572 = vmatpush1.msra.mxu0 %v288
      %573 = vmatprep.subr.mxu0 0.0
      %574 = vmatpush1.msra.mxu0 %v289
      %575 = vmatprep.subr.mxu0 0.0
      %576 = vmatpush1.msra.mxu0 %v290
      %577 = vmatprep.subr.mxu0 0.0
      %578 = vmatpush1.msra.mxu0 %v291
      %579 = vmatprep.subr.mxu0 0.0
      %580 = vmatpush1.msra.mxu0 %v292
      %581 = vmatprep.subr.mxu0 0.0
      %582 = vmatpush1.msra.mxu0 %v293
      %583 = vmatprep.mubr.f32.mxu0 %v157
      %584 = vmatmul.mubr.f32.gmra.mrb[0].mxu0 %v156
      %v585 = vpop.f32.mrb[0].mxu0
      %v586 = vadd.f32 %v511, %v585
      %v587 = vpop.f32.mrb[0].mxu0
      %588 = vmatprep.mubr.f32.mxu0 %v165
      %589 = vmatmul.mubr.f32.gmra.mrb[0].mxu0 %v164
      %v590 = vpop.f32.mrb[0].mxu0
      %v591 = vadd.f32 %v516, %v590
      %v592 = vpop.f32.mrb[0].mxu0
      %593 = vdwg.mxu0
      %v594 = vadd.f32 %v586, %v591
      %v595 = vrot.slane %v594, 4
      %v596 = vadd.f32 %v594, %v595
      %v597 = vrot.slane %v596, 2
      %v598 = vadd.f32 %v596, %v597
      %v599 = vrot.slane %v598, 1
      %v600 = vadd.f32 %v598, %v599
      %v601 = vrcp.pop 16.0
      %v602 = vmul.f32 %v600, %v601
      %v603 = vsub.f32 %v586, %v602
      %v604 = vsub.f32 %v591, %v602
      %v605 = vmul.f32 %v603, %v603
      %v606 = vmul.f32 %v604, %v604
      %v607 = vadd.f32 %v605, %v606
      %v608 = vrot.slane %v607, 4
      %v609 = vadd.f32 %v607, %v608
      %v610 = vrot.slane %v609, 2
      %v611 = vadd.f32 %v609, %v610
      %v612 = vrot.slane %v611, 1
      %v613 = vadd.f32 %v611, %v612
      %v614 = vmul.f32 %v613, %v601
      %v615 = vadd.f32 %v614, 1e-05
      %v616 = vrsqrt.pop %v615
      %v617 = vmul.f32 %v603, %v616
      %v618 = vmul.f32 %v604, %v616
      %vm619 = vcmp.ge.f32.partialorder %v617, 0.0
      %vm620 = vcmp.ge.f32.partialorder %v618, 0.0
      %v621 = vmul.f32 %v617, 0.2
      %v622 = vmul.f32 %v618, 0.2
      %v623 = vsel %vm619, %v617, %v621
      %v624 = vsel %vm620, %v618, %v622
      %625 = vst [vmem:[%s148] sm:$0xff] %v623
      %626 = vst [vmem:[%s148 + $0x8] sm:$0xff] %v624
      %s627 = smul.u32 2, %s13
      %p628 = scmp.lt.s32.totalorder %s627, 3
      %s629 = scalar_select %p628, %s627, 3
      %s630 = smul.addr %s629, 8
      %s631 = scalar_lea.vmem %s2, %s630
      // Predicated region
      $region29: #{nlayer_discriminator_forward.8} parent=27 // pred_check
        %p632 = pneg %p78
      $region30: #{nlayer_discriminator_forward.8} parent=27 // pred_check_branch
        %634 = sbr.rel (%p632) target = $region32
      $region31: #{nlayer_discriminator_forward.8} parent=27 // pred_region
        %s635 = smul.u32 2, %s13
      $region32: #{nlayer_discriminator_forward.8} parent=27 // pred_fallthru
        _
    $region28: #{nlayer_discriminator_forward.8} parent=5 // pred_fallthru
      _
    %p636 = scmp.le.s32.totalorder 2, %s8
    // Predicated region
    $region33: #{nlayer_discriminator_forward.8} parent=5 // pred_check
      %p637 = pneg %p636
    $region34: #{nlayer_discriminator_forward.8} parent=5 // pred_check_branch
      %639 = sbr.rel (%p637) target = $region36
    $region35: #{nlayer_discriminator_forward.8} parent=5 // pred_region
      %s640 = ssub.s32 %s8, 2
      // Predicated region
      $region37: #{nlayer_discriminator_forward.8} parent=35 // pred_check
        %p641 = pneg %p84
      $region38: #{nlayer_discriminator_forward.8} parent=35 // pred_check_branch
        %643 = sbr.rel (%p641) target = $region40
      $region39: #{nlayer_discriminator_forward.8} parent=35 // pred_region
        %s644 = smul.u32 2, %s14
        %p645 = scmp.lt.s32.totalorder %s644, 3
        %s646 = scalar_select %p645, %s644, 3
        %s647 = smul.addr %s646, 8
        %s648 = scalar_lea.vmem %s2, %s647
      $region40: #{nlayer_discriminator_forward.8} parent=35 // pred_fallthru
        _
    $region36: #{nlayer_discriminator_forward.8} parent=5 // pred_fallthru
      _
  $region6: #{nlayer_discriminator_forward.8} parent=0 // loop_footer
    %s12 = sadd.s32 1, %s8
  $region7: #{nlayer_discriminator_forward.8} parent=0 // loop_footer_branch
    %7 = sbr.rel target = $region3
  $region8: #{nlayer_discriminator_forward.8} parent=0 // loop_exit
    _

// kernel: nlayer_discriminator_forward.9
$region0: #{nlayer_discriminator_forward.9}
  #allocation0 [shape = 'u32[]', space=smem, size = 0x4, offset = 0x4, fixed_abs, tag = 'smem constant byte address 0x4 - core index']
  #allocation1 [shape = 'u32[144,128]{1,0:T(1,128)}', space=vmem, size = 0x12000, scoped, tag = 'internal scratch']
  %s0 = inlined_call_operand.vmem [shape: f32[2,2048], index: 0, kind: input, shape index: {}]
  %s1 = inlined_call_operand.vmem [shape: f32[2048,128], index: 1, kind: input, shape index: {}]
  %s2 = inlined_call_operand.vmem [shape: f32[2,128], index: 2, kind: output, shape index: {}]
  %s3 = sld [smem:[#allocation0]]
  $region18: #{nlayer_discriminator_forward.9} parent=0
    _
  %s5 = ssub.s32 1, %s3
  %s6 = scalar_select 0, %s5, %s3
  // Predicated region
  $region2: #{nlayer_discriminator_forward.9} parent=0 // pred_check
    _
  $region3: #{nlayer_discriminator_forward.9} parent=0 // pred_check_branch
    %8 = sbr.rel (0) target = $region5
  $region4: #{nlayer_discriminator_forward.9} parent=0 // pred_region
    _
  $region5: #{nlayer_discriminator_forward.9} parent=0 // pred_fallthru
    _
  // Predicated region
  $region6: #{nlayer_discriminator_forward.9} parent=0 // pred_check
    _
  $region7: #{nlayer_discriminator_forward.9} parent=0 // pred_check_branch
    %10 = sbr.rel (0) target = $region9
  $region8: #{nlayer_discriminator_forward.9} parent=0 // pred_region
    _
  $region9: #{nlayer_discriminator_forward.9} parent=0 // pred_fallthru
    _
  %v11 = vld [vmem:[%s0] sm:$0xff]
  %v12 = vld [vmem:[%s0 + $0x8] sm:$0xff]
  %v13 = vld [vmem:[%s0 + $0x10] sm:$0xff]
  %v14 = vld [vmem:[%s0 + $0x18] sm:$0xff]
  %v15 = vld [vmem:[%s1] sm:$0xff]
  %v16 = vld [vmem:[%s1 + $0x8] sm:$0xff]
  %v17 = vld [vmem:[%s1 + $0x10] sm:$0xff]
  %v18 = vld [vmem:[%s1 + $0x18] sm:$0xff]
  %v19 = vld [vmem:[%s1 + $0x20] sm:$0xff]
  %v20 = vld [vmem:[%s1 + $0x28] sm:$0xff]
  %v21 = vld [vmem:[%s1 + $0x30] sm:$0xff]
  %v22 = vld [vmem:[%s1 + $0x38] sm:$0xff]
  %v23 = vld [vmem:[%s1 + $0x40] sm:$0xff]
  %v24 = vld [vmem:[%s1 + $0x48] sm:$0xff]
  %v25 = vld [vmem:[%s1 + $0x50] sm:$0xff]
  %v26 = vld [vmem:[%s1 + $0x58] sm:$0xff]
  %v27 = vld [vmem:[%s1 + $0x60] sm:$0xff]
  %v28 = vld [vmem:[%s1 + $0x68] sm:$0xff]
  %v29 = vld [vmem:[%s1 + $0x70] sm:$0xff]
  %v30 = vld [vmem:[%s1 + $0x78] sm:$0xff]
  %v31 = vld [vmem:[%s1 + $0x80] sm:$0xff]
  %v32 = vld [vmem:[%s1 + $0x88] sm:$0xff]
  %v33 = vld [vmem:[%s1 + $0x90] sm:$0xff]
  %v34 = vld [vmem:[%s1 + $0x98] sm:$0xff]
  %v35 = vld [vmem:[%s1 + $0xa0] sm:$0xff]
  %v36 = vld [vmem:[%s1 + $0xa8] sm:$0xff]
  %v37 = vld [vmem:[%s1 + $0xb0] sm:$0xff]
  %v38 = vld [vmem:[%s1 + $0xb8] sm:$0xff]
  %v39 = vld [vmem:[%s1 + $0xc0] sm:$0xff]
  %v40 = vld [vmem:[%s1 + $0xc8] sm:$0xff]
  %v41 = vld [vmem:[%s1 + $0xd0] sm:$0xff]
  %v42 = vld [vmem:[%s1 + $0xd8] sm:$0xff]
  %v43 = vld [vmem:[%s1 + $0xe0] sm:$0xff]
  %v44 = vld [vmem:[%s1 + $0xe8] sm:$0xff]
  %v45 = vld [vmem:[%s1 + $0xf0] sm:$0xff]
  %v46 = vld [vmem:[%s1 + $0xf8] sm:$0xff]
  %v47 = vld [vmem:[%s1 + $0x100] sm:$0xff]
  %v48 = vld [vmem:[%s1 + $0x108] sm:$0xff]
  %v49 = vld [vmem:[%s1 + $0x110] sm:$0xff]
  %v50 = vld [vmem:[%s1 + $0x118] sm:$0xff]
  %v51 = vld [vmem:[%s1 + $0x120] sm:$0xff]
  %v52 = vld [vmem:[%s1 + $0x128] sm:$0xff]
  %v53 = vld [vmem:[%s1 + $0x130] sm:$0xff]
  %v54 = vld [vmem:[%s1 + $0x138] sm:$0xff]
  %v55 = vld [vmem:[%s1 + $0x140] sm:$0xff]
  %v56 = vld [vmem:[%s1 + $0x148] sm:$0xff]
  %v57 = vld [vmem:[%s1 + $0x150] sm:$0xff]
  %v58 = vld [vmem:[%s1 + $0x158] sm:$0xff]
  %v59 = vld [vmem:[%s1 + $0x160] sm:$0xff]
  %v60 = vld [vmem:[%s1 + $0x168] sm:$0xff]
  %v61 = vld [vmem:[%s1 + $0x170] sm:$0xff]
  %v62 = vld [vmem:[%s1 + $0x178] sm:$0xff]
  %v63 = vld [vmem:[%s1 + $0x180] sm:$0xff]
  %v64 = vld [vmem:[%s1 + $0x188] sm:$0xff]
  %v65 = vld [vmem:[%s1 + $0x190] sm:$0xff]
  %v66 = vld [vmem:[%s1 + $0x198] sm:$0xff]
  %v67 = vld [vmem:[%s1 + $0x1a0] sm:$0xff]
  %v68 = vld [vmem:[%s1 + $0x1a8] sm:$0xff]
  %v69 = vld [vmem:[%s1 + $0x1b0] sm:$0xff]
  %v70 = vld [vmem:[%s1 + $0x1b8] sm:$0xff]
  %v71 = vld [vmem:[%s1 + $0x1c0] sm:$0xff]
  %v72 = vld [vmem:[%s1 + $0x1c8] sm:$0xff]
  %v73 = vld [vmem:[%s1 + $0x1d0] sm:$0xff]
  %v74 = vld [vmem:[%s1 + $0x1d8] sm:$0xff]
  %v75 = vld [vmem:[%s1 + $0x1e0] sm:$0xff]
  %v76 = vld [vmem:[%s1 + $0x1e8] sm:$0xff]
  %v77 = vld [vmem:[%s1 + $0x1f0] sm:$0xff]
  %v78 = vld [vmem:[%s1 + $0x1f8] sm:$0xff]
  %v79 = vld [vmem:[%s1 + $0x200] sm:$0xff]
  %v80 = vld [vmem:[%s1 + $0x208] sm:$0xff]
  %v81 = vld [vmem:[%s1 + $0x210] sm:$0xff]
  %v82 = vld [vmem:[%s1 + $0x218] sm:$0xff]
  %v83 = vld [vmem:[%s1 + $0x220] sm:$0xff]
  %v84 = vld [vmem:[%s1 + $0x228] sm:$0xff]
  %v85 = vld [vmem:[%s1 + $0x230] sm:$0xff]
  %v86 = vld [vmem:[%s1 + $0x238] sm:$0xff]
  %v87 = vld [vmem:[%s1 + $0x240] sm:$0xff]
  %v88 = vld [vmem:[%s1 + $0x248] sm:$0xff]
  %v89 = vld [vmem:[%s1 + $0x250] sm:$0xff]
  %v90 = vld [vmem:[%s1 + $0x258] sm:$0xff]
  %v91 = vld [vmem:[%s1 + $0x260] sm:$0xff]
  %v92 = vld [vmem:[%s1 + $0x268] sm:$0xff]
  %v93 = vld [vmem:[%s1 + $0x270] sm:$0xff]
  %v94 = vld [vmem:[%s1 + $0x278] sm:$0xff]
  %v95 = vld [vmem:[%s1 + $0x280] sm:$0xff]
  %v96 = vld [vmem:[%s1 + $0x288] sm:$0xff]
  %v97 = vld [vmem:[%s1 + $0x290] sm:$0xff]
  %v98 = vld [vmem:[%s1 + $0x298] sm:$0xff]
  %v99 = vld [vmem:[%s1 + $0x2a0] sm:$0xff]
  %v100 = vld [vmem:[%s1 + $0x2a8] sm:$0xff]
  %v101 = vld [vmem:[%s1 + $0x2b0] sm:$0xff]
  %v102 = vld [vmem:[%s1 + $0x2b8] sm:$0xff]
  %v103 = vld [vmem:[%s1 + $0x2c0] sm:$0xff]
  %v104 = vld [vmem:[%s1 + $0x2c8] sm:$0xff]
  %v105 = vld [vmem:[%s1 + $0x2d0] sm:$0xff]
  %v106 = vld [vmem:[%s1 + $0x2d8] sm:$0xff]
  %v107 = vld [vmem:[%s1 + $0x2e0] sm:$0xff]
  %v108 = vld [vmem:[%s1 + $0x2e8] sm:$0xff]
  %v109 = vld [vmem:[%s1 + $0x2f0] sm:$0xff]
  %v110 = vld [vmem:[%s1 + $0x2f8] sm:$0xff]
  %v111 = vld [vmem:[%s1 + $0x300] sm:$0xff]
  %v112 = vld [vmem:[%s1 + $0x308] sm:$0xff]
  %v113 = vld [vmem:[%s1 + $0x310] sm:$0xff]
  %v114 = vld [vmem:[%s1 + $0x318] sm:$0xff]
  %v115 = vld [vmem:[%s1 + $0x320] sm:$0xff]
  %v116 = vld [vmem:[%s1 + $0x328] sm:$0xff]
  %v117 = vld [vmem:[%s1 + $0x330] sm:$0xff]
  %v118 = vld [vmem:[%s1 + $0x338] sm:$0xff]
  %v119 = vld [vmem:[%s1 + $0x340] sm:$0xff]
  %v120 = vld [vmem:[%s1 + $0x348] sm:$0xff]
  %v121 = vld [vmem:[%s1 + $0x350] sm:$0xff]
  %v122 = vld [vmem:[%s1 + $0x358] sm:$0xff]
  %v123 = vld [vmem:[%s1 + $0x360] sm:$0xff]
  %v124 = vld [vmem:[%s1 + $0x368] sm:$0xff]
  %v125 = vld [vmem:[%s1 + $0x370] sm:$0xff]
  %v126 = vld [vmem:[%s1 + $0x378] sm:$0xff]
  %v127 = vld [vmem:[%s1 + $0x380] sm:$0xff]
  %v128 = vld [vmem:[%s1 + $0x388] sm:$0xff]
  %v129 = vld [vmem:[%s1 + $0x390] sm:$0xff]
  %v130 = vld [vmem:[%s1 + $0x398] sm:$0xff]
  %v131 = vld [vmem:[%s1 + $0x3a0] sm:$0xff]
  %v132 = vld [vmem:[%s1 + $0x3a8] sm:$0xff]
  %v133 = vld [vmem:[%s1 + $0x3b0] sm:$0xff]
  %v134 = vld [vmem:[%s1 + $0x3b8] sm:$0xff]
  %v135 = vld [vmem:[%s1 + $0x3c0] sm:$0xff]
  %v136 = vld [vmem:[%s1 + $0x3c8] sm:$0xff]
  %v137 = vld [vmem:[%s1 + $0x3d0] sm:$0xff]
  %v138 = vld [vmem:[%s1 + $0x3d8] sm:$0xff]
  %v139 = vld [vmem:[%s1 + $0x3e0] sm:$0xff]
  %v140 = vld [vmem:[%s1 + $0x3e8] sm:$0xff]
  %v141 = vld [vmem:[%s1 + $0x3f0] sm:$0xff]
  %v142 = vld [vmem:[%s1 + $0x3f8] sm:$0xff]
  %v143 = vld [vmem:[%s1 + $0x400] sm:$0xff]
  %v144 = vld [vmem:[%s1 + $0x408] sm:$0xff]
  %v145 = vld [vmem:[%s1 + $0x410] sm:$0xff]
  %v146 = vld [vmem:[%s1 + $0x418] sm:$0xff]
  %v147 = vld [vmem:[%s1 + $0x420] sm:$0xff]
  %v148 = vld [vmem:[%s1 + $0x428] sm:$0xff]
  %v149 = vld [vmem:[%s1 + $0x430] sm:$0xff]
  %v150 = vld [vmem:[%s1 + $0x438] sm:$0xff]
  %v151 = vld [vmem:[%s1 + $0x440] sm:$0xff]
  %v152 = vld [vmem:[%s1 + $0x448] sm:$0xff]
  %v153 = vld [vmem:[%s1 + $0x450] sm:$0xff]
  %v154 = vld [vmem:[%s1 + $0x458] sm:$0xff]
  %v155 = vld [vmem:[%s1 + $0x460] sm:$0xff]
  %v156 = vld [vmem:[%s1 + $0x468] sm:$0xff]
  %v157 = vld [vmem:[%s1 + $0x470] sm:$0xff]
  %v158 = vld [vmem:[%s1 + $0x478] sm:$0xff]
  %v159 = vld [vmem:[%s1 + $0x480] sm:$0xff]
  %v160 = vld [vmem:[%s1 + $0x488] sm:$0xff]
  %v161 = vld [vmem:[%s1 + $0x490] sm:$0xff]
  %v162 = vld [vmem:[%s1 + $0x498] sm:$0xff]
  %v163 = vld [vmem:[%s1 + $0x4a0] sm:$0xff]
  %v164 = vld [vmem:[%s1 + $0x4a8] sm:$0xff]
  %v165 = vld [vmem:[%s1 + $0x4b0] sm:$0xff]
  %v166 = vld [vmem:[%s1 + $0x4b8] sm:$0xff]
  %v167 = vld [vmem:[%s1 + $0x4c0] sm:$0xff]
  %v168 = vld [vmem:[%s1 + $0x4c8] sm:$0xff]
  %v169 = vld [vmem:[%s1 + $0x4d0] sm:$0xff]
  %v170 = vld [vmem:[%s1 + $0x4d8] sm:$0xff]
  %v171 = vld [vmem:[%s1 + $0x4e0] sm:$0xff]
  %v172 = vld [vmem:[%s1 + $0x4e8] sm:$0xff]
  %v173 = vld [vmem:[%s1 + $0x4f0] sm:$0xff]
  %v174 = vld [vmem:[%s1 + $0x4f8] sm:$0xff]
  %v175 = vld [vmem:[%s1 + $0x500] sm:$0xff]
  %v176 = vld [vmem:[%s1 + $0x508] sm:$0xff]
  %v177 = vld [vmem:[%s1 + $0x510] sm:$0xff]
  %v178 = vld [vmem:[%s1 + $0x518] sm:$0xff]
  %v179 = vld [vmem:[%s1 + $0x520] sm:$0xff]
  %v180 = vld [vmem:[%s1 + $0x528] sm:$0xff]
  %v181 = vld [vmem:[%s1 + $0x530] sm:$0xff]
  %v182 = vld [vmem:[%s1 + $0x538] sm:$0xff]
  %v183 = vld [vmem:[%s1 + $0x540] sm:$0xff]
  %v184 = vld [vmem:[%s1 + $0x548] sm:$0xff]
  %v185 = vld [vmem:[%s1 + $0x550] sm:$0xff]
  %v186 = vld [vmem:[%s1 + $0x558] sm:$0xff]
  %v187 = vld [vmem:[%s1 + $0x560] sm:$0xff]
  %v188 = vld [vmem:[%s1 + $0x568] sm:$0xff]
  %v189 = vld [vmem:[%s1 + $0x570] sm:$0xff]
  %v190 = vld [vmem:[%s1 + $0x578] sm:$0xff]
  %v191 = vld [vmem:[%s1 + $0x580] sm:$0xff]
  %v192 = vld [vmem:[%s1 + $0x588] sm:$0xff]
  %v193 = vld [vmem:[%s1 + $0x590] sm:$0xff]
  %v194 = vld [vmem:[%s1 + $0x598] sm:$0xff]
  %v195 = vld [vmem:[%s1 + $0x5a0] sm:$0xff]
  %v196 = vld [vmem:[%s1 + $0x5a8] sm:$0xff]
  %v197 = vld [vmem:[%s1 + $0x5b0] sm:$0xff]
  %v198 = vld [vmem:[%s1 + $0x5b8] sm:$0xff]
  %v199 = vld [vmem:[%s1 + $0x5c0] sm:$0xff]
  %v200 = vld [vmem:[%s1 + $0x5c8] sm:$0xff]
  %v201 = vld [vmem:[%s1 + $0x5d0] sm:$0xff]
  %v202 = vld [vmem:[%s1 + $0x5d8] sm:$0xff]
  %v203 = vld [vmem:[%s1 + $0x5e0] sm:$0xff]
  %v204 = vld [vmem:[%s1 + $0x5e8] sm:$0xff]
  %v205 = vld [vmem:[%s1 + $0x5f0] sm:$0xff]
  %v206 = vld [vmem:[%s1 + $0x5f8] sm:$0xff]
  %v207 = vld [vmem:[%s1 + $0x600] sm:$0xff]
  %v208 = vld [vmem:[%s1 + $0x608] sm:$0xff]
  %v209 = vld [vmem:[%s1 + $0x610] sm:$0xff]
  %v210 = vld [vmem:[%s1 + $0x618] sm:$0xff]
  %v211 = vld [vmem:[%s1 + $0x620] sm:$0xff]
  %v212 = vld [vmem:[%s1 + $0x628] sm:$0xff]
  %v213 = vld [vmem:[%s1 + $0x630] sm:$0xff]
  %v214 = vld [vmem:[%s1 + $0x638] sm:$0xff]
  %v215 = vld [vmem:[%s1 + $0x640] sm:$0xff]
  %v216 = vld [vmem:[%s1 + $0x648] sm:$0xff]
  %v217 = vld [vmem:[%s1 + $0x650] sm:$0xff]
  %v218 = vld [vmem:[%s1 + $0x658] sm:$0xff]
  %v219 = vld [vmem:[%s1 + $0x660] sm:$0xff]
  %v220 = vld [vmem:[%s1 + $0x668] sm:$0xff]
  %v221 = vld [vmem:[%s1 + $0x670] sm:$0xff]
  %v222 = vld [vmem:[%s1 + $0x678] sm:$0xff]
  %v223 = vld [vmem:[%s1 + $0x680] sm:$0xff]
  %v224 = vld [vmem:[%s1 + $0x688] sm:$0xff]
  %v225 = vld [vmem:[%s1 + $0x690] sm:$0xff]
  %v226 = vld [vmem:[%s1 + $0x698] sm:$0xff]
  %v227 = vld [vmem:[%s1 + $0x6a0] sm:$0xff]
  %v228 = vld [vmem:[%s1 + $0x6a8] sm:$0xff]
  %v229 = vld [vmem:[%s1 + $0x6b0] sm:$0xff]
  %v230 = vld [vmem:[%s1 + $0x6b8] sm:$0xff]
  %v231 = vld [vmem:[%s1 + $0x6c0] sm:$0xff]
  %v232 = vld [vmem:[%s1 + $0x6c8] sm:$0xff]
  %v233 = vld [vmem:[%s1 + $0x6d0] sm:$0xff]
  %v234 = vld [vmem:[%s1 + $0x6d8] sm:$0xff]
  %v235 = vld [vmem:[%s1 + $0x6e0] sm:$0xff]
  %v236 = vld [vmem:[%s1 + $0x6e8] sm:$0xff]
  %v237 = vld [vmem:[%s1 + $0x6f0] sm:$0xff]
  %v238 = vld [vmem:[%s1 + $0x6f8] sm:$0xff]
  %v239 = vld [vmem:[%s1 + $0x700] sm:$0xff]
  %v240 = vld [vmem:[%s1 + $0x708] sm:$0xff]
  %v241 = vld [vmem:[%s1 + $0x710] sm:$0xff]
  %v242 = vld [vmem:[%s1 + $0x718] sm:$0xff]
  %v243 = vld [vmem:[%s1 + $0x720] sm:$0xff]
  %v244 = vld [vmem:[%s1 + $0x728] sm:$0xff]
  %v245 = vld [vmem:[%s1 + $0x730] sm:$0xff]
  %v246 = vld [vmem:[%s1 + $0x738] sm:$0xff]
  %v247 = vld [vmem:[%s1 + $0x740] sm:$0xff]
  %v248 = vld [vmem:[%s1 + $0x748] sm:$0xff]
  %v249 = vld [vmem:[%s1 + $0x750] sm:$0xff]
  %v250 = vld [vmem:[%s1 + $0x758] sm:$0xff]
  %v251 = vld [vmem:[%s1 + $0x760] sm:$0xff]
  %v252 = vld [vmem:[%s1 + $0x768] sm:$0xff]
  %v253 = vld [vmem:[%s1 + $0x770] sm:$0xff]
  %v254 = vld [vmem:[%s1 + $0x778] sm:$0xff]
  %v255 = vld [vmem:[%s1 + $0x780] sm:$0xff]
  %v256 = vld [vmem:[%s1 + $0x788] sm:$0xff]
  %v257 = vld [vmem:[%s1 + $0x790] sm:$0xff]
  %v258 = vld [vmem:[%s1 + $0x798] sm:$0xff]
  %v259 = vld [vmem:[%s1 + $0x7a0] sm:$0xff]
  %v260 = vld [vmem:[%s1 + $0x7a8] sm:$0xff]
  %v261 = vld [vmem:[%s1 + $0x7b0] sm:$0xff]
  %v262 = vld [vmem:[%s1 + $0x7b8] sm:$0xff]
  %v263 = vld [vmem:[%s1 + $0x7c0] sm:$0xff]
  %v264 = vld [vmem:[%s1 + $0x7c8] sm:$0xff]
  %v265 = vld [vmem:[%s1 + $0x7d0] sm:$0xff]
  %v266 = vld [vmem:[%s1 + $0x7d8] sm:$0xff]
  %v267 = vld [vmem:[%s1 + $0x7e0] sm:$0xff]
  %v268 = vld [vmem:[%s1 + $0x7e8] sm:$0xff]
  %v269 = vld [vmem:[%s1 + $0x7f0] sm:$0xff]
  %v270 = vld [vmem:[%s1 + $0x7f8] sm:$0xff]
  %v275 = vcombine.high %v11, %v11
  %v277 = vunpack.c.l.s4 1983009808
  %v278 = vunpack.c.0.s8 %v277
  %v279 = vlaneseq
  %v280 = vshrl.u32 %v279, 7
  %v281 = vsub.s32 %v278, %v280
  %v282 = vrot.slane %v11, %v281
  %v284 = vunpack.c.l.s4 1983009808
  %v285 = vunpack.c.0.s8 %v284
  %v286 = vlaneseq
  %v287 = vshrl.u32 %v286, 7
  %v288 = vsub.s32 %v285, %v287
  %v289 = vrot.slane %v275, %v288
  %v290 = vcombine.high %v282, %v282
  %v291 = vcombine.high %v289, %v289
  %v292 = vcombine.high %v12, %v12
  %v294 = vunpack.c.l.s4 1983009808
  %v295 = vunpack.c.0.s8 %v294
  %v296 = vlaneseq
  %v297 = vshrl.u32 %v296, 7
  %v298 = vsub.s32 %v295, %v297
  %v299 = vrot.slane %v12, %v298
  %v301 = vunpack.c.l.s4 1983009808
  %v302 = vunpack.c.0.s8 %v301
  %v303 = vlaneseq
  %v304 = vshrl.u32 %v303, 7
  %v305 = vsub.s32 %v302, %v304
  %v306 = vrot.slane %v292, %v305
  %v307 = vcombine.high %v299, %v299
  %v308 = vcombine.high %v306, %v306
  %v309 = vcombine.high %v13, %v13
  %v311 = vunpack.c.l.s4 1983009808
  %v312 = vunpack.c.0.s8 %v311
  %v313 = vlaneseq
  %v314 = vshrl.u32 %v313, 7
  %v315 = vsub.s32 %v312, %v314
  %v316 = vrot.slane %v13, %v315
  %v318 = vunpack.c.l.s4 1983009808
  %v319 = vunpack.c.0.s8 %v318
  %v320 = vlaneseq
  %v321 = vshrl.u32 %v320, 7
  %v322 = vsub.s32 %v319, %v321
  %v323 = vrot.slane %v309, %v322
  %v324 = vcombine.high %v316, %v316
  %v325 = vcombine.high %v323, %v323
  %v326 = vcombine.high %v14, %v14
  %v328 = vunpack.c.l.s4 1983009808
  %v329 = vunpack.c.0.s8 %v328
  %v330 = vlaneseq
  %v331 = vshrl.u32 %v330, 7
  %v332 = vsub.s32 %v329, %v331
  %v333 = vrot.slane %v14, %v332
  %v335 = vunpack.c.l.s4 1983009808
  %v336 = vunpack.c.0.s8 %v335
  %v337 = vlaneseq
  %v338 = vshrl.u32 %v337, 7
  %v339 = vsub.s32 %v336, %v338
  %v340 = vrot.slane %v326, %v339
  %v341 = vcombine.high %v333, %v333
  %v342 = vcombine.high %v340, %v340
  %359 = vmatprep.subr.mxu0 0.0
  %360 = vmatpush1.msra.mxu0 %v15
  %361 = vmatprep.subr.mxu0 0.0
  %362 = vmatpush1.msra.mxu0 %v16
  %363 = vmatprep.subr.mxu0 0.0
  %364 = vmatpush1.msra.mxu0 %v17
  %365 = vmatprep.subr.mxu0 0.0
  %366 = vmatpush1.msra.mxu0 %v18
  %367 = vmatprep.subr.mxu0 0.0
  %368 = vmatpush1.msra.mxu0 %v19
  %369 = vmatprep.subr.mxu0 0.0
  %370 = vmatpush1.msra.mxu0 %v20
  %371 = vmatprep.subr.mxu0 0.0
  %372 = vmatpush1.msra.mxu0 %v21
  %373 = vmatprep.subr.mxu0 0.0
  %374 = vmatpush1.msra.mxu0 %v22
  %375 = vmatprep.subr.mxu0 0.0
  %376 = vmatpush1.msra.mxu0 %v23
  %377 = vmatprep.subr.mxu0 0.0
  %378 = vmatpush1.msra.mxu0 %v24
  %379 = vmatprep.subr.mxu0 0.0
  %380 = vmatpush1.msra.mxu0 %v25
  %381 = vmatprep.subr.mxu0 0.0
  %382 = vmatpush1.msra.mxu0 %v26
  %383 = vmatprep.subr.mxu0 0.0
  %384 = vmatpush1.msra.mxu0 %v27
  %385 = vmatprep.subr.mxu0 0.0
  %386 = vmatpush1.msra.mxu0 %v28
  %387 = vmatprep.subr.mxu0 0.0
  %388 = vmatpush1.msra.mxu0 %v29
  %389 = vmatprep.subr.mxu0 0.0
  %390 = vmatpush1.msra.mxu0 %v30
  %391 = vmatprep.subr.mxu0 0.0
  %392 = vmatpush1.msra.mxu0 %v31
  %393 = vmatprep.subr.mxu0 0.0
  %394 = vmatpush1.msra.mxu0 %v32
  %395 = vmatprep.subr.mxu0 0.0
  %396 = vmatpush1.msra.mxu0 %v33
  %397 = vmatprep.subr.mxu0 0.0
  %398 = vmatpush1.msra.mxu0 %v34
  %399 = vmatprep.subr.mxu0 0.0
  %400 = vmatpush1.msra.mxu0 %v35
  %401 = vmatprep.subr.mxu0 0.0
  %402 = vmatpush1.msra.mxu0 %v36
  %403 = vmatprep.subr.mxu0 0.0
  %404 = vmatpush1.msra.mxu0 %v37
  %405 = vmatprep.subr.mxu0 0.0
  %406 = vmatpush1.msra.mxu0 %v38
  %407 = vmatprep.subr.mxu0 0.0
  %408 = vmatpush1.msra.mxu0 %v39
  %409 = vmatprep.subr.mxu0 0.0
  %410 = vmatpush1.msra.mxu0 %v40
  %411 = vmatprep.subr.mxu0 0.0
  %412 = vmatpush1.msra.mxu0 %v41
  %413 = vmatprep.subr.mxu0 0.0
  %414 = vmatpush1.msra.mxu0 %v42
  %415 = vmatprep.subr.mxu0 0.0
  %416 = vmatpush1.msra.mxu0 %v43
  %417 = vmatprep.subr.mxu0 0.0
  %418 = vmatpush1.msra.mxu0 %v44
  %419 = vmatprep.subr.mxu0 0.0
  %420 = vmatpush1.msra.mxu0 %v45
  %421 = vmatprep.subr.mxu0 0.0
  %422 = vmatpush1.msra.mxu0 %v46
  %423 = vmatprep.mubr.f32.mxu0 %v290
  %424 = vmatmul.mubr.f32.gmra.mrb[0].mxu0 %v282
  %v425 = vpop.f32.mrb[0].mxu0
  %v426 = vadd.f32 0.0, %v425
  %v427 = vpop.f32.mrb[0].mxu0
  %428 = vdwg.mxu0
  %429 = vmatprep.subr.mxu0 0.0
  %430 = vmatpush1.msra.mxu0 %v47
  %431 = vmatprep.subr.mxu0 0.0
  %432 = vmatpush1.msra.mxu0 %v48
  %433 = vmatprep.subr.mxu0 0.0
  %434 = vmatpush1.msra.mxu0 %v49
  %435 = vmatprep.subr.mxu0 0.0
  %436 = vmatpush1.msra.mxu0 %v50
  %437 = vmatprep.subr.mxu0 0.0
  %438 = vmatpush1.msra.mxu0 %v51
  %439 = vmatprep.subr.mxu0 0.0
  %440 = vmatpush1.msra.mxu0 %v52
  %441 = vmatprep.subr.mxu0 0.0
  %442 = vmatpush1.msra.mxu0 %v53
  %443 = vmatprep.subr.mxu0 0.0
  %444 = vmatpush1.msra.mxu0 %v54
  %445 = vmatprep.subr.mxu0 0.0
  %446 = vmatpush1.msra.mxu0 %v55
  %447 = vmatprep.subr.mxu0 0.0
  %448 = vmatpush1.msra.mxu0 %v56
  %449 = vmatprep.subr.mxu0 0.0
  %450 = vmatpush1.msra.mxu0 %v57
  %451 = vmatprep.subr.mxu0 0.0
  %452 = vmatpush1.msra.mxu0 %v58
  %453 = vmatprep.subr.mxu0 0.0
  %454 = vmatpush1.msra.mxu0 %v59
  %455 = vmatprep.subr.mxu0 0.0
  %456 = vmatpush1.msra.mxu0 %v60
  %457 = vmatprep.subr.mxu0 0.0
  %458 = vmatpush1.msra.mxu0 %v61
  %459 = vmatprep.subr.mxu0 0.0
  %460 = vmatpush1.msra.mxu0 %v62
  %461 = vmatprep.subr.mxu0 0.0
  %462 = vmatpush1.msra.mxu0 %v63
  %463 = vmatprep.subr.mxu0 0.0
  %464 = vmatpush1.msra.mxu0 %v64
  %465 = vmatprep.subr.mxu0 0.0
  %466 = vmatpush1.msra.mxu0 %v65
  %467 = vmatprep.subr.mxu0 0.0
  %468 = vmatpush1.msra.mxu0 %v66
  %469 = vmatprep.subr.mxu0 0.0
  %470 = vmatpush1.msra.mxu0 %v67
  %471 = vmatprep.subr.mxu0 0.0
  %472 = vmatpush1.msra.mxu0 %v68
  %473 = vmatprep.subr.mxu0 0.0
  %474 = vmatpush1.msra.mxu0 %v69
  %475 = vmatprep.subr.mxu0 0.0
  %476 = vmatpush1.msra.mxu0 %v70
  %477 = vmatprep.subr.mxu0 0.0
  %478 = vmatpush1.msra.mxu0 %v71
  %479 = vmatprep.subr.mxu0 0.0
  %480 = vmatpush1.msra.mxu0 %v72
  %481 = vmatprep.subr.mxu0 0.0
  %482 = vmatpush1.msra.mxu0 %v73
  %483 = vmatprep.subr.mxu0 0.0
  %484 = vmatpush1.msra.mxu0 %v74
  %485 = vmatprep.subr.mxu0 0.0
  %486 = vmatpush1.msra.mxu0 %v75
  %487 = vmatprep.subr.mxu0 0.0
  %488 = vmatpush1.msra.mxu0 %v76
  %489 = vmatprep.subr.mxu0 0.0
  %490 = vmatpush1.msra.mxu0 %v77
  %491 = vmatprep.subr.mxu0 0.0
  %492 = vmatpush1.msra.mxu0 %v78
  %493 = vmatprep.mubr.f32.mxu0 %v291
  %494 = vmatmul.mubr.f32.gmra.mrb[0].mxu0 %v289
  %v495 = vpop.f32.mrb[0].mxu0
  %v496 = vadd.f32 %v426, %v495
  %v497 = vpop.f32.mrb[0].mxu0
  %498 = vdwg.mxu0
  %499 = vmatprep.subr.mxu0 0.0
  %500 = vmatpush1.msra.mxu0 %v79
  %501 = vmatprep.subr.mxu0 0.0
  %502 = vmatpush1.msra.mxu0 %v80
  %503 = vmatprep.subr.mxu0 0.0
  %504 = vmatpush1.msra.mxu0 %v81
  %505 = vmatprep.subr.mxu0 0.0
  %506 = vmatpush1.msra.mxu0 %v82
  %507 = vmatprep.subr.mxu0 0.0
  %508 = vmatpush1.msra.mxu0 %v83
  %509 = vmatprep.subr.mxu0 0.0
  %510 = vmatpush1.msra.mxu0 %v84
  %511 = vmatprep.subr.mxu0 0.0
  %512 = vmatpush1.msra.mxu0 %v85
  %513 = vmatprep.subr.mxu0 0.0
  %514 = vmatpush1.msra.mxu0 %v86
  %515 = vmatprep.subr.mxu0 0.0
  %516 = vmatpush1.msra.mxu0 %v87
  %517 = vmatprep.subr.mxu0 0.0
  %518 = vmatpush1.msra.mxu0 %v88
  %519 = vmatprep.subr.mxu0 0.0
  %520 = vmatpush1.msra.mxu0 %v89
  %521 = vmatprep.subr.mxu0 0.0
  %522 = vmatpush1.msra.mxu0 %v90
  %523 = vmatprep.subr.mxu0 0.0
  %524 = vmatpush1.msra.mxu0 %v91
  %525 = vmatprep.subr.mxu0 0.0
  %526 = vmatpush1.msra.mxu0 %v92
  %527 = vmatprep.subr.mxu0 0.0
  %528 = vmatpush1.msra.mxu0 %v93
  %529 = vmatprep.subr.mxu0 0.0
  %530 = vmatpush1.msra.mxu0 %v94
  %531 = vmatprep.subr.mxu0 0.0
  %532 = vmatpush1.msra.mxu0 %v95
  %533 = vmatprep.subr.mxu0 0.0
  %534 = vmatpush1.msra.mxu0 %v96
  %535 = vmatprep.subr.mxu0 0.0
  %536 = vmatpush1.msra.mxu0 %v97
  %537 = vmatprep.subr.mxu0 0.0
  %538 = vmatpush1.msra.mxu0 %v98
  %539 = vmatprep.subr.mxu0 0.0
  %540 = vmatpush1.msra.mxu0 %v99
  %541 = vmatprep.subr.mxu0 0.0
  %542 = vmatpush1.msra.mxu0 %v100
  %543 = vmatprep.subr.mxu0 0.0
  %544 = vmatpush1.msra.mxu0 %v101
  %545 = vmatprep.subr.mxu0 0.0
  %546 = vmatpush1.msra.mxu0 %v102
  %547 = vmatprep.subr.mxu0 0.0
  %548 = vmatpush1.msra.mxu0 %v103
  %549 = vmatprep.subr.mxu0 0.0
  %550 = vmatpush1.msra.mxu0 %v104
  %551 = vmatprep.subr.mxu0 0.0
  %552 = vmatpush1.msra.mxu0 %v105
  %553 = vmatprep.subr.mxu0 0.0
  %554 = vmatpush1.msra.mxu0 %v106
  %555 = vmatprep.subr.mxu0 0.0
  %556 = vmatpush1.msra.mxu0 %v107
  %557 = vmatprep.subr.mxu0 0.0
  %558 = vmatpush1.msra.mxu0 %v108
  %559 = vmatprep.subr.mxu0 0.0
  %560 = vmatpush1.msra.mxu0 %v109
  %561 = vmatprep.subr.mxu0 0.0
  %562 = vmatpush1.msra.mxu0 %v110
  %563 = vmatprep.mubr.f32.mxu0 %v307
  %564 = vmatmul.mubr.f32.gmra.mrb[0].mxu0 %v299
  %v565 = vpop.f32.mrb[0].mxu0
  %v566 = vadd.f32 %v496, %v565
  %v567 = vpop.f32.mrb[0].mxu0
  %568 = vdwg.mxu0
  %569 = vmatprep.subr.mxu0 0.0
  %570 = vmatpush1.msra.mxu0 %v111
  %571 = vmatprep.subr.mxu0 0.0
  %572 = vmatpush1.msra.mxu0 %v112
  %573 = vmatprep.subr.mxu0 0.0
  %574 = vmatpush1.msra.mxu0 %v113
  %575 = vmatprep.subr.mxu0 0.0
  %576 = vmatpush1.msra.mxu0 %v114
  %577 = vmatprep.subr.mxu0 0.0
  %578 = vmatpush1.msra.mxu0 %v115
  %579 = vmatprep.subr.mxu0 0.0
  %580 = vmatpush1.msra.mxu0 %v116
  %581 = vmatprep.subr.mxu0 0.0
  %582 = vmatpush1.msra.mxu0 %v117
  %583 = vmatprep.subr.mxu0 0.0
  %584 = vmatpush1.msra.mxu0 %v118
  %585 = vmatprep.subr.mxu0 0.0
  %586 = vmatpush1.msra.mxu0 %v119
  %587 = vmatprep.subr.mxu0 0.0
  %588 = vmatpush1.msra.mxu0 %v120
  %589 = vmatprep.subr.mxu0 0.0
  %590 = vmatpush1.msra.mxu0 %v121
  %591 = vmatprep.subr.mxu0 0.0
  %592 = vmatpush1.msra.mxu0 %v122
  %593 = vmatprep.subr.mxu0 0.0
  %594 = vmatpush1.msra.mxu0 %v123
  %595 = vmatprep.subr.mxu0 0.0
  %596 = vmatpush1.msra.mxu0 %v124
  %597 = vmatprep.subr.mxu0 0.0
  %598 = vmatpush1.msra.mxu0 %v125
  %599 = vmatprep.subr.mxu0 0.0
  %600 = vmatpush1.msra.mxu0 %v126
  %601 = vmatprep.subr.mxu0 0.0
  %602 = vmatpush1.msra.mxu0 %v127
  %603 = vmatprep.subr.mxu0 0.0
  %604 = vmatpush1.msra.mxu0 %v128
  %605 = vmatprep.subr.mxu0 0.0
  %606 = vmatpush1.msra.mxu0 %v129
  %607 = vmatprep.subr.mxu0 0.0
  %608 = vmatpush1.msra.mxu0 %v130
  %609 = vmatprep.subr.mxu0 0.0
  %610 = vmatpush1.msra.mxu0 %v131
  %611 = vmatprep.subr.mxu0 0.0
  %612 = vmatpush1.msra.mxu0 %v132
  %613 = vmatprep.subr.mxu0 0.0
  %614 = vmatpush1.msra.mxu0 %v133
  %615 = vmatprep.subr.mxu0 0.0
  %616 = vmatpush1.msra.mxu0 %v134
  %617 = vmatprep.subr.mxu0 0.0
  %618 = vmatpush1.msra.mxu0 %v135
  %619 = vmatprep.subr.mxu0 0.0
  %620 = vmatpush1.msra.mxu0 %v136
  %621 = vmatprep.subr.mxu0 0.0
  %622 = vmatpush1.msra.mxu0 %v137
  %623 = vmatprep.subr.mxu0 0.0
  %624 = vmatpush1.msra.mxu0 %v138
  %625 = vmatprep.subr.mxu0 0.0
  %626 = vmatpush1.msra.mxu0 %v139
  %627 = vmatprep.subr.mxu0 0.0
  %628 = vmatpush1.msra.mxu0 %v140
  %629 = vmatprep.subr.mxu0 0.0
  %630 = vmatpush1.msra.mxu0 %v141
  %631 = vmatprep.subr.mxu0 0.0
  %632 = vmatpush1.msra.mxu0 %v142
  %633 = vmatprep.mubr.f32.mxu0 %v308
  %634 = vmatmul.mubr.f32.gmra.mrb[0].mxu0 %v306
  %v635 = vpop.f32.mrb[0].mxu0
  %v636 = vadd.f32 %v566, %v635
  %v637 = vpop.f32.mrb[0].mxu0
  %638 = vdwg.mxu0
  %639 = vmatprep.subr.mxu0 0.0
  %640 = vmatpush1.msra.mxu0 %v143
  %641 = vmatprep.subr.mxu0 0.0
  %642 = vmatpush1.msra.mxu0 %v144
  %643 = vmatprep.subr.mxu0 0.0
  %644 = vmatpush1.msra.mxu0 %v145
  %645 = vmatprep.subr.mxu0 0.0
  %646 = vmatpush1.msra.mxu0 %v146
  %647 = vmatprep.subr.mxu0 0.0
  %648 = vmatpush1.msra.mxu0 %v147
  %649 = vmatprep.subr.mxu0 0.0
  %650 = vmatpush1.msra.mxu0 %v148
  %651 = vmatprep.subr.mxu0 0.0
  %652 = vmatpush1.msra.mxu0 %v149
  %653 = vmatprep.subr.mxu0 0.0
  %654 = vmatpush1.msra.mxu0 %v150
  %655 = vmatprep.subr.mxu0 0.0
  %656 = vmatpush1.msra.mxu0 %v151
  %657 = vmatprep.subr.mxu0 0.0
  %658 = vmatpush1.msra.mxu0 %v152
  %659 = vmatprep.subr.mxu0 0.0
  %660 = vmatpush1.msra.mxu0 %v153
  %661 = vmatprep.subr.mxu0 0.0
  %662 = vmatpush1.msra.mxu0 %v154
  %663 = vmatprep.subr.mxu0 0.0
  %664 = vmatpush1.msra.mxu0 %v155
  %665 = vmatprep.subr.mxu0 0.0
  %666 = vmatpush1.msra.mxu0 %v156
  %667 = vmatprep.subr.mxu0 0.0
  %668 = vmatpush1.msra.mxu0 %v157
  %669 = vmatprep.subr.mxu0 0.0
  %670 = vmatpush1.msra.mxu0 %v158
  %671 = vmatprep.subr.mxu0 0.0
  %672 = vmatpush1.msra.mxu0 %v159
  %673 = vmatprep.subr.mxu0 0.0
  %674 = vmatpush1.msra.mxu0 %v160
  %675 = vmatprep.subr.mxu0 0.0
  %676 = vmatpush1.msra.mxu0 %v161
  %677 = vmatprep.subr.mxu0 0.0
  %678 = vmatpush1.msra.mxu0 %v162
  %679 = vmatprep.subr.mxu0 0.0
  %680 = vmatpush1.msra.mxu0 %v163
  %681 = vmatprep.subr.mxu0 0.0
  %682 = vmatpush1.msra.mxu0 %v164
  %683 = vmatprep.subr.mxu0 0.0
  %684 = vmatpush1.msra.mxu0 %v165
  %685 = vmatprep.subr.mxu0 0.0
  %686 = vmatpush1.msra.mxu0 %v166
  %687 = vmatprep.subr.mxu0 0.0
  %688 = vmatpush1.msra.mxu0 %v167
  %689 = vmatprep.subr.mxu0 0.0
  %690 = vmatpush1.msra.mxu0 %v168
  %691 = vmatprep.subr.mxu0 0.0
  %692 = vmatpush1.msra.mxu0 %v169
  %693 = vmatprep.subr.mxu0 0.0
  %694 = vmatpush1.msra.mxu0 %v170
  %695 = vmatprep.subr.mxu0 0.0
  %696 = vmatpush1.msra.mxu0 %v171
  %697 = vmatprep.subr.mxu0 0.0
  %698 = vmatpush1.msra.mxu0 %v172
  %699 = vmatprep.subr.mxu0 0.0
  %700 = vmatpush1.msra.mxu0 %v173
  %701 = vmatprep.subr.mxu0 0.0
  %702 = vmatpush1.msra.mxu0 %v174
  %703 = vmatprep.mubr.f32.mxu0 %v324
  %704 = vmatmul.mubr.f32.gmra.mrb[0].mxu0 %v316
  %v705 = vpop.f32.mrb[0].mxu0
  %v706 = vadd.f32 %v636, %v705
  %v707 = vpop.f32.mrb[0].mxu0
  %708 = vdwg.mxu0
  %709 = vmatprep.subr.mxu0 0.0
  %710 = vmatpush1.msra.mxu0 %v175
  %711 = vmatprep.subr.mxu0 0.0
  %712 = vmatpush1.msra.mxu0 %v176
  %713 = vmatprep.subr.mxu0 0.0
  %714 = vmatpush1.msra.mxu0 %v177
  %715 = vmatprep.subr.mxu0 0.0
  %716 = vmatpush1.msra.mxu0 %v178
  %717 = vmatprep.subr.mxu0 0.0
  %718 = vmatpush1.msra.mxu0 %v179
  %719 = vmatprep.subr.mxu0 0.0
  %720 = vmatpush1.msra.mxu0 %v180
  %721 = vmatprep.subr.mxu0 0.0
  %722 = vmatpush1.msra.mxu0 %v181
  %723 = vmatprep.subr.mxu0 0.0
  %724 = vmatpush1.msra.mxu0 %v182
  %725 = vmatprep.subr.mxu0 0.0
  %726 = vmatpush1.msra.mxu0 %v183
  %727 = vmatprep.subr.mxu0 0.0
  %728 = vmatpush1.msra.mxu0 %v184
  %729 = vmatprep.subr.mxu0 0.0
  %730 = vmatpush1.msra.mxu0 %v185
  %731 = vmatprep.subr.mxu0 0.0
  %732 = vmatpush1.msra.mxu0 %v186
  %733 = vmatprep.subr.mxu0 0.0
  %734 = vmatpush1.msra.mxu0 %v187
  %735 = vmatprep.subr.mxu0 0.0
  %736 = vmatpush1.msra.mxu0 %v188
  %737 = vmatprep.subr.mxu0 0.0
  %738 = vmatpush1.msra.mxu0 %v189
  %739 = vmatprep.subr.mxu0 0.0
  %740 = vmatpush1.msra.mxu0 %v190
  %741 = vmatprep.subr.mxu0 0.0
  %742 = vmatpush1.msra.mxu0 %v191
  %743 = vmatprep.subr.mxu0 0.0
  %744 = vmatpush1.msra.mxu0 %v192
  %745 = vmatprep.subr.mxu0 0.0
  %746 = vmatpush1.msra.mxu0 %v193
  %747 = vmatprep.subr.mxu0 0.0
  %748 = vmatpush1.msra.mxu0 %v194
  %749 = vmatprep.subr.mxu0 0.0
  %750 = vmatpush1.msra.mxu0 %v195
  %751 = vmatprep.subr.mxu0 0.0
  %752 = vmatpush1.msra.mxu0 %v196
  %753 = vmatprep.subr.mxu0 0.0
  %754 = vmatpush1.msra.mxu0 %v197
  %755 = vmatprep.subr.mxu0 0.0
  %756 = vmatpush1.msra.mxu0 %v198
  %757 = vmatprep.subr.mxu0 0.0
  %758 = vmatpush1.msra.mxu0 %v199
  %759 = vmatprep.subr.mxu0 0.0
  %760 = vmatpush1.msra.mxu0 %v200
  %761 = vmatprep.subr.mxu0 0.0
  %762 = vmatpush1.msra.mxu0 %v201
  %763 = vmatprep.subr.mxu0 0.0
  %764 = vmatpush1.msra.mxu0 %v202
  %765 = vmatprep.subr.mxu0 0.0
  %766 = vmatpush1.msra.mxu0 %v203
  %767 = vmatprep.subr.mxu0 0.0
  %768 = vmatpush1.msra.mxu0 %v204
  %769 = vmatprep.subr.mxu0 0.0
  %770 = vmatpush1.msra.mxu0 %v205
  %771 = vmatprep.subr.mxu0 0.0
  %772 = vmatpush1.msra.mxu0 %v206
  %773 = vmatprep.mubr.f32.mxu0 %v325
  %774 = vmatmul.mubr.f32.gmra.mrb[0].mxu0 %v323
  %v775 = vpop.f32.mrb[0].mxu0
  %v776 = vadd.f32 %v706, %v775
  %v777 = vpop.f32.mrb[0].mxu0
  %778 = vdwg.mxu0
  %779 = vmatprep.subr.mxu0 0.0
  %780 = vmatpush1.msra.mxu0 %v207
  %781 = vmatprep.subr.mxu0 0.0
  %782 = vmatpush1.msra.mxu0 %v208
  %783 = vmatprep.subr.mxu0 0.0
  %784 = vmatpush1.msra.mxu0 %v209
  %785 = vmatprep.subr.mxu0 0.0
  %786 = vmatpush1.msra.mxu0 %v210
  %787 = vmatprep.subr.mxu0 0.0
  %788 = vmatpush1.msra.mxu0 %v211
  %789 = vmatprep.subr.mxu0 0.0
  %790 = vmatpush1.msra.mxu0 %v212
  %791 = vmatprep.subr.mxu0 0.0
  %792 = vmatpush1.msra.mxu0 %v213
  %793 = vmatprep.subr.mxu0 0.0
  %794 = vmatpush1.msra.mxu0 %v214
  %795 = vmatprep.subr.mxu0 0.0
  %796 = vmatpush1.msra.mxu0 %v215
  %797 = vmatprep.subr.mxu0 0.0
  %798 = vmatpush1.msra.mxu0 %v216
  %799 = vmatprep.subr.mxu0 0.0
  %800 = vmatpush1.msra.mxu0 %v217
  %801 = vmatprep.subr.mxu0 0.0
  %802 = vmatpush1.msra.mxu0 %v218
  %803 = vmatprep.subr.mxu0 0.0
  %804 = vmatpush1.msra.mxu0 %v219
  %805 = vmatprep.subr.mxu0 0.0
  %806 = vmatpush1.msra.mxu0 %v220
  %807 = vmatprep.subr.mxu0 0.0
  %808 = vmatpush1.msra.mxu0 %v221
  %809 = vmatprep.subr.mxu0 0.0
  %810 = vmatpush1.msra.mxu0 %v222
  %811 = vmatprep.subr.mxu0 0.0
  %812 = vmatpush1.msra.mxu0 %v223
  %813 = vmatprep.subr.mxu0 0.0
  %814 = vmatpush1.msra.mxu0 %v224
  %815 = vmatprep.subr.mxu0 0.0
  %816 = vmatpush1.msra.mxu0 %v225
  %817 = vmatprep.subr.mxu0 0.0
  %818 = vmatpush1.msra.mxu0 %v226
  %819 = vmatprep.subr.mxu0 0.0
  %820 = vmatpush1.msra.mxu0 %v227
  %821 = vmatprep.subr.mxu0 0.0
  %822 = vmatpush1.msra.mxu0 %v228
  %823 = vmatprep.subr.mxu0 0.0
  %824 = vmatpush1.msra.mxu0 %v229
  %825 = vmatprep.subr.mxu0 0.0
  %826 = vmatpush1.msra.mxu0 %v230
  %827 = vmatprep.subr.mxu0 0.0
  %828 = vmatpush1.msra.mxu0 %v231
  %829 = vmatprep.subr.mxu0 0.0
  %830 = vmatpush1.msra.mxu0 %v232
  %831 = vmatprep.subr.mxu0 0.0
  %832 = vmatpush1.msra.mxu0 %v233
  %833 = vmatprep.subr.mxu0 0.0
  %834 = vmatpush1.msra.mxu0 %v234
  %835 = vmatprep.subr.mxu0 0.0
  %836 = vmatpush1.msra.mxu0 %v235
  %837 = vmatprep.subr.mxu0 0.0
  %838 = vmatpush1.msra.mxu0 %v236
  %839 = vmatprep.subr.mxu0 0.0
  %840 = vmatpush1.msra.mxu0 %v237
  %841 = vmatprep.subr.mxu0 0.0
  %842 = vmatpush1.msra.mxu0 %v238
  %843 = vmatprep.mubr.f32.mxu0 %v341
  %844 = vmatmul.mubr.f32.gmra.mrb[0].mxu0 %v333
  %v845 = vpop.f32.mrb[0].mxu0
  %v846 = vadd.f32 %v776, %v845
  %v847 = vpop.f32.mrb[0].mxu0
  %848 = vdwg.mxu0
  %849 = vmatprep.subr.mxu0 0.0
  %850 = vmatpush1.msra.mxu0 %v239
  %851 = vmatprep.subr.mxu0 0.0
  %852 = vmatpush1.msra.mxu0 %v240
  %853 = vmatprep.subr.mxu0 0.0
  %854 = vmatpush1.msra.mxu0 %v241
  %855 = vmatprep.subr.mxu0 0.0
  %856 = vmatpush1.msra.mxu0 %v242
  %857 = vmatprep.subr.mxu0 0.0
  %858 = vmatpush1.msra.mxu0 %v243
  %859 = vmatprep.subr.mxu0 0.0
  %860 = vmatpush1.msra.mxu0 %v244
  %861 = vmatprep.subr.mxu0 0.0
  %862 = vmatpush1.msra.mxu0 %v245
  %863 = vmatprep.subr.mxu0 0.0
  %864 = vmatpush1.msra.mxu0 %v246
  %865 = vmatprep.subr.mxu0 0.0
  %866 = vmatpush1.msra.mxu0 %v247
  %867 = vmatprep.subr.mxu0 0.0
  %868 = vmatpush1.msra.mxu0 %v248
  %869 = vmatprep.subr.mxu0 0.0
  %870 = vmatpush1.msra.mxu0 %v249
  %871 = vmatprep.subr.mxu0 0.0
  %872 = vmatpush1.msra.mxu0 %v250
  %873 = vmatprep.subr.mxu0 0.0
  %874 = vmatpush1.msra.mxu0 %v251
  %875 = vmatprep.subr.mxu0 0.0
  %876 = vmatpush1.msra.mxu0 %v252
  %877 = vmatprep.subr.mxu0 0.0
  %878 = vmatpush1.msra.mxu0 %v253
  %879 = vmatprep.subr.mxu0 0.0
  %880 = vmatpush1.msra.mxu0 %v254
  %881 = vmatprep.subr.mxu0 0.0
  %882 = vmatpush1.msra.mxu0 %v255
  %883 = vmatprep.subr.mxu0 0.0
  %884 = vmatpush1.msra.mxu0 %v256
  %885 = vmatprep.subr.mxu0 0.0
  %886 = vmatpush1.msra.mxu0 %v257
  %887 = vmatprep.subr.mxu0 0.0
  %888 = vmatpush1.msra.mxu0 %v258
  %889 = vmatprep.subr.mxu0 0.0
  %890 = vmatpush1.msra.mxu0 %v259
  %891 = vmatprep.subr.mxu0 0.0
  %892 = vmatpush1.msra.mxu0 %v260
  %893 = vmatprep.subr.mxu0 0.0
  %894 = vmatpush1.msra.mxu0 %v261
  %895 = vmatprep.subr.mxu0 0.0
  %896 = vmatpush1.msra.mxu0 %v262
  %897 = vmatprep.subr.mxu0 0.0
  %898 = vmatpush1.msra.mxu0 %v263
  %899 = vmatprep.subr.mxu0 0.0
  %900 = vmatpush1.msra.mxu0 %v264
  %901 = vmatprep.subr.mxu0 0.0
  %902 = vmatpush1.msra.mxu0 %v265
  %903 = vmatprep.subr.mxu0 0.0
  %904 = vmatpush1.msra.mxu0 %v266
  %905 = vmatprep.subr.mxu0 0.0
  %906 = vmatpush1.msra.mxu0 %v267
  %907 = vmatprep.subr.mxu0 0.0
  %908 = vmatpush1.msra.mxu0 %v268
  %909 = vmatprep.subr.mxu0 0.0
  %910 = vmatpush1.msra.mxu0 %v269
  %911 = vmatprep.subr.mxu0 0.0
  %912 = vmatpush1.msra.mxu0 %v270
  %913 = vmatprep.mubr.f32.mxu0 %v342
  %914 = vmatmul.mubr.f32.gmra.mrb[0].mxu0 %v340
  %v915 = vpop.f32.mrb[0].mxu0
  %v916 = vadd.f32 %v846, %v915
  %v917 = vpop.f32.mrb[0].mxu0
  %918 = vdwg.mxu0
  %919 = vst [vmem:[%s2] sm:$0x3] %v916
  // Predicated region
  $region10: #{nlayer_discriminator_forward.9} parent=0 // pred_check
    _
  $region11: #{nlayer_discriminator_forward.9} parent=0 // pred_check_branch
    %921 = sbr.rel (0) target = $region13
  $region12: #{nlayer_discriminator_forward.9} parent=0 // pred_region
    _
  $region13: #{nlayer_discriminator_forward.9} parent=0 // pred_fallthru
    _
  // Predicated region
  $region14: #{nlayer_discriminator_forward.9} parent=0 // pred_check
    _
  $region15: #{nlayer_discriminator_forward.9} parent=0 // pred_check_branch
    %923 = sbr.rel (0) target = $region17
  $region16: #{nlayer_discriminator_forward.9} parent=0 // pred_region
    _
  $region17: #{nlayer_discriminator_forward.9} parent=0 // pred_fallthru
    _

</llo_original>
